<compile_context>
chip_gen: v7x
topology: tpu7x:2x2x1
jax: 0.10.0
libtpu: 0.0.40
codegen_flags: <defaults>
</compile_context>

<pallas_src>
import numpy as np
import jax
import jax.numpy as jnp
from jax.experimental import pallas as pl
from jax.experimental.pallas import tpu as pltpu

# ---- static problem sizes -----------------------------------------------------
N = 64                  # nodes per shaDow subgraph
DIM_IN = 32
DIM_OUT = 32
MULHEAD = 2
DIM_SLICE = DIM_OUT // MULHEAD
B = 8                   # subgraphs in the batch
G = 4                   # subgraphs per grid step  ->  G*DIM_OUT = 128-lane output block

# packed-parameter row layout ([PARAM_ROWS, DIM_OUT] array)
ROW_B0 = 0
ROW_B1 = 1
ROW_ATT0 = 2                      # rows 2 .. 2+MULHEAD-1
ROW_SCALE = 2 + MULHEAD           # 4
ROW_OFFSET = 3 + MULHEAD          # 5
PARAM_ROWS = 8                    # padded to a full sublane tile


# ------------------------------ Pallas kernel -----------------------------------
def gat_scatter_kernel(x_ref, adj_ref, w0_ref, w1_ref, params_ref, out_ref):
    # x_ref      [G*N, DIM_IN]   stacked node features of this step's G subgraphs
    # adj_ref    [G, N, N]       dense adjacency; adj[g,i,j] = weight src j -> dst i
    # w0/w1_ref  [DIM_IN, DIM_OUT]   f_lin[0]/f_lin[1] weights (transposed)
    # params_ref [8, DIM_OUT]    row0=b0, row1=b1, rows2..3=attention per head
    #                            (scattered into that head's column slice),
    #                            row4=scale, row5=offset
    # out_ref    [N, G*DIM_OUT]  lane-dense output (columns g*DIM_OUT:(g+1)*DIM_OUT
    #                            hold subgraph g of this step)
    x = x_ref[...]
    b0 = params_ref[ROW_B0:ROW_B0 + 1, :]
    b1 = params_ref[ROW_B1:ROW_B1 + 1, :]
    att_heads = params_ref[ROW_ATT0:ROW_ATT0 + MULHEAD, :]
    scale = params_ref[ROW_SCALE:ROW_SCALE + 1, :]
    offset = params_ref[ROW_OFFSET:ROW_OFFSET + 1, :]

    # Linear layers fused over all G subgraphs (M = G*N = 256 fills the MXU far
    # better than per-graph M = 64).  Dropout is identity (p = 0.0).
    feat_src_all = jnp.dot(x, w0_ref[...], preferred_element_type=jnp.float32) + b0
    feat_self_all = jnp.dot(x, w1_ref[...], preferred_element_type=jnp.float32) + b1

    # Hoisted attention projection over ALL G graphs: one [H,Dout]x[Dout,G*N] dot
    # + one LeakyReLU(0.2) pass instead of G tiny per-graph dots.
    el_all = jax.lax.dot_general(att_heads, feat_src_all, (((1,), (1,)), ((), ())),
                                 preferred_element_type=jnp.float32)   # [H, G*N]
    el_all = jnp.where(el_all > 0, el_all, 0.2 * el_all)

    # Per-head column masks built in-kernel (no head_mask input).
    lane = jax.lax.broadcasted_iota(jnp.int32, (1, DIM_OUT), 1)
    head_masks = [
        ((lane >= k * DIM_SLICE) & (lane < (k + 1) * DIM_SLICE)).astype(jnp.float32)
        for k in range(MULHEAD)
    ]

    neg_big = jnp.float32(-1e30)
    outs = []
    for g in range(G):                                   # static, unrolled
        adj_g = adj_ref[g]                               # [N, N]
        feat_src = feat_src_all[g * N:(g + 1) * N, :]    # [N, DIM_OUT]
        feat_self = feat_self_all[g * N:(g + 1) * N, :]
        edge_mask = adj_g > 0.0

        e_heads, inv_heads = [], []
        for k in range(MULHEAD):
            el_k = el_all[k:k + 1, g * N:(g + 1) * N]               # [1, N] (src on lanes)
            masked_el = jnp.where(edge_mask, el_k, neg_big)         # [N, N]
            row_max = jnp.max(masked_el, axis=1, keepdims=True)     # scatter(max) per dst
            # keep the edge mask: rows are guaranteed a self-loop, but masking the exp
            # prevents inf*0 -> NaN when a non-edge source has el above the row max
            e_k = jnp.where(edge_mask, jnp.exp(el_k - row_max), 0.0) * adj_g
            denom_k = jnp.maximum(jnp.sum(e_k, axis=1, keepdims=True), 1e-10)
            e_heads.append(e_k)
            inv_heads.append(pl.reciprocal(denom_k, approx=True))   # EUP, not VPU divide

        # Fused two-head aggregation: ONE MXU call with K = MULHEAD*N = 128 instead of
        # MULHEAD calls with K = 64 whose results are half thrown away.
        e_cat = jnp.concatenate(e_heads, axis=1)                           # [N, H*N]
        f_blk = jnp.concatenate([feat_src * hm for hm in head_masks], 0)   # [H*N, DIM_OUT]
        ret = jnp.dot(e_cat, f_blk, preferred_element_type=jnp.float32)    # [N, DIM_OUT]

        inv = head_masks[0] * inv_heads[0]
        for k in range(1, MULHEAD):
            inv = inv + head_masks[k] * inv_heads[k]                 # [N, DIM_OUT]
        feat_aggr = ret * inv

        # relu + per-node feature norm ('norm_feat')
        h = jnp.maximum(feat_aggr + feat_self, 0.0)
        mean = jnp.mean(h, axis=1, keepdims=True)
        var = jnp.mean((h - mean) ** 2, axis=1, keepdims=True) + 1e-9
        outs.append((h - mean) * scale * jax.lax.rsqrt(var) + offset)

    # Single unmasked 128-lane-wide store (lane-dense output layout).
    out_ref[...] = jnp.concatenate(outs, axis=1)


def gat_scatter_forward(x_flat, adj, w0, w1, params_packed):
    """x_flat: [B*N, DIM_IN]; adj: [B, N, N].  Returns [B, N, DIM_OUT]."""
    num_steps = B // G
    out_dense = pl.pallas_call(
        gat_scatter_kernel,
        out_shape=jax.ShapeDtypeStruct((N, B * DIM_OUT), jnp.float32),
        grid_spec=pltpu.PrefetchScalarGridSpec(
            num_scalar_prefetch=0,
            grid=(num_steps,),
            in_specs=[
                pl.BlockSpec((G * N, DIM_IN), lambda i: (i, 0)),
                pl.BlockSpec((G, N, N), lambda i: (i, 0, 0)),
                pl.BlockSpec((DIM_IN, DIM_OUT), lambda i: (0, 0)),
                pl.BlockSpec((DIM_IN, DIM_OUT), lambda i: (0, 0)),
                pl.BlockSpec((PARAM_ROWS, DIM_OUT), lambda i: (0, 0)),
            ],
            out_specs=pl.BlockSpec((N, G * DIM_OUT), lambda i: (0, i)),
        ),
        compiler_params=pltpu.CompilerParams(
            dimension_semantics=("parallel",)),   # shards steps across v7x's 2 TCs
    )(x_flat, adj, w0, w1, params_packed)
    # [N, B*DIM_OUT] lane-dense slab -> [B, N, DIM_OUT]; wrapper-side layout plumbing.
    return out_dense.reshape(N, B, DIM_OUT).transpose(1, 0, 2)
    # Module returns (feat_out, adj_drop, True, 0.0); adjacency passes through unchanged.


# ------------------------ pure-JAX reference (scatter path) ---------------------
def reference_forward_one(x, adj_np, torch_params):
    """Mirrors the torch scatter/spmm code path on an explicit edge list (one graph)."""
    W0_t, b0, W1_t, b1, attention, scale, offset = torch_params
    rows_np, cols_np = np.nonzero(adj_np)       # row-major => sorted by row (CSR order)
    vals = jnp.asarray(adj_np[rows_np, cols_np], dtype=jnp.float32)
    rows = jnp.asarray(rows_np)
    cols = jnp.asarray(cols_np)

    feat_src = x @ W0_t.T + b0
    feat_self = x @ W1_t.T + b1
    fs_h = feat_src.reshape(N, MULHEAD, DIM_SLICE)

    el = jnp.sum(fs_h * attention, axis=-1)      # [N, H]
    el = jnp.where(el > 0, el, 0.2 * el)
    el_edges = el[cols]                          # [E, H]

    aggr = []
    for k in range(MULHEAD):
        v = el_edges[:, k]
        rmax = jax.ops.segment_max(v, rows, num_segments=N)
        vexp = jnp.exp(v - rmax[rows]) * vals
        denom = jnp.maximum(jax.ops.segment_sum(vexp, rows, num_segments=N), 1e-10)
        ret = jax.ops.segment_sum(vexp[:, None] * fs_h[cols, k, :], rows, num_segments=N)
        aggr.append(ret / denom[:, None])
    feat_aggr = jnp.concatenate(aggr, axis=1)

    h = jnp.maximum(feat_aggr + feat_self, 0.0)
    mean = h.mean(axis=1, keepdims=True)
    var = jnp.mean((h - mean) ** 2, axis=1, keepdims=True) + 1e-9
    return (h - mean) * scale * jax.lax.rsqrt(var) + offset


# ----------------------------------- main ---------------------------------------
if __name__ == "__main__":
    key = jax.random.PRNGKey(0)
    kx, ka, kv, k1, k2, k3, k4, k5 = jax.random.split(key, 8)

    # node features for B subgraphs of N nodes each
    x = jax.random.normal(kx, (B * N, DIM_IN), dtype=jnp.float32)

    # per-subgraph sparse-ish adjacency with guaranteed self-loops, positive weights
    prob = jax.random.uniform(ka, (B, N, N))
    eye = jnp.broadcast_to(jnp.eye(N, dtype=jnp.float32), (B, N, N))
    mask = jnp.maximum((prob < 0.15).astype(jnp.float32), eye)
    weights = jax.random.uniform(kv, (B, N, N), minval=0.5, maxval=1.5)
    adj = (mask * weights).astype(jnp.float32)

    # parameters (xavier_normal with relu gain, as in reset_parameters)
    gain = np.sqrt(2.0)
    std_lin = gain * np.sqrt(2.0 / (DIM_IN + DIM_OUT))
    W0_t = (std_lin * jax.random.normal(k1, (DIM_OUT, DIM_IN))).astype(jnp.float32)
    W1_t = (std_lin * jax.random.normal(k2, (DIM_OUT, DIM_IN))).astype(jnp.float32)
    bound = 1.0 / np.sqrt(DIM_IN)
    b0 = jax.random.uniform(k3, (DIM_OUT,), minval=-bound, maxval=bound).astype(jnp.float32)
    b1 = jax.random.uniform(k4, (DIM_OUT,), minval=-bound, maxval=bound).astype(jnp.float32)
    std_att = gain * np.sqrt(2.0 / (MULHEAD * DIM_SLICE + DIM_SLICE))
    attention = (std_att * jax.random.normal(k5, (1, MULHEAD, DIM_SLICE))).astype(jnp.float32)
    scale = jnp.ones((1, DIM_OUT), dtype=jnp.float32)
    offset = jnp.zeros((1, DIM_OUT), dtype=jnp.float32)

    # pack the six small parameter arrays into one [8, DIM_OUT] array (single DMA)
    att_np = np.asarray(attention)
    params_np = np.zeros((PARAM_ROWS, DIM_OUT), dtype=np.float32)
    params_np[ROW_B0] = np.asarray(b0)
    params_np[ROW_B1] = np.asarray(b1)
    for k in range(MULHEAD):
        params_np[ROW_ATT0 + k, k * DIM_SLICE:(k + 1) * DIM_SLICE] = att_np[0, k, :]
    params_np[ROW_SCALE] = np.asarray(scale)[0]
    params_np[ROW_OFFSET] = np.asarray(offset)[0]
    params_packed = jnp.asarray(params_np)

    w0 = jnp.asarray(W0_t).T
    w1 = jnp.asarray(W1_t).T

    out = gat_scatter_forward(x, adj, w0, w1, params_packed)
    out = jax.block_until_ready(out)

    # validate every subgraph against the scatter-based reference
    torch_params = (W0_t, b0, W1_t, b1, attention, scale, offset)
    adj_np_all = np.asarray(adj)
    for b in range(B):
        ref_b = reference_forward_one(x[b * N:(b + 1) * N], adj_np_all[b], torch_params)
        np.testing.assert_allclose(np.asarray(out[b]), np.asarray(ref_b),
                                   rtol=2e-2, atol=2e-2)
    assert out.shape == (B, N, DIM_OUT) and out.dtype == jnp.float32

    # TODO(synk): edge dropout (dropedge > 0) and the 'pairnorm' branch are not
    # implemented (module is configured with p=0.0 dropout and norm='norm_feat').
    print("KERNEL_OK")
</pallas_src>

<mosaic_0001>
module attributes {stable_mosaic.version = 11 : i64} {
  func.func @gat_scatter_kernel(%arg0: i32, %arg1: memref<256x32xf32, #tpu.memory_space<vmem>>, %arg2: memref<4x64x64xf32, #tpu.memory_space<vmem>>, %arg3: memref<32x32xf32, #tpu.memory_space<vmem>>, %arg4: memref<32x32xf32, #tpu.memory_space<vmem>>, %arg5: memref<8x32xf32, #tpu.memory_space<vmem>>, %arg6: memref<64x128xf32, #tpu.memory_space<vmem>>) attributes {dimension_semantics = [#tpu.dimension_semantics<parallel>], iteration_bounds = array<i64: 2>, scalar_prefetch = 0 : i64, scratch_operands = 0 : i64, tpu.core_type = #tpu.core_type<tc>, window_params = [{transform_indices = @transform_0, window_bounds = array<i64: 256, 32>}, {transform_indices = @transform_1, window_bounds = array<i64: 4, 64, 64>}, {pipeline_mode = #tpu.pipeline_mode<synchronous>, transform_indices = @transform_2, window_bounds = array<i64: 32, 32>}, {pipeline_mode = #tpu.pipeline_mode<synchronous>, transform_indices = @transform_3, window_bounds = array<i64: 32, 32>}, {pipeline_mode = #tpu.pipeline_mode<synchronous>, transform_indices = @transform_4, window_bounds = array<i64: 8, 32>}, {transform_indices = @transform_5, window_bounds = array<i64: 64, 128>}]} {
    %c0 = arith.constant 0 : index
    %c0_0 = arith.constant 0 : index
    %0 = vector.load %arg1[%c0, %c0_0] : memref<256x32xf32, #tpu.memory_space<vmem>>, vector<256x32xf32>
    %c0_1 = arith.constant 0 : index
    %c0_2 = arith.constant 0 : index
    %1 = vector.load %arg5[%c0_1, %c0_2] : memref<8x32xf32, #tpu.memory_space<vmem>>, vector<1x32xf32>
    %c1 = arith.constant 1 : index
    %c0_3 = arith.constant 0 : index
    %2 = vector.load %arg5[%c1, %c0_3] : memref<8x32xf32, #tpu.memory_space<vmem>>, vector<1x32xf32>
    %c2 = arith.constant 2 : index
    %c0_4 = arith.constant 0 : index
    %3 = vector.load %arg5[%c2, %c0_4] : memref<8x32xf32, #tpu.memory_space<vmem>>, vector<2x32xf32>
    %c4 = arith.constant 4 : index
    %c0_5 = arith.constant 0 : index
    %4 = vector.load %arg5[%c4, %c0_5] : memref<8x32xf32, #tpu.memory_space<vmem>>, vector<1x32xf32>
    %c5 = arith.constant 5 : index
    %c0_6 = arith.constant 0 : index
    %5 = vector.load %arg5[%c5, %c0_6] : memref<8x32xf32, #tpu.memory_space<vmem>>, vector<1x32xf32>
    %c0_7 = arith.constant 0 : index
    %c0_8 = arith.constant 0 : index
    %6 = vector.load %arg3[%c0_7, %c0_8] : memref<32x32xf32, #tpu.memory_space<vmem>>, vector<32x32xf32>
    %cst = arith.constant dense<0.000000e+00> : vector<256x32xf32>
    %7 = tpu.matmul %0, %6, %cst {dimension_numbers = #tpu.dot_dimension_numbers<[1], [0], [0], [1], [0, 0, 1, 1], [], []>} : vector<256x32xf32>, vector<32x32xf32>, vector<256x32xf32> -> vector<256x32xf32>
    %8 = vector.broadcast %1 : vector<1x32xf32> to vector<256x32xf32>
    %9 = arith.addf %7, %8 : vector<256x32xf32>
    %c0_9 = arith.constant 0 : index
    %c0_10 = arith.constant 0 : index
    %10 = vector.load %arg4[%c0_9, %c0_10] : memref<32x32xf32, #tpu.memory_space<vmem>>, vector<32x32xf32>
    %cst_11 = arith.constant dense<0.000000e+00> : vector<256x32xf32>
    %11 = tpu.matmul %0, %10, %cst_11 {dimension_numbers = #tpu.dot_dimension_numbers<[1], [0], [0], [1], [0, 0, 1, 1], [], []>} : vector<256x32xf32>, vector<32x32xf32>, vector<256x32xf32> -> vector<256x32xf32>
    %12 = vector.broadcast %2 : vector<1x32xf32> to vector<256x32xf32>
    %13 = arith.addf %11, %12 : vector<256x32xf32>
    %cst_12 = arith.constant dense<0.000000e+00> : vector<2x256xf32>
    %14 = tpu.matmul %3, %9, %cst_12 {dimension_numbers = #tpu.dot_dimension_numbers<[1], [1], [0], [0], [0, 0, 1, 0], [], []>} : vector<2x32xf32>, vector<256x32xf32>, vector<2x256xf32> -> vector<2x256xf32>
    %cst_13 = arith.constant 0.000000e+00 : f32
    %15 = vector.broadcast %cst_13 : f32 to vector<2x256xf32>
    %16 = arith.cmpf ogt, %14, %15 : vector<2x256xf32>
    %cst_14 = arith.constant 2.000000e-01 : f32
    %17 = vector.broadcast %cst_14 : f32 to vector<2x256xf32>
    %18 = arith.mulf %17, %14 : vector<2x256xf32>
    %19 = arith.select %16, %14, %18 : vector<2x256xi1>, vector<2x256xf32>
    %20 = tpu.iota {dimensions = array<i32: 1>} : vector<1x32xi32>
    %c0_i32 = arith.constant 0 : i32
    %21 = vector.broadcast %c0_i32 : i32 to vector<1x32xi32>
    %22 = arith.cmpi sge, %20, %21 : vector<1x32xi32>
    %c16_i32 = arith.constant 16 : i32
    %23 = vector.broadcast %c16_i32 : i32 to vector<1x32xi32>
    %24 = arith.cmpi slt, %20, %23 : vector<1x32xi32>
    %25 = arith.andi %22, %24 : vector<1x32xi1>
    %26 = arith.extui %25 : vector<1x32xi1> to vector<1x32xi32>
    %27 = arith.sitofp %26 : vector<1x32xi32> to vector<1x32xf32>
    %c16_i32_15 = arith.constant 16 : i32
    %28 = vector.broadcast %c16_i32_15 : i32 to vector<1x32xi32>
    %29 = arith.cmpi sge, %20, %28 : vector<1x32xi32>
    %c32_i32 = arith.constant 32 : i32
    %30 = vector.broadcast %c32_i32 : i32 to vector<1x32xi32>
    %31 = arith.cmpi slt, %20, %30 : vector<1x32xi32>
    %32 = arith.andi %29, %31 : vector<1x32xi1>
    %33 = arith.extui %32 : vector<1x32xi1> to vector<1x32xi32>
    %34 = arith.sitofp %33 : vector<1x32xi32> to vector<1x32xf32>
    %c0_16 = arith.constant 0 : index
    %c0_17 = arith.constant 0 : index
    %c0_18 = arith.constant 0 : index
    %35 = vector.load %arg2[%c0_16, %c0_17, %c0_18] : memref<4x64x64xf32, #tpu.memory_space<vmem>>, vector<1x64x64xf32>
    %36 = vector.shape_cast %35 : vector<1x64x64xf32> to vector<64x64xf32>
    %37 = vector.extract_strided_slice %9 {offsets = [0, 0], sizes = [64, 32], strides = [1, 1]} : vector<256x32xf32> to vector<64x32xf32>
    %38 = vector.extract_strided_slice %13 {offsets = [0, 0], sizes = [64, 32], strides = [1, 1]} : vector<256x32xf32> to vector<64x32xf32>
    %cst_19 = arith.constant 0.000000e+00 : f32
    %39 = vector.broadcast %cst_19 : f32 to vector<64x64xf32>
    %40 = arith.cmpf ogt, %36, %39 : vector<64x64xf32>
    %41 = vector.extract_strided_slice %19 {offsets = [0, 0], sizes = [1, 64], strides = [1, 1]} : vector<2x256xf32> to vector<1x64xf32>
    %cst_20 = arith.constant -1.000000e+30 : f32
    %42 = vector.shape_cast %41 : vector<1x64xf32> to vector<1x64xf32>
    %43 = vector.broadcast %42 : vector<1x64xf32> to vector<64x64xf32>
    %44 = vector.broadcast %cst_20 : f32 to vector<64x64xf32>
    %45 = arith.select %40, %43, %44 : vector<64x64xi1>, vector<64x64xf32>
    %cst_21 = arith.constant dense<0xFF800000> : vector<64xf32>
    %46 = vector.multi_reduction <maximumf>, %45, %cst_21 [1] : vector<64x64xf32> to vector<64xf32>
    %47 = vector.shape_cast %46 : vector<64xf32> to vector<64x1xf32>
    %48 = vector.broadcast %41 : vector<1x64xf32> to vector<64x64xf32>
    %49 = vector.broadcast %47 : vector<64x1xf32> to vector<64x64xf32>
    %50 = arith.subf %48, %49 : vector<64x64xf32>
    %51 = math.exp %50 : vector<64x64xf32>
    %cst_22 = arith.constant 0.000000e+00 : f32
    %52 = vector.broadcast %cst_22 : f32 to vector<64x64xf32>
    %53 = arith.select %40, %51, %52 : vector<64x64xi1>, vector<64x64xf32>
    %54 = arith.mulf %53, %36 : vector<64x64xf32>
    %cst_23 = arith.constant dense<0.000000e+00> : vector<64xf32>
    %55 = vector.multi_reduction <add>, %54, %cst_23 [1] : vector<64x64xf32> to vector<64xf32>
    %56 = vector.shape_cast %55 : vector<64xf32> to vector<64x1xf32>
    %cst_24 = arith.constant 1.000000e-10 : f32
    %57 = vector.broadcast %cst_24 : f32 to vector<64x1xf32>
    %58 = arith.maximumf %56, %57 : vector<64x1xf32>
    %59 = tpu.reciprocal %58 {approx = true} : vector<64x1xf32> -> vector<64x1xf32>
    %60 = vector.extract_strided_slice %19 {offsets = [1, 0], sizes = [1, 64], strides = [1, 1]} : vector<2x256xf32> to vector<1x64xf32>
    %cst_25 = arith.constant -1.000000e+30 : f32
    %61 = vector.shape_cast %60 : vector<1x64xf32> to vector<1x64xf32>
    %62 = vector.broadcast %61 : vector<1x64xf32> to vector<64x64xf32>
    %63 = vector.broadcast %cst_25 : f32 to vector<64x64xf32>
    %64 = arith.select %40, %62, %63 : vector<64x64xi1>, vector<64x64xf32>
    %cst_26 = arith.constant dense<0xFF800000> : vector<64xf32>
    %65 = vector.multi_reduction <maximumf>, %64, %cst_26 [1] : vector<64x64xf32> to vector<64xf32>
    %66 = vector.shape_cast %65 : vector<64xf32> to vector<64x1xf32>
    %67 = vector.broadcast %60 : vector<1x64xf32> to vector<64x64xf32>
    %68 = vector.broadcast %66 : vector<64x1xf32> to vector<64x64xf32>
    %69 = arith.subf %67, %68 : vector<64x64xf32>
    %70 = math.exp %69 : vector<64x64xf32>
    %cst_27 = arith.constant 0.000000e+00 : f32
    %71 = vector.broadcast %cst_27 : f32 to vector<64x64xf32>
    %72 = arith.select %40, %70, %71 : vector<64x64xi1>, vector<64x64xf32>
    %73 = arith.mulf %72, %36 : vector<64x64xf32>
    %cst_28 = arith.constant dense<0.000000e+00> : vector<64xf32>
    %74 = vector.multi_reduction <add>, %73, %cst_28 [1] : vector<64x64xf32> to vector<64xf32>
    %75 = vector.shape_cast %74 : vector<64xf32> to vector<64x1xf32>
    %cst_29 = arith.constant 1.000000e-10 : f32
    %76 = vector.broadcast %cst_29 : f32 to vector<64x1xf32>
    %77 = arith.maximumf %75, %76 : vector<64x1xf32>
    %78 = tpu.reciprocal %77 {approx = true} : vector<64x1xf32> -> vector<64x1xf32>
    %79 = tpu.concatenate %54, %73 in 1 : vector<64x64xf32>, vector<64x64xf32> -> vector<64x128xf32>
    %80 = vector.broadcast %27 : vector<1x32xf32> to vector<64x32xf32>
    %81 = arith.mulf %37, %80 : vector<64x32xf32>
    %82 = vector.broadcast %34 : vector<1x32xf32> to vector<64x32xf32>
    %83 = arith.mulf %37, %82 : vector<64x32xf32>
    %84 = tpu.concatenate %81, %83 in 0 : vector<64x32xf32>, vector<64x32xf32> -> vector<128x32xf32>
    %cst_30 = arith.constant dense<0.000000e+00> : vector<64x32xf32>
    %85 = tpu.matmul %79, %84, %cst_30 {dimension_numbers = #tpu.dot_dimension_numbers<[1], [0], [0], [1], [0, 0, 1, 1], [], []>} : vector<64x128xf32>, vector<128x32xf32>, vector<64x32xf32> -> vector<64x32xf32>
    %86 = vector.broadcast %27 : vector<1x32xf32> to vector<64x32xf32>
    %87 = vector.broadcast %59 : vector<64x1xf32> to vector<64x32xf32>
    %88 = arith.mulf %86, %87 : vector<64x32xf32>
    %89 = vector.broadcast %34 : vector<1x32xf32> to vector<64x32xf32>
    %90 = vector.broadcast %78 : vector<64x1xf32> to vector<64x32xf32>
    %91 = arith.mulf %89, %90 : vector<64x32xf32>
    %92 = arith.addf %88, %91 : vector<64x32xf32>
    %93 = arith.mulf %85, %92 : vector<64x32xf32>
    %94 = arith.addf %93, %38 : vector<64x32xf32>
    %cst_31 = arith.constant 0.000000e+00 : f32
    %95 = vector.broadcast %cst_31 : f32 to vector<64x32xf32>
    %96 = arith.maximumf %94, %95 : vector<64x32xf32>
    %cst_32 = arith.constant dense<0.000000e+00> : vector<64xf32>
    %97 = vector.multi_reduction <add>, %96, %cst_32 [1] : vector<64x32xf32> to vector<64xf32>
    %98 = vector.shape_cast %97 : vector<64xf32> to vector<64x1xf32>
    %cst_33 = arith.constant 3.200000e+01 : f32
    %99 = vector.broadcast %cst_33 : f32 to vector<64x1xf32>
    %100 = arith.divf %98, %99 : vector<64x1xf32>
    %101 = vector.broadcast %100 : vector<64x1xf32> to vector<64x32xf32>
    %102 = arith.subf %96, %101 : vector<64x32xf32>
    %103 = arith.mulf %102, %102 : vector<64x32xf32>
    %cst_34 = arith.constant dense<0.000000e+00> : vector<64xf32>
    %104 = vector.multi_reduction <add>, %103, %cst_34 [1] : vector<64x32xf32> to vector<64xf32>
    %105 = vector.shape_cast %104 : vector<64xf32> to vector<64x1xf32>
    %cst_35 = arith.constant 3.200000e+01 : f32
    %106 = vector.broadcast %cst_35 : f32 to vector<64x1xf32>
    %107 = arith.divf %105, %106 : vector<64x1xf32>
    %cst_36 = arith.constant 9.99999971E-10 : f32
    %108 = vector.broadcast %cst_36 : f32 to vector<64x1xf32>
    %109 = arith.addf %107, %108 : vector<64x1xf32>
    %110 = vector.broadcast %100 : vector<64x1xf32> to vector<64x32xf32>
    %111 = arith.subf %96, %110 : vector<64x32xf32>
    %112 = vector.broadcast %4 : vector<1x32xf32> to vector<64x32xf32>
    %113 = arith.mulf %111, %112 : vector<64x32xf32>
    %114 = math.rsqrt %109 : vector<64x1xf32>
    %115 = vector.broadcast %114 : vector<64x1xf32> to vector<64x32xf32>
    %116 = arith.mulf %113, %115 : vector<64x32xf32>
    %117 = vector.broadcast %5 : vector<1x32xf32> to vector<64x32xf32>
    %118 = arith.addf %116, %117 : vector<64x32xf32>
    %c1_37 = arith.constant 1 : index
    %c0_38 = arith.constant 0 : index
    %c0_39 = arith.constant 0 : index
    %119 = vector.load %arg2[%c1_37, %c0_38, %c0_39] : memref<4x64x64xf32, #tpu.memory_space<vmem>>, vector<1x64x64xf32>
    %120 = vector.shape_cast %119 : vector<1x64x64xf32> to vector<64x64xf32>
    %121 = vector.extract_strided_slice %9 {offsets = [64, 0], sizes = [64, 32], strides = [1, 1]} : vector<256x32xf32> to vector<64x32xf32>
    %122 = vector.extract_strided_slice %13 {offsets = [64, 0], sizes = [64, 32], strides = [1, 1]} : vector<256x32xf32> to vector<64x32xf32>
    %cst_40 = arith.constant 0.000000e+00 : f32
    %123 = vector.broadcast %cst_40 : f32 to vector<64x64xf32>
    %124 = arith.cmpf ogt, %120, %123 : vector<64x64xf32>
    %125 = vector.extract_strided_slice %19 {offsets = [0, 64], sizes = [1, 64], strides = [1, 1]} : vector<2x256xf32> to vector<1x64xf32>
    %cst_41 = arith.constant -1.000000e+30 : f32
    %126 = vector.shape_cast %125 : vector<1x64xf32> to vector<1x64xf32>
    %127 = vector.broadcast %126 : vector<1x64xf32> to vector<64x64xf32>
    %128 = vector.broadcast %cst_41 : f32 to vector<64x64xf32>
    %129 = arith.select %124, %127, %128 : vector<64x64xi1>, vector<64x64xf32>
    %cst_42 = arith.constant dense<0xFF800000> : vector<64xf32>
    %130 = vector.multi_reduction <maximumf>, %129, %cst_42 [1] : vector<64x64xf32> to vector<64xf32>
    %131 = vector.shape_cast %130 : vector<64xf32> to vector<64x1xf32>
    %132 = vector.broadcast %125 : vector<1x64xf32> to vector<64x64xf32>
    %133 = vector.broadcast %131 : vector<64x1xf32> to vector<64x64xf32>
    %134 = arith.subf %132, %133 : vector<64x64xf32>
    %135 = math.exp %134 : vector<64x64xf32>
    %cst_43 = arith.constant 0.000000e+00 : f32
    %136 = vector.broadcast %cst_43 : f32 to vector<64x64xf32>
    %137 = arith.select %124, %135, %136 : vector<64x64xi1>, vector<64x64xf32>
    %138 = arith.mulf %137, %120 : vector<64x64xf32>
    %cst_44 = arith.constant dense<0.000000e+00> : vector<64xf32>
    %139 = vector.multi_reduction <add>, %138, %cst_44 [1] : vector<64x64xf32> to vector<64xf32>
    %140 = vector.shape_cast %139 : vector<64xf32> to vector<64x1xf32>
    %cst_45 = arith.constant 1.000000e-10 : f32
    %141 = vector.broadcast %cst_45 : f32 to vector<64x1xf32>
    %142 = arith.maximumf %140, %141 : vector<64x1xf32>
    %143 = tpu.reciprocal %142 {approx = true} : vector<64x1xf32> -> vector<64x1xf32>
    %144 = vector.extract_strided_slice %19 {offsets = [1, 64], sizes = [1, 64], strides = [1, 1]} : vector<2x256xf32> to vector<1x64xf32>
    %cst_46 = arith.constant -1.000000e+30 : f32
    %145 = vector.shape_cast %144 : vector<1x64xf32> to vector<1x64xf32>
    %146 = vector.broadcast %145 : vector<1x64xf32> to vector<64x64xf32>
    %147 = vector.broadcast %cst_46 : f32 to vector<64x64xf32>
    %148 = arith.select %124, %146, %147 : vector<64x64xi1>, vector<64x64xf32>
    %cst_47 = arith.constant dense<0xFF800000> : vector<64xf32>
    %149 = vector.multi_reduction <maximumf>, %148, %cst_47 [1] : vector<64x64xf32> to vector<64xf32>
    %150 = vector.shape_cast %149 : vector<64xf32> to vector<64x1xf32>
    %151 = vector.broadcast %144 : vector<1x64xf32> to vector<64x64xf32>
    %152 = vector.broadcast %150 : vector<64x1xf32> to vector<64x64xf32>
    %153 = arith.subf %151, %152 : vector<64x64xf32>
    %154 = math.exp %153 : vector<64x64xf32>
    %cst_48 = arith.constant 0.000000e+00 : f32
    %155 = vector.broadcast %cst_48 : f32 to vector<64x64xf32>
    %156 = arith.select %124, %154, %155 : vector<64x64xi1>, vector<64x64xf32>
    %157 = arith.mulf %156, %120 : vector<64x64xf32>
    %cst_49 = arith.constant dense<0.000000e+00> : vector<64xf32>
    %158 = vector.multi_reduction <add>, %157, %cst_49 [1] : vector<64x64xf32> to vector<64xf32>
    %159 = vector.shape_cast %158 : vector<64xf32> to vector<64x1xf32>
    %cst_50 = arith.constant 1.000000e-10 : f32
    %160 = vector.broadcast %cst_50 : f32 to vector<64x1xf32>
    %161 = arith.maximumf %159, %160 : vector<64x1xf32>
    %162 = tpu.reciprocal %161 {approx = true} : vector<64x1xf32> -> vector<64x1xf32>
    %163 = tpu.concatenate %138, %157 in 1 : vector<64x64xf32>, vector<64x64xf32> -> vector<64x128xf32>
    %164 = vector.broadcast %27 : vector<1x32xf32> to vector<64x32xf32>
    %165 = arith.mulf %121, %164 : vector<64x32xf32>
    %166 = vector.broadcast %34 : vector<1x32xf32> to vector<64x32xf32>
    %167 = arith.mulf %121, %166 : vector<64x32xf32>
    %168 = tpu.concatenate %165, %167 in 0 : vector<64x32xf32>, vector<64x32xf32> -> vector<128x32xf32>
    %cst_51 = arith.constant dense<0.000000e+00> : vector<64x32xf32>
    %169 = tpu.matmul %163, %168, %cst_51 {dimension_numbers = #tpu.dot_dimension_numbers<[1], [0], [0], [1], [0, 0, 1, 1], [], []>} : vector<64x128xf32>, vector<128x32xf32>, vector<64x32xf32> -> vector<64x32xf32>
    %170 = vector.broadcast %27 : vector<1x32xf32> to vector<64x32xf32>
    %171 = vector.broadcast %143 : vector<64x1xf32> to vector<64x32xf32>
    %172 = arith.mulf %170, %171 : vector<64x32xf32>
    %173 = vector.broadcast %34 : vector<1x32xf32> to vector<64x32xf32>
    %174 = vector.broadcast %162 : vector<64x1xf32> to vector<64x32xf32>
    %175 = arith.mulf %173, %174 : vector<64x32xf32>
    %176 = arith.addf %172, %175 : vector<64x32xf32>
    %177 = arith.mulf %169, %176 : vector<64x32xf32>
    %178 = arith.addf %177, %122 : vector<64x32xf32>
    %cst_52 = arith.constant 0.000000e+00 : f32
    %179 = vector.broadcast %cst_52 : f32 to vector<64x32xf32>
    %180 = arith.maximumf %178, %179 : vector<64x32xf32>
    %cst_53 = arith.constant dense<0.000000e+00> : vector<64xf32>
    %181 = vector.multi_reduction <add>, %180, %cst_53 [1] : vector<64x32xf32> to vector<64xf32>
    %182 = vector.shape_cast %181 : vector<64xf32> to vector<64x1xf32>
    %cst_54 = arith.constant 3.200000e+01 : f32
    %183 = vector.broadcast %cst_54 : f32 to vector<64x1xf32>
    %184 = arith.divf %182, %183 : vector<64x1xf32>
    %185 = vector.broadcast %184 : vector<64x1xf32> to vector<64x32xf32>
    %186 = arith.subf %180, %185 : vector<64x32xf32>
    %187 = arith.mulf %186, %186 : vector<64x32xf32>
    %cst_55 = arith.constant dense<0.000000e+00> : vector<64xf32>
    %188 = vector.multi_reduction <add>, %187, %cst_55 [1] : vector<64x32xf32> to vector<64xf32>
    %189 = vector.shape_cast %188 : vector<64xf32> to vector<64x1xf32>
    %cst_56 = arith.constant 3.200000e+01 : f32
    %190 = vector.broadcast %cst_56 : f32 to vector<64x1xf32>
    %191 = arith.divf %189, %190 : vector<64x1xf32>
    %cst_57 = arith.constant 9.99999971E-10 : f32
    %192 = vector.broadcast %cst_57 : f32 to vector<64x1xf32>
    %193 = arith.addf %191, %192 : vector<64x1xf32>
    %194 = vector.broadcast %184 : vector<64x1xf32> to vector<64x32xf32>
    %195 = arith.subf %180, %194 : vector<64x32xf32>
    %196 = vector.broadcast %4 : vector<1x32xf32> to vector<64x32xf32>
    %197 = arith.mulf %195, %196 : vector<64x32xf32>
    %198 = math.rsqrt %193 : vector<64x1xf32>
    %199 = vector.broadcast %198 : vector<64x1xf32> to vector<64x32xf32>
    %200 = arith.mulf %197, %199 : vector<64x32xf32>
    %201 = vector.broadcast %5 : vector<1x32xf32> to vector<64x32xf32>
    %202 = arith.addf %200, %201 : vector<64x32xf32>
    %c2_58 = arith.constant 2 : index
    %c0_59 = arith.constant 0 : index
    %c0_60 = arith.constant 0 : index
    %203 = vector.load %arg2[%c2_58, %c0_59, %c0_60] : memref<4x64x64xf32, #tpu.memory_space<vmem>>, vector<1x64x64xf32>
    %204 = vector.shape_cast %203 : vector<1x64x64xf32> to vector<64x64xf32>
    %205 = vector.extract_strided_slice %9 {offsets = [128, 0], sizes = [64, 32], strides = [1, 1]} : vector<256x32xf32> to vector<64x32xf32>
    %206 = vector.extract_strided_slice %13 {offsets = [128, 0], sizes = [64, 32], strides = [1, 1]} : vector<256x32xf32> to vector<64x32xf32>
    %cst_61 = arith.constant 0.000000e+00 : f32
    %207 = vector.broadcast %cst_61 : f32 to vector<64x64xf32>
    %208 = arith.cmpf ogt, %204, %207 : vector<64x64xf32>
    %209 = vector.extract_strided_slice %19 {offsets = [0, 128], sizes = [1, 64], strides = [1, 1]} : vector<2x256xf32> to vector<1x64xf32>
    %cst_62 = arith.constant -1.000000e+30 : f32
    %210 = vector.shape_cast %209 : vector<1x64xf32> to vector<1x64xf32>
    %211 = vector.broadcast %210 : vector<1x64xf32> to vector<64x64xf32>
    %212 = vector.broadcast %cst_62 : f32 to vector<64x64xf32>
    %213 = arith.select %208, %211, %212 : vector<64x64xi1>, vector<64x64xf32>
    %cst_63 = arith.constant dense<0xFF800000> : vector<64xf32>
    %214 = vector.multi_reduction <maximumf>, %213, %cst_63 [1] : vector<64x64xf32> to vector<64xf32>
    %215 = vector.shape_cast %214 : vector<64xf32> to vector<64x1xf32>
    %216 = vector.broadcast %209 : vector<1x64xf32> to vector<64x64xf32>
    %217 = vector.broadcast %215 : vector<64x1xf32> to vector<64x64xf32>
    %218 = arith.subf %216, %217 : vector<64x64xf32>
    %219 = math.exp %218 : vector<64x64xf32>
    %cst_64 = arith.constant 0.000000e+00 : f32
    %220 = vector.broadcast %cst_64 : f32 to vector<64x64xf32>
    %221 = arith.select %208, %219, %220 : vector<64x64xi1>, vector<64x64xf32>
    %222 = arith.mulf %221, %204 : vector<64x64xf32>
    %cst_65 = arith.constant dense<0.000000e+00> : vector<64xf32>
    %223 = vector.multi_reduction <add>, %222, %cst_65 [1] : vector<64x64xf32> to vector<64xf32>
    %224 = vector.shape_cast %223 : vector<64xf32> to vector<64x1xf32>
    %cst_66 = arith.constant 1.000000e-10 : f32
    %225 = vector.broadcast %cst_66 : f32 to vector<64x1xf32>
    %226 = arith.maximumf %224, %225 : vector<64x1xf32>
    %227 = tpu.reciprocal %226 {approx = true} : vector<64x1xf32> -> vector<64x1xf32>
    %228 = vector.extract_strided_slice %19 {offsets = [1, 128], sizes = [1, 64], strides = [1, 1]} : vector<2x256xf32> to vector<1x64xf32>
    %cst_67 = arith.constant -1.000000e+30 : f32
    %229 = vector.shape_cast %228 : vector<1x64xf32> to vector<1x64xf32>
    %230 = vector.broadcast %229 : vector<1x64xf32> to vector<64x64xf32>
    %231 = vector.broadcast %cst_67 : f32 to vector<64x64xf32>
    %232 = arith.select %208, %230, %231 : vector<64x64xi1>, vector<64x64xf32>
    %cst_68 = arith.constant dense<0xFF800000> : vector<64xf32>
    %233 = vector.multi_reduction <maximumf>, %232, %cst_68 [1] : vector<64x64xf32> to vector<64xf32>
    %234 = vector.shape_cast %233 : vector<64xf32> to vector<64x1xf32>
    %235 = vector.broadcast %228 : vector<1x64xf32> to vector<64x64xf32>
    %236 = vector.broadcast %234 : vector<64x1xf32> to vector<64x64xf32>
    %237 = arith.subf %235, %236 : vector<64x64xf32>
    %238 = math.exp %237 : vector<64x64xf32>
    %cst_69 = arith.constant 0.000000e+00 : f32
    %239 = vector.broadcast %cst_69 : f32 to vector<64x64xf32>
    %240 = arith.select %208, %238, %239 : vector<64x64xi1>, vector<64x64xf32>
    %241 = arith.mulf %240, %204 : vector<64x64xf32>
    %cst_70 = arith.constant dense<0.000000e+00> : vector<64xf32>
    %242 = vector.multi_reduction <add>, %241, %cst_70 [1] : vector<64x64xf32> to vector<64xf32>
    %243 = vector.shape_cast %242 : vector<64xf32> to vector<64x1xf32>
    %cst_71 = arith.constant 1.000000e-10 : f32
    %244 = vector.broadcast %cst_71 : f32 to vector<64x1xf32>
    %245 = arith.maximumf %243, %244 : vector<64x1xf32>
    %246 = tpu.reciprocal %245 {approx = true} : vector<64x1xf32> -> vector<64x1xf32>
    %247 = tpu.concatenate %222, %241 in 1 : vector<64x64xf32>, vector<64x64xf32> -> vector<64x128xf32>
    %248 = vector.broadcast %27 : vector<1x32xf32> to vector<64x32xf32>
    %249 = arith.mulf %205, %248 : vector<64x32xf32>
    %250 = vector.broadcast %34 : vector<1x32xf32> to vector<64x32xf32>
    %251 = arith.mulf %205, %250 : vector<64x32xf32>
    %252 = tpu.concatenate %249, %251 in 0 : vector<64x32xf32>, vector<64x32xf32> -> vector<128x32xf32>
    %cst_72 = arith.constant dense<0.000000e+00> : vector<64x32xf32>
    %253 = tpu.matmul %247, %252, %cst_72 {dimension_numbers = #tpu.dot_dimension_numbers<[1], [0], [0], [1], [0, 0, 1, 1], [], []>} : vector<64x128xf32>, vector<128x32xf32>, vector<64x32xf32> -> vector<64x32xf32>
    %254 = vector.broadcast %27 : vector<1x32xf32> to vector<64x32xf32>
    %255 = vector.broadcast %227 : vector<64x1xf32> to vector<64x32xf32>
    %256 = arith.mulf %254, %255 : vector<64x32xf32>
    %257 = vector.broadcast %34 : vector<1x32xf32> to vector<64x32xf32>
    %258 = vector.broadcast %246 : vector<64x1xf32> to vector<64x32xf32>
    %259 = arith.mulf %257, %258 : vector<64x32xf32>
    %260 = arith.addf %256, %259 : vector<64x32xf32>
    %261 = arith.mulf %253, %260 : vector<64x32xf32>
    %262 = arith.addf %261, %206 : vector<64x32xf32>
    %cst_73 = arith.constant 0.000000e+00 : f32
    %263 = vector.broadcast %cst_73 : f32 to vector<64x32xf32>
    %264 = arith.maximumf %262, %263 : vector<64x32xf32>
    %cst_74 = arith.constant dense<0.000000e+00> : vector<64xf32>
    %265 = vector.multi_reduction <add>, %264, %cst_74 [1] : vector<64x32xf32> to vector<64xf32>
    %266 = vector.shape_cast %265 : vector<64xf32> to vector<64x1xf32>
    %cst_75 = arith.constant 3.200000e+01 : f32
    %267 = vector.broadcast %cst_75 : f32 to vector<64x1xf32>
    %268 = arith.divf %266, %267 : vector<64x1xf32>
    %269 = vector.broadcast %268 : vector<64x1xf32> to vector<64x32xf32>
    %270 = arith.subf %264, %269 : vector<64x32xf32>
    %271 = arith.mulf %270, %270 : vector<64x32xf32>
    %cst_76 = arith.constant dense<0.000000e+00> : vector<64xf32>
    %272 = vector.multi_reduction <add>, %271, %cst_76 [1] : vector<64x32xf32> to vector<64xf32>
    %273 = vector.shape_cast %272 : vector<64xf32> to vector<64x1xf32>
    %cst_77 = arith.constant 3.200000e+01 : f32
    %274 = vector.broadcast %cst_77 : f32 to vector<64x1xf32>
    %275 = arith.divf %273, %274 : vector<64x1xf32>
    %cst_78 = arith.constant 9.99999971E-10 : f32
    %276 = vector.broadcast %cst_78 : f32 to vector<64x1xf32>
    %277 = arith.addf %275, %276 : vector<64x1xf32>
    %278 = vector.broadcast %268 : vector<64x1xf32> to vector<64x32xf32>
    %279 = arith.subf %264, %278 : vector<64x32xf32>
    %280 = vector.broadcast %4 : vector<1x32xf32> to vector<64x32xf32>
    %281 = arith.mulf %279, %280 : vector<64x32xf32>
    %282 = math.rsqrt %277 : vector<64x1xf32>
    %283 = vector.broadcast %282 : vector<64x1xf32> to vector<64x32xf32>
    %284 = arith.mulf %281, %283 : vector<64x32xf32>
    %285 = vector.broadcast %5 : vector<1x32xf32> to vector<64x32xf32>
    %286 = arith.addf %284, %285 : vector<64x32xf32>
    %c3 = arith.constant 3 : index
    %c0_79 = arith.constant 0 : index
    %c0_80 = arith.constant 0 : index
    %287 = vector.load %arg2[%c3, %c0_79, %c0_80] : memref<4x64x64xf32, #tpu.memory_space<vmem>>, vector<1x64x64xf32>
    %288 = vector.shape_cast %287 : vector<1x64x64xf32> to vector<64x64xf32>
    %289 = vector.extract_strided_slice %9 {offsets = [192, 0], sizes = [64, 32], strides = [1, 1]} : vector<256x32xf32> to vector<64x32xf32>
    %290 = vector.extract_strided_slice %13 {offsets = [192, 0], sizes = [64, 32], strides = [1, 1]} : vector<256x32xf32> to vector<64x32xf32>
    %cst_81 = arith.constant 0.000000e+00 : f32
    %291 = vector.broadcast %cst_81 : f32 to vector<64x64xf32>
    %292 = arith.cmpf ogt, %288, %291 : vector<64x64xf32>
    %293 = vector.extract_strided_slice %19 {offsets = [0, 192], sizes = [1, 64], strides = [1, 1]} : vector<2x256xf32> to vector<1x64xf32>
    %cst_82 = arith.constant -1.000000e+30 : f32
    %294 = vector.shape_cast %293 : vector<1x64xf32> to vector<1x64xf32>
    %295 = vector.broadcast %294 : vector<1x64xf32> to vector<64x64xf32>
    %296 = vector.broadcast %cst_82 : f32 to vector<64x64xf32>
    %297 = arith.select %292, %295, %296 : vector<64x64xi1>, vector<64x64xf32>
    %cst_83 = arith.constant dense<0xFF800000> : vector<64xf32>
    %298 = vector.multi_reduction <maximumf>, %297, %cst_83 [1] : vector<64x64xf32> to vector<64xf32>
    %299 = vector.shape_cast %298 : vector<64xf32> to vector<64x1xf32>
    %300 = vector.broadcast %293 : vector<1x64xf32> to vector<64x64xf32>
    %301 = vector.broadcast %299 : vector<64x1xf32> to vector<64x64xf32>
    %302 = arith.subf %300, %301 : vector<64x64xf32>
    %303 = math.exp %302 : vector<64x64xf32>
    %cst_84 = arith.constant 0.000000e+00 : f32
    %304 = vector.broadcast %cst_84 : f32 to vector<64x64xf32>
    %305 = arith.select %292, %303, %304 : vector<64x64xi1>, vector<64x64xf32>
    %306 = arith.mulf %305, %288 : vector<64x64xf32>
    %cst_85 = arith.constant dense<0.000000e+00> : vector<64xf32>
    %307 = vector.multi_reduction <add>, %306, %cst_85 [1] : vector<64x64xf32> to vector<64xf32>
    %308 = vector.shape_cast %307 : vector<64xf32> to vector<64x1xf32>
    %cst_86 = arith.constant 1.000000e-10 : f32
    %309 = vector.broadcast %cst_86 : f32 to vector<64x1xf32>
    %310 = arith.maximumf %308, %309 : vector<64x1xf32>
    %311 = tpu.reciprocal %310 {approx = true} : vector<64x1xf32> -> vector<64x1xf32>
    %312 = vector.extract_strided_slice %19 {offsets = [1, 192], sizes = [1, 64], strides = [1, 1]} : vector<2x256xf32> to vector<1x64xf32>
    %cst_87 = arith.constant -1.000000e+30 : f32
    %313 = vector.shape_cast %312 : vector<1x64xf32> to vector<1x64xf32>
    %314 = vector.broadcast %313 : vector<1x64xf32> to vector<64x64xf32>
    %315 = vector.broadcast %cst_87 : f32 to vector<64x64xf32>
    %316 = arith.select %292, %314, %315 : vector<64x64xi1>, vector<64x64xf32>
    %cst_88 = arith.constant dense<0xFF800000> : vector<64xf32>
    %317 = vector.multi_reduction <maximumf>, %316, %cst_88 [1] : vector<64x64xf32> to vector<64xf32>
    %318 = vector.shape_cast %317 : vector<64xf32> to vector<64x1xf32>
    %319 = vector.broadcast %312 : vector<1x64xf32> to vector<64x64xf32>
    %320 = vector.broadcast %318 : vector<64x1xf32> to vector<64x64xf32>
    %321 = arith.subf %319, %320 : vector<64x64xf32>
    %322 = math.exp %321 : vector<64x64xf32>
    %cst_89 = arith.constant 0.000000e+00 : f32
    %323 = vector.broadcast %cst_89 : f32 to vector<64x64xf32>
    %324 = arith.select %292, %322, %323 : vector<64x64xi1>, vector<64x64xf32>
    %325 = arith.mulf %324, %288 : vector<64x64xf32>
    %cst_90 = arith.constant dense<0.000000e+00> : vector<64xf32>
    %326 = vector.multi_reduction <add>, %325, %cst_90 [1] : vector<64x64xf32> to vector<64xf32>
    %327 = vector.shape_cast %326 : vector<64xf32> to vector<64x1xf32>
    %cst_91 = arith.constant 1.000000e-10 : f32
    %328 = vector.broadcast %cst_91 : f32 to vector<64x1xf32>
    %329 = arith.maximumf %327, %328 : vector<64x1xf32>
    %330 = tpu.reciprocal %329 {approx = true} : vector<64x1xf32> -> vector<64x1xf32>
    %331 = tpu.concatenate %306, %325 in 1 : vector<64x64xf32>, vector<64x64xf32> -> vector<64x128xf32>
    %332 = vector.broadcast %27 : vector<1x32xf32> to vector<64x32xf32>
    %333 = arith.mulf %289, %332 : vector<64x32xf32>
    %334 = vector.broadcast %34 : vector<1x32xf32> to vector<64x32xf32>
    %335 = arith.mulf %289, %334 : vector<64x32xf32>
    %336 = tpu.concatenate %333, %335 in 0 : vector<64x32xf32>, vector<64x32xf32> -> vector<128x32xf32>
    %cst_92 = arith.constant dense<0.000000e+00> : vector<64x32xf32>
    %337 = tpu.matmul %331, %336, %cst_92 {dimension_numbers = #tpu.dot_dimension_numbers<[1], [0], [0], [1], [0, 0, 1, 1], [], []>} : vector<64x128xf32>, vector<128x32xf32>, vector<64x32xf32> -> vector<64x32xf32>
    %338 = vector.broadcast %27 : vector<1x32xf32> to vector<64x32xf32>
    %339 = vector.broadcast %311 : vector<64x1xf32> to vector<64x32xf32>
    %340 = arith.mulf %338, %339 : vector<64x32xf32>
    %341 = vector.broadcast %34 : vector<1x32xf32> to vector<64x32xf32>
    %342 = vector.broadcast %330 : vector<64x1xf32> to vector<64x32xf32>
    %343 = arith.mulf %341, %342 : vector<64x32xf32>
    %344 = arith.addf %340, %343 : vector<64x32xf32>
    %345 = arith.mulf %337, %344 : vector<64x32xf32>
    %346 = arith.addf %345, %290 : vector<64x32xf32>
    %cst_93 = arith.constant 0.000000e+00 : f32
    %347 = vector.broadcast %cst_93 : f32 to vector<64x32xf32>
    %348 = arith.maximumf %346, %347 : vector<64x32xf32>
    %cst_94 = arith.constant dense<0.000000e+00> : vector<64xf32>
    %349 = vector.multi_reduction <add>, %348, %cst_94 [1] : vector<64x32xf32> to vector<64xf32>
    %350 = vector.shape_cast %349 : vector<64xf32> to vector<64x1xf32>
    %cst_95 = arith.constant 3.200000e+01 : f32
    %351 = vector.broadcast %cst_95 : f32 to vector<64x1xf32>
    %352 = arith.divf %350, %351 : vector<64x1xf32>
    %353 = vector.broadcast %352 : vector<64x1xf32> to vector<64x32xf32>
    %354 = arith.subf %348, %353 : vector<64x32xf32>
    %355 = arith.mulf %354, %354 : vector<64x32xf32>
    %cst_96 = arith.constant dense<0.000000e+00> : vector<64xf32>
    %356 = vector.multi_reduction <add>, %355, %cst_96 [1] : vector<64x32xf32> to vector<64xf32>
    %357 = vector.shape_cast %356 : vector<64xf32> to vector<64x1xf32>
    %cst_97 = arith.constant 3.200000e+01 : f32
    %358 = vector.broadcast %cst_97 : f32 to vector<64x1xf32>
    %359 = arith.divf %357, %358 : vector<64x1xf32>
    %cst_98 = arith.constant 9.99999971E-10 : f32
    %360 = vector.broadcast %cst_98 : f32 to vector<64x1xf32>
    %361 = arith.addf %359, %360 : vector<64x1xf32>
    %362 = vector.broadcast %352 : vector<64x1xf32> to vector<64x32xf32>
    %363 = arith.subf %348, %362 : vector<64x32xf32>
    %364 = vector.broadcast %4 : vector<1x32xf32> to vector<64x32xf32>
    %365 = arith.mulf %363, %364 : vector<64x32xf32>
    %366 = math.rsqrt %361 : vector<64x1xf32>
    %367 = vector.broadcast %366 : vector<64x1xf32> to vector<64x32xf32>
    %368 = arith.mulf %365, %367 : vector<64x32xf32>
    %369 = vector.broadcast %5 : vector<1x32xf32> to vector<64x32xf32>
    %370 = arith.addf %368, %369 : vector<64x32xf32>
    %371 = tpu.concatenate %118, %202, %286, %370 in 1 : vector<64x32xf32>, vector<64x32xf32>, vector<64x32xf32>, vector<64x32xf32> -> vector<64x128xf32>
    %c0_99 = arith.constant 0 : index
    %c0_100 = arith.constant 0 : index
    %372 = vector.load %arg6[%c0_99, %c0_100] : memref<64x128xf32, #tpu.memory_space<vmem>>, vector<64x128xf32>
    tpu.vector_store %arg6[%c0_99, %c0_100], %371 {strides = array<i32>} : memref<64x128xf32, #tpu.memory_space<vmem>>, vector<64x128xf32>,
    return
  }
  func.func @transform_0(%arg0: i32) -> (i32, i32) {
    %c0_i32 = arith.constant 0 : i32
    %c0_i32_0 = arith.constant 0 : i32
    return %arg0, %c0_i32 : i32, i32
  }
  func.func @transform_1(%arg0: i32) -> (i32, i32, i32) {
    %c0_i32 = arith.constant 0 : i32
    %c0_i32_0 = arith.constant 0 : i32
    %c0_i32_1 = arith.constant 0 : i32
    return %arg0, %c0_i32, %c0_i32_0 : i32, i32, i32
  }
  func.func @transform_2(%arg0: i32) -> (i32, i32) {
    %c0_i32 = arith.constant 0 : i32
    %c0_i32_0 = arith.constant 0 : i32
    %c0_i32_1 = arith.constant 0 : i32
    return %c0_i32, %c0_i32_0 : i32, i32
  }
  func.func @transform_3(%arg0: i32) -> (i32, i32) {
    %c0_i32 = arith.constant 0 : i32
    %c0_i32_0 = arith.constant 0 : i32
    %c0_i32_1 = arith.constant 0 : i32
    return %c0_i32, %c0_i32_0 : i32, i32
  }
  func.func @transform_4(%arg0: i32) -> (i32, i32) {
    %c0_i32 = arith.constant 0 : i32
    %c0_i32_0 = arith.constant 0 : i32
    %c0_i32_1 = arith.constant 0 : i32
    return %c0_i32, %c0_i32_0 : i32, i32
  }
  func.func @transform_5(%arg0: i32) -> (i32, i32) {
    %c0_i32 = arith.constant 0 : i32
    %c0_i32_0 = arith.constant 0 : i32
    return %c0_i32, %arg0 : i32, i32
  }
}

</mosaic_0001>

<llo_original>
// kernel: tpu_custom_call.1
$region0: #{tpu_custom_call.1}
  #allocation0 [shape = 'u32[]', space=smem, size = 0x4, offset = 0x4, fixed_abs, tag = 'smem constant byte address 0x4 - core index']
  #allocation1 [shape = 'u32[144,128]{1,0:T(1,128)}', space=vmem, size = 0x12000, scoped, tag = 'internal scratch']
  %s0 = inlined_call_operand.vmem [shape: f32[512,32], index: 0, kind: input, shape index: {}]
  %s1 = inlined_call_operand.vmem [shape: f32[8,64,64], index: 1, kind: input, shape index: {}]
  %s2 = inlined_call_operand.vmem [shape: f32[32,32], index: 2, kind: input, shape index: {}]
  %s3 = inlined_call_operand.vmem [shape: f32[32,32], index: 3, kind: input, shape index: {}]
  %s4 = inlined_call_operand.vmem [shape: f32[8,32], index: 4, kind: input, shape index: {}]
  %s5 = inlined_call_operand.hbm [shape: f32[64,256], index: 5, kind: output, shape index: {}]
  %s6 = sld [smem:[#allocation0]]
  $region53: #{tpu_custom_call.1} parent=0
    _
  %s8 = ssub.s32 1, %s6
  %s9 = scalar_select 0, %s8, %s6
  $region1: #{tpu_custom_call.1} parent=0
    #allocation2 [shape = 'u8[65536]{0}', space=vmem, size = 0x10000, scoped, tag = 'output window, operand 0']
    #allocation3 [shape = 's32[2]{0}', space=sflag, size = 0x8, scoped, tag = 'scoped memory for tpu_custom_call.1']
    %10 = vsyncpa [#allocation3], 0
    %s11 = scalar_lea.sflag [#allocation3], 1
    %12 = vsyncpa %s11, 0
    loop: start=0, step=1, limit=4
    $region2: #{tpu_custom_call.1} parent=1 // loop_pre_header
      _
    $region3: #{tpu_custom_call.1} parent=1 // loop_header
      %s14 = sphi 0, %s18
      %p15 = scmp.ge.s32.totalorder %s14, 4
      %s24 = sphi 0, %s26
      %s27 = sphi 0, %s24
      %s28 = sphi 0, %s27
      %s44 = sphi 0, %s28
      %s50 = sphi 0, %s52
      %s53 = sphi 0, %s50
      %s54 = sphi 0, %s53
      %s70 = sphi 0, %s54
      %s74 = sphi 0, %s74
      %s76 = sphi 0, %s74
      %s77 = sphi 0, %s76
      %s91 = sphi 0, %s77
      %s95 = sphi 0, %s95
      %s97 = sphi 0, %s95
      %s98 = sphi 0, %s97
      %s112 = sphi 0, %s98
      %s116 = sphi 0, %s116
      %s118 = sphi 0, %s116
      %s119 = sphi 0, %s118
      %s133 = sphi 0, %s119
      %s139 = sphi 0, %s141
      %s142 = sphi 0, %s139
      %s143 = sphi 0, %s142
      %s159 = sphi 0, %s143
    $region4: #{tpu_custom_call.1} parent=1 // loop_header_branch
      %17 = sbr.rel (%p15) target = $region8
    $region5: #{tpu_custom_call.1} parent=1 // loop_body
      %s19 = ssub.s32 %s14, 1
      %s20 = ssub.s32 %s14, 2
      %s21 = sadd.s32 %s14, 1
      %s22 = ssub.s32 %s14, %s21
      %p23 = scmp.eq.s32.totalorder %s22, 0
      %s25 = sadd.s32 %s24, 1
      %s26 = scalar_select %p23, %s24, %s25
      %p29 = pneg %p23
      %p30 = scmp.eq.s32.totalorder %s14, 1
      %p31 = por %p29, %p30
      %p32 = scmp.ne.s32.totalorder %s24, %s27
      %p33 = scmp.eq.s32.totalorder %s14, 0
      %p34 = por %p32, %p33
      %p35 = scmp.ne.s32.totalorder %s24, %s27
      %p36 = scmp.eq.s32.totalorder %s19, 1
      %p37 = por %p35, %p36
      %p38 = scmp.ne.s32.totalorder %s27, %s28
      %p39 = scmp.eq.s32.totalorder %s19, 0
      %p40 = por %p38, %p39
      %p41 = scmp.ne.s32.totalorder %s27, %s28
      %p42 = scmp.eq.s32.totalorder %s20, 1
      %p43 = por %p41, %p42
      %p45 = scmp.ne.s32.totalorder %s28, %s44
      %p46 = scmp.eq.s32.totalorder %s20, 0
      %p47 = por %p45, %p46
      %s48 = ssub.s32 %s14, %s21
      %p49 = scmp.eq.s32.totalorder %s48, 0
      %s51 = sadd.s32 %s50, 1
      %s52 = scalar_select %p49, %s50, %s51
      %p55 = pneg %p49
      %p56 = scmp.eq.s32.totalorder %s14, 1
      %p57 = por %p55, %p56
      %p58 = scmp.ne.s32.totalorder %s50, %s53
      %p59 = scmp.eq.s32.totalorder %s14, 0
      %p60 = por %p58, %p59
      %p61 = scmp.ne.s32.totalorder %s50, %s53
      %p62 = scmp.eq.s32.totalorder %s19, 1
      %p63 = por %p61, %p62
      %p64 = scmp.ne.s32.totalorder %s53, %s54
      %p65 = scmp.eq.s32.totalorder %s19, 0
      %p66 = por %p64, %p65
      %p67 = scmp.ne.s32.totalorder %s53, %s54
      %p68 = scmp.eq.s32.totalorder %s20, 1
      %p69 = por %p67, %p68
      %p71 = scmp.ne.s32.totalorder %s54, %s70
      %p72 = scmp.eq.s32.totalorder %s20, 0
      %p73 = por %p71, %p72
      %s75 = sadd.s32 %s74, 1
      %p78 = scmp.eq.s32.totalorder %s14, 1
      %p79 = scmp.ne.s32.totalorder %s74, %s76
      %p80 = scmp.eq.s32.totalorder %s14, 0
      %p81 = por %p79, %p80
      %p82 = scmp.ne.s32.totalorder %s74, %s76
      %p83 = scmp.eq.s32.totalorder %s19, 1
      %p84 = por %p82, %p83
      %p85 = scmp.ne.s32.totalorder %s76, %s77
      %p86 = scmp.eq.s32.totalorder %s19, 0
      %p87 = por %p85, %p86
      %p88 = scmp.ne.s32.totalorder %s76, %s77
      %p89 = scmp.eq.s32.totalorder %s20, 1
      %p90 = por %p88, %p89
      %p92 = scmp.ne.s32.totalorder %s77, %s91
      %p93 = scmp.eq.s32.totalorder %s20, 0
      %p94 = por %p92, %p93
      %s96 = sadd.s32 %s95, 1
      %p99 = scmp.eq.s32.totalorder %s14, 1
      %p100 = scmp.ne.s32.totalorder %s95, %s97
      %p101 = scmp.eq.s32.totalorder %s14, 0
      %p102 = por %p100, %p101
      %p103 = scmp.ne.s32.totalorder %s95, %s97
      %p104 = scmp.eq.s32.totalorder %s19, 1
      %p105 = por %p103, %p104
      %p106 = scmp.ne.s32.totalorder %s97, %s98
      %p107 = scmp.eq.s32.totalorder %s19, 0
      %p108 = por %p106, %p107
      %p109 = scmp.ne.s32.totalorder %s97, %s98
      %p110 = scmp.eq.s32.totalorder %s20, 1
      %p111 = por %p109, %p110
      %p113 = scmp.ne.s32.totalorder %s98, %s112
      %p114 = scmp.eq.s32.totalorder %s20, 0
      %p115 = por %p113, %p114
      %s117 = sadd.s32 %s116, 1
      %p120 = scmp.eq.s32.totalorder %s14, 1
      %p121 = scmp.ne.s32.totalorder %s116, %s118
      %p122 = scmp.eq.s32.totalorder %s14, 0
      %p123 = por %p121, %p122
      %p124 = scmp.ne.s32.totalorder %s116, %s118
      %p125 = scmp.eq.s32.totalorder %s19, 1
      %p126 = por %p124, %p125
      %p127 = scmp.ne.s32.totalorder %s118, %s119
      %p128 = scmp.eq.s32.totalorder %s19, 0
      %p129 = por %p127, %p128
      %p130 = scmp.ne.s32.totalorder %s118, %s119
      %p131 = scmp.eq.s32.totalorder %s20, 1
      %p132 = por %p130, %p131
      %p134 = scmp.ne.s32.totalorder %s119, %s133
      %p135 = scmp.eq.s32.totalorder %s20, 0
      %p136 = por %p134, %p135
      %s137 = ssub.s32 %s14, %s21
      %p138 = scmp.eq.s32.totalorder %s137, 0
      %s140 = sadd.s32 %s139, 1
      %s141 = scalar_select %p138, %s139, %s140
      %p144 = pneg %p138
      %p145 = scmp.eq.s32.totalorder %s14, 1
      %p146 = por %p144, %p145
      %p147 = scmp.ne.s32.totalorder %s139, %s142
      %p148 = scmp.eq.s32.totalorder %s14, 0
      %p149 = por %p147, %p148
      %p150 = scmp.ne.s32.totalorder %s139, %s142
      %p151 = scmp.eq.s32.totalorder %s19, 1
      %p152 = por %p150, %p151
      %p153 = scmp.ne.s32.totalorder %s142, %s143
      %p154 = scmp.eq.s32.totalorder %s19, 0
      %p155 = por %p153, %p154
      %p156 = scmp.ne.s32.totalorder %s142, %s143
      %p157 = scmp.eq.s32.totalorder %s20, 1
      %p158 = por %p156, %p157
      %p160 = scmp.ne.s32.totalorder %s143, %s159
      %p161 = scmp.eq.s32.totalorder %s20, 0
      %p162 = por %p160, %p161
      %p163 = scmp.le.s32.totalorder 1, %s14
      %p164 = scmp.lt.s32.totalorder %s14, 3
      %p165 = pnand %p163, %p164
      %p166 = pneg %p165
      // Predicated region
      $region9: #{tpu_custom_call.1} parent=5 // pred_check
        _
      $region10: #{tpu_custom_call.1} parent=5 // pred_check_branch
        %168 = sbr.rel (%p165) target = $region12
      $region11: #{tpu_custom_call.1} parent=5 // pred_region
        %s169 = ssub.s32 %s14, 1
        // Predicated region
        $region13: #{tpu_custom_call.1} parent=11 // pred_check
          %p170 = pneg %p87
        $region14: #{tpu_custom_call.1} parent=11 // pred_check_branch
          %172 = sbr.rel (%p170) target = $region16
        $region15: #{tpu_custom_call.1} parent=11 // pred_region
          _
        $region16: #{tpu_custom_call.1} parent=11 // pred_fallthru
          _
        // Predicated region
        $region17: #{tpu_custom_call.1} parent=11 // pred_check
          %p173 = pneg %p108
        $region18: #{tpu_custom_call.1} parent=11 // pred_check_branch
          %175 = sbr.rel (%p173) target = $region20
        $region19: #{tpu_custom_call.1} parent=11 // pred_region
          _
        $region20: #{tpu_custom_call.1} parent=11 // pred_fallthru
          _
        // Predicated region
        $region21: #{tpu_custom_call.1} parent=11 // pred_check
          %p176 = pneg %p129
        $region22: #{tpu_custom_call.1} parent=11 // pred_check_branch
          %178 = sbr.rel (%p176) target = $region24
        $region23: #{tpu_custom_call.1} parent=11 // pred_region
          _
        $region24: #{tpu_custom_call.1} parent=11 // pred_fallthru
          _
      $region12: #{tpu_custom_call.1} parent=5 // pred_fallthru
        _
      %p179 = scmp.lt.s32.totalorder %s14, 2
      // Predicated region
      $region25: #{tpu_custom_call.1} parent=5 // pred_check
        %p180 = pneg %p179
      $region26: #{tpu_custom_call.1} parent=5 // pred_check_branch
        %182 = sbr.rel (%p180) target = $region28
      $region27: #{tpu_custom_call.1} parent=5 // pred_region
        // Predicated region
        $region29: #{tpu_custom_call.1} parent=27 // pred_check
          %p183 = pneg %p34
        $region30: #{tpu_custom_call.1} parent=27 // pred_check_branch
          %185 = sbr.rel (%p183) target = $region32
        $region31: #{tpu_custom_call.1} parent=27 // pred_region
          %s186 = smul.u32 32, %s14
          %p187 = scmp.lt.s32.totalorder %s186, 63
          %s188 = scalar_select %p187, %s186, 63
          %s189 = smul.addr %s188, 8
          %s190 = scalar_lea.vmem %s0, %s189
          %s191 = smul.u32 32, %s14
        $region32: #{tpu_custom_call.1} parent=27 // pred_fallthru
          _
        // Predicated region
        $region33: #{tpu_custom_call.1} parent=27 // pred_check
          %p192 = pneg %p60
        $region34: #{tpu_custom_call.1} parent=27 // pred_check_branch
          %194 = sbr.rel (%p192) target = $region36
        $region35: #{tpu_custom_call.1} parent=27 // pred_region
          %s195 = smul.u32 4, %s14
          %p196 = scmp.lt.s32.totalorder %s195, 7
          %s197 = scalar_select %p196, %s195, 7
          %s198 = smul.addr %s197, 8
          %s199 = smul.addr %s198, 8
          %s200 = scalar_lea.vmem %s1, %s199
          %s201 = smul.u32 4, %s14
        $region36: #{tpu_custom_call.1} parent=27 // pred_fallthru
          _
      $region28: #{tpu_custom_call.1} parent=5 // pred_fallthru
        _
      %p202 = scmp.le.s32.totalorder 1, %s14
      %p203 = scmp.lt.s32.totalorder %s14, 3
      %p204 = pnand %p202, %p203
      %p205 = pneg %p204
      // Predicated region
      $region37: #{tpu_custom_call.1} parent=5 // pred_check
        _
      $region38: #{tpu_custom_call.1} parent=5 // pred_check_branch
        %207 = sbr.rel (%p204) target = $region40
      $region39: #{tpu_custom_call.1} parent=5 // pred_region
        %s208 = ssub.s32 %s14, 1
        %s209 = smul.u32 32, %s19
        %p210 = scmp.lt.s32.totalorder %s209, 63
        %s211 = scalar_select %p210, %s209, 63
        %s212 = smul.addr %s211, 8
        %s213 = scalar_lea.vmem %s0, %s212
        %p214 = pneg %p40
        %p215 = pneg %p37
        %s216 = smul.u32 4, %s19
        %p217 = scmp.lt.s32.totalorder %s216, 7
        %s218 = scalar_select %p217, %s216, 7
        %s219 = smul.addr %s218, 8
        %s220 = smul.addr %s219, 8
        %s221 = scalar_lea.vmem %s1, %s220
        %p222 = pneg %p66
        %p223 = pneg %p63
        %p224 = pneg %p87
        %p225 = pneg %p84
        %p226 = pneg %p108
        %p227 = pneg %p105
        %p228 = pneg %p129
        %p229 = pneg %p126
        %p230 = pneg %p155
        %p231 = pneg %p152
        %s232 = sand.u32 %s142, 1
        %s233 = scalar_lea.sflag [#allocation3], %s232
        %s234 = sand.u32 %s142, 1
        %s235 = smul.addr %s234, 64
        %s236 = scalar_lea.vmem [#allocation2], %s235
        %s237 = smul.u32 32, %s19
        %p238 = scmp.lt.s32.totalorder %s237, 63
        %s239 = scalar_select %p238, %s237, 63
        %s240 = smul.addr %s239, 8
        %s241 = scalar_lea.vmem %s0, %s240
        %s242 = smul.u32 32, %s19
        %s243 = smul.u32 4, %s19
        %p244 = scmp.lt.s32.totalorder %s243, 7
        %s245 = scalar_select %p244, %s243, 7
        %s246 = smul.addr %s245, 8
        %s247 = smul.addr %s246, 8
        %s248 = scalar_lea.vmem %s1, %s247
        %s249 = smul.u32 4, %s19
        %v250 = vld [vmem:[%s241] sm:$0xff]
        %v251 = vld [vmem:[%s241 + $0x8] sm:$0xff]
        %v252 = vld [vmem:[%s241 + $0x10] sm:$0xff]
        %v253 = vld [vmem:[%s241 + $0x18] sm:$0xff]
        %v254 = vld [vmem:[%s241 + $0x20] sm:$0xff]
        %v255 = vld [vmem:[%s241 + $0x28] sm:$0xff]
        %v256 = vld [vmem:[%s241 + $0x30] sm:$0xff]
        %v257 = vld [vmem:[%s241 + $0x38] sm:$0xff]
        %v258 = vld [vmem:[%s241 + $0x40] sm:$0xff]
        %v259 = vld [vmem:[%s241 + $0x48] sm:$0xff]
        %v260 = vld [vmem:[%s241 + $0x50] sm:$0xff]
        %v261 = vld [vmem:[%s241 + $0x58] sm:$0xff]
        %v262 = vld [vmem:[%s241 + $0x60] sm:$0xff]
        %v263 = vld [vmem:[%s241 + $0x68] sm:$0xff]
        %v264 = vld [vmem:[%s241 + $0x70] sm:$0xff]
        %v265 = vld [vmem:[%s241 + $0x78] sm:$0xff]
        %v266 = vld [vmem:[%s241 + $0x80] sm:$0xff]
        %v267 = vld [vmem:[%s241 + $0x88] sm:$0xff]
        %v268 = vld [vmem:[%s241 + $0x90] sm:$0xff]
        %v269 = vld [vmem:[%s241 + $0x98] sm:$0xff]
        %v270 = vld [vmem:[%s241 + $0xa0] sm:$0xff]
        %v271 = vld [vmem:[%s241 + $0xa8] sm:$0xff]
        %v272 = vld [vmem:[%s241 + $0xb0] sm:$0xff]
        %v273 = vld [vmem:[%s241 + $0xb8] sm:$0xff]
        %v274 = vld [vmem:[%s241 + $0xc0] sm:$0xff]
        %v275 = vld [vmem:[%s241 + $0xc8] sm:$0xff]
        %v276 = vld [vmem:[%s241 + $0xd0] sm:$0xff]
        %v277 = vld [vmem:[%s241 + $0xd8] sm:$0xff]
        %v278 = vld [vmem:[%s241 + $0xe0] sm:$0xff]
        %v279 = vld [vmem:[%s241 + $0xe8] sm:$0xff]
        %v280 = vld [vmem:[%s241 + $0xf0] sm:$0xff]
        %v281 = vld [vmem:[%s241 + $0xf8] sm:$0xff]
        %v282 = vld [vmem:[%s4] sm:$0x1]
        %v283 = vld [vmem:[%s4 + $0x1] sm:$0x1]
        %v284 = vld [vmem:[%s4 + $0x2] sm:$0x3]
        %v285 = vld [vmem:[%s4 + $0x4] sm:$0x1]
        %v286 = vld [vmem:[%s4 + $0x5] sm:$0x1]
        %v287 = vld [vmem:[%s2] sm:$0xff]
        %v288 = vld [vmem:[%s2 + $0x8] sm:$0xff]
        %v289 = vld [vmem:[%s2 + $0x10] sm:$0xff]
        %v290 = vld [vmem:[%s2 + $0x18] sm:$0xff]
        %v291 = vlaneseq
        %v292 = vshrl.u32 %v291, 7
        %v293 = vsub.s32 0, %v292
        %v294 = vrot.slane %v282, %v293
        %vm295 = vcmask 261120
        %v297 = vsel %vm295, %v250, 0
        %v300 = vsel %vm295, %v251, 0
        %v303 = vsel %vm295, %v252, 0
        %v306 = vsel %vm295, %v253, 0
        %v309 = vsel %vm295, %v254, 0
        %v312 = vsel %vm295, %v255, 0
        %v315 = vsel %vm295, %v256, 0
        %v318 = vsel %vm295, %v257, 0
        %v321 = vsel %vm295, %v258, 0
        %v324 = vsel %vm295, %v259, 0
        %v327 = vsel %vm295, %v260, 0
        %v330 = vsel %vm295, %v261, 0
        %v333 = vsel %vm295, %v262, 0
        %v336 = vsel %vm295, %v263, 0
        %v339 = vsel %vm295, %v264, 0
        %v342 = vsel %vm295, %v265, 0
        %v345 = vsel %vm295, %v266, 0
        %v348 = vsel %vm295, %v267, 0
        %v351 = vsel %vm295, %v268, 0
        %v354 = vsel %vm295, %v269, 0
        %v357 = vsel %vm295, %v270, 0
        %v360 = vsel %vm295, %v271, 0
        %v363 = vsel %vm295, %v272, 0
        %v366 = vsel %vm295, %v273, 0
        %v369 = vsel %vm295, %v274, 0
        %v372 = vsel %vm295, %v275, 0
        %v375 = vsel %vm295, %v276, 0
        %v378 = vsel %vm295, %v277, 0
        %v381 = vsel %vm295, %v278, 0
        %v384 = vsel %vm295, %v279, 0
        %v387 = vsel %vm295, %v280, 0
        %v390 = vsel %vm295, %v281, 0
        %392 = vmatprep.subr.mxu0 0.0
        %393 = vmatpush1.msra.mxu0 %v287
        %394 = vmatprep.subr.mxu0 0.0
        %395 = vmatpush1.msra.mxu0 %v288
        %396 = vmatprep.subr.mxu0 0.0
        %397 = vmatpush1.msra.mxu0 %v289
        %398 = vmatprep.subr.mxu0 0.0
        %399 = vmatpush1.msra.mxu0 %v290
        %400 = vmatprep.subr.mxu0 0.0
        %401 = vmatpush1.msra.mxu0 0.0
        %402 = vmatprep.subr.mxu0 0.0
        %403 = vmatpush1.msra.mxu0 0.0
        %404 = vmatprep.subr.mxu0 0.0
        %405 = vmatpush1.msra.mxu0 0.0
        %406 = vmatprep.subr.mxu0 0.0
        %407 = vmatpush1.msra.mxu0 0.0
        %408 = vmatprep.subr.mxu0 0.0
        %409 = vmatpush1.msra.mxu0 0.0
        %410 = vmatprep.subr.mxu0 0.0
        %411 = vmatpush1.msra.mxu0 0.0
        %412 = vmatprep.subr.mxu0 0.0
        %413 = vmatpush1.msra.mxu0 0.0
        %414 = vmatprep.subr.mxu0 0.0
        %415 = vmatpush1.msra.mxu0 0.0
        %416 = vmatprep.subr.mxu0 0.0
        %417 = vmatpush1.msra.mxu0 0.0
        %418 = vmatprep.subr.mxu0 0.0
        %419 = vmatpush1.msra.mxu0 0.0
        %420 = vmatprep.subr.mxu0 0.0
        %421 = vmatpush1.msra.mxu0 0.0
        %422 = vmatprep.subr.mxu0 0.0
        %423 = vmatpush1.msra.mxu0 0.0
        %424 = vmatprep.subr.mxu0 0.0
        %425 = vmatpush1.msra.mxu0 0.0
        %426 = vmatprep.subr.mxu0 0.0
        %427 = vmatpush1.msra.mxu0 0.0
        %428 = vmatprep.subr.mxu0 0.0
        %429 = vmatpush1.msra.mxu0 0.0
        %430 = vmatprep.subr.mxu0 0.0
        %431 = vmatpush1.msra.mxu0 0.0
        %432 = vmatprep.subr.mxu0 0.0
        %433 = vmatpush1.msra.mxu0 0.0
        %434 = vmatprep.subr.mxu0 0.0
        %435 = vmatpush1.msra.mxu0 0.0
        %436 = vmatprep.subr.mxu0 0.0
        %437 = vmatpush1.msra.mxu0 0.0
        %438 = vmatprep.subr.mxu0 0.0
        %439 = vmatpush1.msra.mxu0 0.0
        %440 = vmatprep.subr.mxu0 0.0
        %441 = vmatpush1.msra.mxu0 0.0
        %442 = vmatprep.subr.mxu0 0.0
        %443 = vmatpush1.msra.mxu0 0.0
        %444 = vmatprep.subr.mxu0 0.0
        %445 = vmatpush1.msra.mxu0 0.0
        %446 = vmatprep.subr.mxu0 0.0
        %447 = vmatpush1.msra.mxu0 0.0
        %448 = vmatprep.subr.mxu0 0.0
        %449 = vmatpush1.msra.mxu0 0.0
        %450 = vmatprep.subr.mxu0 0.0
        %451 = vmatpush1.msra.mxu0 0.0
        %452 = vmatprep.subr.mxu0 0.0
        %453 = vmatpush1.msra.mxu0 0.0
        %454 = vmatprep.subr.mxu0 0.0
        %455 = vmatpush1.msra.mxu0 0.0
        %456 = vmatprep.mubr.f32.mxu0 0.0
        %457 = vmatmul.mubr.f32.gmra.mrb[0].mxu0 %v297
        %v458 = vpop.f32.mrb[0].mxu0
        %v459 = vadd.f32 %v294, %v458
        %v460 = vpop.f32.mrb[0].mxu0
        %461 = vmatprep.mubr.f32.mxu0 0.0
        %462 = vmatmul.mubr.f32.gmra.mrb[0].mxu0 %v300
        %v463 = vpop.f32.mrb[0].mxu0
        %v464 = vadd.f32 %v294, %v463
        %v465 = vpop.f32.mrb[0].mxu0
        %466 = vmatprep.mubr.f32.mxu0 0.0
        %467 = vmatmul.mubr.f32.gmra.mrb[0].mxu0 %v303
        %v468 = vpop.f32.mrb[0].mxu0
        %v469 = vadd.f32 %v294, %v468
        %v470 = vpop.f32.mrb[0].mxu0
        %471 = vmatprep.mubr.f32.mxu0 0.0
        %472 = vmatmul.mubr.f32.gmra.mrb[0].mxu0 %v306
        %v473 = vpop.f32.mrb[0].mxu0
        %v474 = vadd.f32 %v294, %v473
        %v475 = vpop.f32.mrb[0].mxu0
        %476 = vmatprep.mubr.f32.mxu0 0.0
        %477 = vmatmul.mubr.f32.gmra.mrb[0].mxu0 %v309
        %v478 = vpop.f32.mrb[0].mxu0
        %v479 = vadd.f32 %v294, %v478
        %v480 = vpop.f32.mrb[0].mxu0
        %481 = vmatprep.mubr.f32.mxu0 0.0
        %482 = vmatmul.mubr.f32.gmra.mrb[0].mxu0 %v312
        %v483 = vpop.f32.mrb[0].mxu0
        %v484 = vadd.f32 %v294, %v483
        %v485 = vpop.f32.mrb[0].mxu0
        %486 = vmatprep.mubr.f32.mxu0 0.0
        %487 = vmatmul.mubr.f32.gmra.mrb[0].mxu0 %v315
        %v488 = vpop.f32.mrb[0].mxu0
        %v489 = vadd.f32 %v294, %v488
        %v490 = vpop.f32.mrb[0].mxu0
        %491 = vmatprep.mubr.f32.mxu0 0.0
        %492 = vmatmul.mubr.f32.gmra.mrb[0].mxu0 %v318
        %v493 = vpop.f32.mrb[0].mxu0
        %v494 = vadd.f32 %v294, %v493
        %v495 = vpop.f32.mrb[0].mxu0
        %496 = vmatprep.mubr.f32.mxu0 0.0
        %497 = vmatmul.mubr.f32.gmra.mrb[0].mxu0 %v321
        %v498 = vpop.f32.mrb[0].mxu0
        %v499 = vadd.f32 %v294, %v498
        %v500 = vpop.f32.mrb[0].mxu0
        %501 = vmatprep.mubr.f32.mxu0 0.0
        %502 = vmatmul.mubr.f32.gmra.mrb[0].mxu0 %v324
        %v503 = vpop.f32.mrb[0].mxu0
        %v504 = vadd.f32 %v294, %v503
        %v505 = vpop.f32.mrb[0].mxu0
        %506 = vmatprep.mubr.f32.mxu0 0.0
        %507 = vmatmul.mubr.f32.gmra.mrb[0].mxu0 %v327
        %v508 = vpop.f32.mrb[0].mxu0
        %v509 = vadd.f32 %v294, %v508
        %v510 = vpop.f32.mrb[0].mxu0
        %511 = vmatprep.mubr.f32.mxu0 0.0
        %512 = vmatmul.mubr.f32.gmra.mrb[0].mxu0 %v330
        %v513 = vpop.f32.mrb[0].mxu0
        %v514 = vadd.f32 %v294, %v513
        %v515 = vpop.f32.mrb[0].mxu0
        %516 = vmatprep.mubr.f32.mxu0 0.0
        %517 = vmatmul.mubr.f32.gmra.mrb[0].mxu0 %v333
        %v518 = vpop.f32.mrb[0].mxu0
        %v519 = vadd.f32 %v294, %v518
        %v520 = vpop.f32.mrb[0].mxu0
        %521 = vmatprep.mubr.f32.mxu0 0.0
        %522 = vmatmul.mubr.f32.gmra.mrb[0].mxu0 %v336
        %v523 = vpop.f32.mrb[0].mxu0
        %v524 = vadd.f32 %v294, %v523
        %v525 = vpop.f32.mrb[0].mxu0
        %526 = vmatprep.mubr.f32.mxu0 0.0
        %527 = vmatmul.mubr.f32.gmra.mrb[0].mxu0 %v339
        %v528 = vpop.f32.mrb[0].mxu0
        %v529 = vadd.f32 %v294, %v528
        %v530 = vpop.f32.mrb[0].mxu0
        %531 = vmatprep.mubr.f32.mxu0 0.0
        %532 = vmatmul.mubr.f32.gmra.mrb[0].mxu0 %v342
        %v533 = vpop.f32.mrb[0].mxu0
        %v534 = vadd.f32 %v294, %v533
        %v535 = vpop.f32.mrb[0].mxu0
        %536 = vmatprep.mubr.f32.mxu0 0.0
        %537 = vmatmul.mubr.f32.gmra.mrb[0].mxu0 %v345
        %v538 = vpop.f32.mrb[0].mxu0
        %v539 = vadd.f32 %v294, %v538
        %v540 = vpop.f32.mrb[0].mxu0
        %541 = vmatprep.mubr.f32.mxu0 0.0
        %542 = vmatmul.mubr.f32.gmra.mrb[0].mxu0 %v348
        %v543 = vpop.f32.mrb[0].mxu0
        %v544 = vadd.f32 %v294, %v543
        %v545 = vpop.f32.mrb[0].mxu0
        %546 = vmatprep.mubr.f32.mxu0 0.0
        %547 = vmatmul.mubr.f32.gmra.mrb[0].mxu0 %v351
        %v548 = vpop.f32.mrb[0].mxu0
        %v549 = vadd.f32 %v294, %v548
        %v550 = vpop.f32.mrb[0].mxu0
        %551 = vmatprep.mubr.f32.mxu0 0.0
        %552 = vmatmul.mubr.f32.gmra.mrb[0].mxu0 %v354
        %v553 = vpop.f32.mrb[0].mxu0
        %v554 = vadd.f32 %v294, %v553
        %v555 = vpop.f32.mrb[0].mxu0
        %556 = vmatprep.mubr.f32.mxu0 0.0
        %557 = vmatmul.mubr.f32.gmra.mrb[0].mxu0 %v357
        %v558 = vpop.f32.mrb[0].mxu0
        %v559 = vadd.f32 %v294, %v558
        %v560 = vpop.f32.mrb[0].mxu0
        %561 = vmatprep.mubr.f32.mxu0 0.0
        %562 = vmatmul.mubr.f32.gmra.mrb[0].mxu0 %v360
        %v563 = vpop.f32.mrb[0].mxu0
        %v564 = vadd.f32 %v294, %v563
        %v565 = vpop.f32.mrb[0].mxu0
        %566 = vmatprep.mubr.f32.mxu0 0.0
        %567 = vmatmul.mubr.f32.gmra.mrb[0].mxu0 %v363
        %v568 = vpop.f32.mrb[0].mxu0
        %v569 = vadd.f32 %v294, %v568
        %v570 = vpop.f32.mrb[0].mxu0
        %571 = vmatprep.mubr.f32.mxu0 0.0
        %572 = vmatmul.mubr.f32.gmra.mrb[0].mxu0 %v366
        %v573 = vpop.f32.mrb[0].mxu0
        %v574 = vadd.f32 %v294, %v573
        %v575 = vpop.f32.mrb[0].mxu0
        %576 = vmatprep.mubr.f32.mxu0 0.0
        %577 = vmatmul.mubr.f32.gmra.mrb[0].mxu0 %v369
        %v578 = vpop.f32.mrb[0].mxu0
        %v579 = vadd.f32 %v294, %v578
        %v580 = vpop.f32.mrb[0].mxu0
        %581 = vmatprep.mubr.f32.mxu0 0.0
        %582 = vmatmul.mubr.f32.gmra.mrb[0].mxu0 %v372
        %v583 = vpop.f32.mrb[0].mxu0
        %v584 = vadd.f32 %v294, %v583
        %v585 = vpop.f32.mrb[0].mxu0
        %586 = vmatprep.mubr.f32.mxu0 0.0
        %587 = vmatmul.mubr.f32.gmra.mrb[0].mxu0 %v375
        %v588 = vpop.f32.mrb[0].mxu0
        %v589 = vadd.f32 %v294, %v588
        %v590 = vpop.f32.mrb[0].mxu0
        %591 = vmatprep.mubr.f32.mxu0 0.0
        %592 = vmatmul.mubr.f32.gmra.mrb[0].mxu0 %v378
        %v593 = vpop.f32.mrb[0].mxu0
        %v594 = vadd.f32 %v294, %v593
        %v595 = vpop.f32.mrb[0].mxu0
        %596 = vmatprep.mubr.f32.mxu0 0.0
        %597 = vmatmul.mubr.f32.gmra.mrb[0].mxu0 %v381
        %v598 = vpop.f32.mrb[0].mxu0
        %v599 = vadd.f32 %v294, %v598
        %v600 = vpop.f32.mrb[0].mxu0
        %601 = vmatprep.mubr.f32.mxu0 0.0
        %602 = vmatmul.mubr.f32.gmra.mrb[0].mxu0 %v384
        %v603 = vpop.f32.mrb[0].mxu0
        %v604 = vadd.f32 %v294, %v603
        %v605 = vpop.f32.mrb[0].mxu0
        %606 = vmatprep.mubr.f32.mxu0 0.0
        %607 = vmatmul.mubr.f32.gmra.mrb[0].mxu0 %v387
        %v608 = vpop.f32.mrb[0].mxu0
        %v609 = vadd.f32 %v294, %v608
        %v610 = vpop.f32.mrb[0].mxu0
        %611 = vmatprep.mubr.f32.mxu0 0.0
        %612 = vmatmul.mubr.f32.gmra.mrb[0].mxu0 %v390
        %v613 = vpop.f32.mrb[0].mxu0
        %v614 = vadd.f32 %v294, %v613
        %v615 = vpop.f32.mrb[0].mxu0
        %616 = vdwg.mxu0
        %v617 = vld [vmem:[%s3] sm:$0xff]
        %v618 = vld [vmem:[%s3 + $0x8] sm:$0xff]
        %v619 = vld [vmem:[%s3 + $0x10] sm:$0xff]
        %v620 = vld [vmem:[%s3 + $0x18] sm:$0xff]
        %v621 = vlaneseq
        %v622 = vshrl.u32 %v621, 7
        %v623 = vsub.s32 0, %v622
        %v624 = vrot.slane %v283, %v623
        %625 = vmatprep.subr.mxu0 0.0
        %626 = vmatpush1.msra.mxu0 %v617
        %627 = vmatprep.subr.mxu0 0.0
        %628 = vmatpush1.msra.mxu0 %v618
        %629 = vmatprep.subr.mxu0 0.0
        %630 = vmatpush1.msra.mxu0 %v619
        %631 = vmatprep.subr.mxu0 0.0
        %632 = vmatpush1.msra.mxu0 %v620
        %633 = vmatprep.subr.mxu0 0.0
        %634 = vmatpush1.msra.mxu0 0.0
        %635 = vmatprep.subr.mxu0 0.0
        %636 = vmatpush1.msra.mxu0 0.0
        %637 = vmatprep.subr.mxu0 0.0
        %638 = vmatpush1.msra.mxu0 0.0
        %639 = vmatprep.subr.mxu0 0.0
        %640 = vmatpush1.msra.mxu0 0.0
        %641 = vmatprep.subr.mxu0 0.0
        %642 = vmatpush1.msra.mxu0 0.0
        %643 = vmatprep.subr.mxu0 0.0
        %644 = vmatpush1.msra.mxu0 0.0
        %645 = vmatprep.subr.mxu0 0.0
        %646 = vmatpush1.msra.mxu0 0.0
        %647 = vmatprep.subr.mxu0 0.0
        %648 = vmatpush1.msra.mxu0 0.0
        %649 = vmatprep.subr.mxu0 0.0
        %650 = vmatpush1.msra.mxu0 0.0
        %651 = vmatprep.subr.mxu0 0.0
        %652 = vmatpush1.msra.mxu0 0.0
        %653 = vmatprep.subr.mxu0 0.0
        %654 = vmatpush1.msra.mxu0 0.0
        %655 = vmatprep.subr.mxu0 0.0
        %656 = vmatpush1.msra.mxu0 0.0
        %657 = vmatprep.subr.mxu0 0.0
        %658 = vmatpush1.msra.mxu0 0.0
        %659 = vmatprep.subr.mxu0 0.0
        %660 = vmatpush1.msra.mxu0 0.0
        %661 = vmatprep.subr.mxu0 0.0
        %662 = vmatpush1.msra.mxu0 0.0
        %663 = vmatprep.subr.mxu0 0.0
        %664 = vmatpush1.msra.mxu0 0.0
        %665 = vmatprep.subr.mxu0 0.0
        %666 = vmatpush1.msra.mxu0 0.0
        %667 = vmatprep.subr.mxu0 0.0
        %668 = vmatpush1.msra.mxu0 0.0
        %669 = vmatprep.subr.mxu0 0.0
        %670 = vmatpush1.msra.mxu0 0.0
        %671 = vmatprep.subr.mxu0 0.0
        %672 = vmatpush1.msra.mxu0 0.0
        %673 = vmatprep.subr.mxu0 0.0
        %674 = vmatpush1.msra.mxu0 0.0
        %675 = vmatprep.subr.mxu0 0.0
        %676 = vmatpush1.msra.mxu0 0.0
        %677 = vmatprep.subr.mxu0 0.0
        %678 = vmatpush1.msra.mxu0 0.0
        %679 = vmatprep.subr.mxu0 0.0
        %680 = vmatpush1.msra.mxu0 0.0
        %681 = vmatprep.subr.mxu0 0.0
        %682 = vmatpush1.msra.mxu0 0.0
        %683 = vmatprep.subr.mxu0 0.0
        %684 = vmatpush1.msra.mxu0 0.0
        %685 = vmatprep.subr.mxu0 0.0
        %686 = vmatpush1.msra.mxu0 0.0
        %687 = vmatprep.subr.mxu0 0.0
        %688 = vmatpush1.msra.mxu0 0.0
        %689 = vmatprep.mubr.f32.mxu0 0.0
        %690 = vmatmul.mubr.f32.gmra.mrb[0].mxu0 %v297
        %v691 = vpop.f32.mrb[0].mxu0
        %v692 = vadd.f32 %v624, %v691
        %v693 = vpop.f32.mrb[0].mxu0
        %694 = vmatprep.mubr.f32.mxu0 0.0
        %695 = vmatmul.mubr.f32.gmra.mrb[0].mxu0 %v300
        %v696 = vpop.f32.mrb[0].mxu0
        %v697 = vadd.f32 %v624, %v696
        %v698 = vpop.f32.mrb[0].mxu0
        %699 = vmatprep.mubr.f32.mxu0 0.0
        %700 = vmatmul.mubr.f32.gmra.mrb[0].mxu0 %v303
        %v701 = vpop.f32.mrb[0].mxu0
        %v702 = vadd.f32 %v624, %v701
        %v703 = vpop.f32.mrb[0].mxu0
        %704 = vmatprep.mubr.f32.mxu0 0.0
        %705 = vmatmul.mubr.f32.gmra.mrb[0].mxu0 %v306
        %v706 = vpop.f32.mrb[0].mxu0
        %v707 = vadd.f32 %v624, %v706
        %v708 = vpop.f32.mrb[0].mxu0
        %709 = vmatprep.mubr.f32.mxu0 0.0
        %710 = vmatmul.mubr.f32.gmra.mrb[0].mxu0 %v309
        %v711 = vpop.f32.mrb[0].mxu0
        %v712 = vadd.f32 %v624, %v711
        %v713 = vpop.f32.mrb[0].mxu0
        %714 = vmatprep.mubr.f32.mxu0 0.0
        %715 = vmatmul.mubr.f32.gmra.mrb[0].mxu0 %v312
        %v716 = vpop.f32.mrb[0].mxu0
        %v717 = vadd.f32 %v624, %v716
        %v718 = vpop.f32.mrb[0].mxu0
        %719 = vmatprep.mubr.f32.mxu0 0.0
        %720 = vmatmul.mubr.f32.gmra.mrb[0].mxu0 %v315
        %v721 = vpop.f32.mrb[0].mxu0
        %v722 = vadd.f32 %v624, %v721
        %v723 = vpop.f32.mrb[0].mxu0
        %724 = vmatprep.mubr.f32.mxu0 0.0
        %725 = vmatmul.mubr.f32.gmra.mrb[0].mxu0 %v318
        %v726 = vpop.f32.mrb[0].mxu0
        %v727 = vadd.f32 %v624, %v726
        %v728 = vpop.f32.mrb[0].mxu0
        %729 = vmatprep.mubr.f32.mxu0 0.0
        %730 = vmatmul.mubr.f32.gmra.mrb[0].mxu0 %v321
        %v731 = vpop.f32.mrb[0].mxu0
        %v732 = vadd.f32 %v624, %v731
        %v733 = vpop.f32.mrb[0].mxu0
        %734 = vmatprep.mubr.f32.mxu0 0.0
        %735 = vmatmul.mubr.f32.gmra.mrb[0].mxu0 %v324
        %v736 = vpop.f32.mrb[0].mxu0
        %v737 = vadd.f32 %v624, %v736
        %v738 = vpop.f32.mrb[0].mxu0
        %739 = vmatprep.mubr.f32.mxu0 0.0
        %740 = vmatmul.mubr.f32.gmra.mrb[0].mxu0 %v327
        %v741 = vpop.f32.mrb[0].mxu0
        %v742 = vadd.f32 %v624, %v741
        %v743 = vpop.f32.mrb[0].mxu0
        %744 = vmatprep.mubr.f32.mxu0 0.0
        %745 = vmatmul.mubr.f32.gmra.mrb[0].mxu0 %v330
        %v746 = vpop.f32.mrb[0].mxu0
        %v747 = vadd.f32 %v624, %v746
        %v748 = vpop.f32.mrb[0].mxu0
        %749 = vmatprep.mubr.f32.mxu0 0.0
        %750 = vmatmul.mubr.f32.gmra.mrb[0].mxu0 %v333
        %v751 = vpop.f32.mrb[0].mxu0
        %v752 = vadd.f32 %v624, %v751
        %v753 = vpop.f32.mrb[0].mxu0
        %754 = vmatprep.mubr.f32.mxu0 0.0
        %755 = vmatmul.mubr.f32.gmra.mrb[0].mxu0 %v336
        %v756 = vpop.f32.mrb[0].mxu0
        %v757 = vadd.f32 %v624, %v756
        %v758 = vpop.f32.mrb[0].mxu0
        %759 = vmatprep.mubr.f32.mxu0 0.0
        %760 = vmatmul.mubr.f32.gmra.mrb[0].mxu0 %v339
        %v761 = vpop.f32.mrb[0].mxu0
        %v762 = vadd.f32 %v624, %v761
        %v763 = vpop.f32.mrb[0].mxu0
        %764 = vmatprep.mubr.f32.mxu0 0.0
        %765 = vmatmul.mubr.f32.gmra.mrb[0].mxu0 %v342
        %v766 = vpop.f32.mrb[0].mxu0
        %v767 = vadd.f32 %v624, %v766
        %v768 = vpop.f32.mrb[0].mxu0
        %769 = vmatprep.mubr.f32.mxu0 0.0
        %770 = vmatmul.mubr.f32.gmra.mrb[0].mxu0 %v345
        %v771 = vpop.f32.mrb[0].mxu0
        %v772 = vadd.f32 %v624, %v771
        %v773 = vpop.f32.mrb[0].mxu0
        %774 = vmatprep.mubr.f32.mxu0 0.0
        %775 = vmatmul.mubr.f32.gmra.mrb[0].mxu0 %v348
        %v776 = vpop.f32.mrb[0].mxu0
        %v777 = vadd.f32 %v624, %v776
        %v778 = vpop.f32.mrb[0].mxu0
        %779 = vmatprep.mubr.f32.mxu0 0.0
        %780 = vmatmul.mubr.f32.gmra.mrb[0].mxu0 %v351
        %v781 = vpop.f32.mrb[0].mxu0
        %v782 = vadd.f32 %v624, %v781
        %v783 = vpop.f32.mrb[0].mxu0
        %784 = vmatprep.mubr.f32.mxu0 0.0
        %785 = vmatmul.mubr.f32.gmra.mrb[0].mxu0 %v354
        %v786 = vpop.f32.mrb[0].mxu0
        %v787 = vadd.f32 %v624, %v786
        %v788 = vpop.f32.mrb[0].mxu0
        %789 = vmatprep.mubr.f32.mxu0 0.0
        %790 = vmatmul.mubr.f32.gmra.mrb[0].mxu0 %v357
        %v791 = vpop.f32.mrb[0].mxu0
        %v792 = vadd.f32 %v624, %v791
        %v793 = vpop.f32.mrb[0].mxu0
        %794 = vmatprep.mubr.f32.mxu0 0.0
        %795 = vmatmul.mubr.f32.gmra.mrb[0].mxu0 %v360
        %v796 = vpop.f32.mrb[0].mxu0
        %v797 = vadd.f32 %v624, %v796
        %v798 = vpop.f32.mrb[0].mxu0
        %799 = vmatprep.mubr.f32.mxu0 0.0
        %800 = vmatmul.mubr.f32.gmra.mrb[0].mxu0 %v363
        %v801 = vpop.f32.mrb[0].mxu0
        %v802 = vadd.f32 %v624, %v801
        %v803 = vpop.f32.mrb[0].mxu0
        %804 = vmatprep.mubr.f32.mxu0 0.0
        %805 = vmatmul.mubr.f32.gmra.mrb[0].mxu0 %v366
        %v806 = vpop.f32.mrb[0].mxu0
        %v807 = vadd.f32 %v624, %v806
        %v808 = vpop.f32.mrb[0].mxu0
        %809 = vmatprep.mubr.f32.mxu0 0.0
        %810 = vmatmul.mubr.f32.gmra.mrb[0].mxu0 %v369
        %v811 = vpop.f32.mrb[0].mxu0
        %v812 = vadd.f32 %v624, %v811
        %v813 = vpop.f32.mrb[0].mxu0
        %814 = vmatprep.mubr.f32.mxu0 0.0
        %815 = vmatmul.mubr.f32.gmra.mrb[0].mxu0 %v372
        %v816 = vpop.f32.mrb[0].mxu0
        %v817 = vadd.f32 %v624, %v816
        %v818 = vpop.f32.mrb[0].mxu0
        %819 = vmatprep.mubr.f32.mxu0 0.0
        %820 = vmatmul.mubr.f32.gmra.mrb[0].mxu0 %v375
        %v821 = vpop.f32.mrb[0].mxu0
        %v822 = vadd.f32 %v624, %v821
        %v823 = vpop.f32.mrb[0].mxu0
        %824 = vmatprep.mubr.f32.mxu0 0.0
        %825 = vmatmul.mubr.f32.gmra.mrb[0].mxu0 %v378
        %v826 = vpop.f32.mrb[0].mxu0
        %v827 = vadd.f32 %v624, %v826
        %v828 = vpop.f32.mrb[0].mxu0
        %829 = vmatprep.mubr.f32.mxu0 0.0
        %830 = vmatmul.mubr.f32.gmra.mrb[0].mxu0 %v381
        %v831 = vpop.f32.mrb[0].mxu0
        %v832 = vadd.f32 %v624, %v831
        %v833 = vpop.f32.mrb[0].mxu0
        %834 = vmatprep.mubr.f32.mxu0 0.0
        %835 = vmatmul.mubr.f32.gmra.mrb[0].mxu0 %v384
        %v836 = vpop.f32.mrb[0].mxu0
        %v837 = vadd.f32 %v624, %v836
        %v838 = vpop.f32.mrb[0].mxu0
        %839 = vmatprep.mubr.f32.mxu0 0.0
        %840 = vmatmul.mubr.f32.gmra.mrb[0].mxu0 %v387
        %v841 = vpop.f32.mrb[0].mxu0
        %v842 = vadd.f32 %v624, %v841
        %v843 = vpop.f32.mrb[0].mxu0
        %844 = vmatprep.mubr.f32.mxu0 0.0
        %845 = vmatmul.mubr.f32.gmra.mrb[0].mxu0 %v390
        %v846 = vpop.f32.mrb[0].mxu0
        %v847 = vadd.f32 %v624, %v846
        %v848 = vpop.f32.mrb[0].mxu0
        %849 = vdwg.mxu0
        %v851 = vsel %vm295, %v284, 0
        %v854 = vsel %vm295, %v459, 0
        %v857 = vsel %vm295, %v464, 0
        %v860 = vsel %vm295, %v469, 0
        %v863 = vsel %vm295, %v474, 0
        %v866 = vsel %vm295, %v479, 0
        %v869 = vsel %vm295, %v484, 0
        %v872 = vsel %vm295, %v489, 0
        %v875 = vsel %vm295, %v494, 0
        %v878 = vsel %vm295, %v499, 0
        %v881 = vsel %vm295, %v504, 0
        %v884 = vsel %vm295, %v509, 0
        %v887 = vsel %vm295, %v514, 0
        %v890 = vsel %vm295, %v519, 0
        %v893 = vsel %vm295, %v524, 0
        %v896 = vsel %vm295, %v529, 0
        %v899 = vsel %vm295, %v534, 0
        %v902 = vsel %vm295, %v539, 0
        %v905 = vsel %vm295, %v544, 0
        %v908 = vsel %vm295, %v549, 0
        %v911 = vsel %vm295, %v554, 0
        %v914 = vsel %vm295, %v559, 0
        %v917 = vsel %vm295, %v564, 0
        %v920 = vsel %vm295, %v569, 0
        %v923 = vsel %vm295, %v574, 0
        %v926 = vsel %vm295, %v579, 0
        %v929 = vsel %vm295, %v584, 0
        %v932 = vsel %vm295, %v589, 0
        %v935 = vsel %vm295, %v594, 0
        %v938 = vsel %vm295, %v599, 0
        %v941 = vsel %vm295, %v604, 0
        %v944 = vsel %vm295, %v609, 0
        %v947 = vsel %vm295, %v614, 0
        %949 = vmatprep.subr.mxu0 0.0
        %950 = vmatpush1.xpose.msra.mxu0 %v854
        %951 = vmatprep.subr.mxu0 0.0
        %952 = vmatpush1.xpose.msra.mxu0 %v857
        %953 = vmatprep.subr.mxu0 0.0
        %954 = vmatpush1.xpose.msra.mxu0 %v860
        %955 = vmatprep.subr.mxu0 0.0
        %956 = vmatpush1.xpose.msra.mxu0 %v863
        %957 = vmatprep.subr.mxu0 0.0
        %958 = vmatpush1.xpose.msra.mxu0 %v866
        %959 = vmatprep.subr.mxu0 0.0
        %960 = vmatpush1.xpose.msra.mxu0 %v869
        %961 = vmatprep.subr.mxu0 0.0
        %962 = vmatpush1.xpose.msra.mxu0 %v872
        %963 = vmatprep.subr.mxu0 0.0
        %964 = vmatpush1.xpose.msra.mxu0 %v875
        %965 = vmatprep.subr.mxu0 0.0
        %966 = vmatpush1.xpose.msra.mxu0 %v878
        %967 = vmatprep.subr.mxu0 0.0
        %968 = vmatpush1.xpose.msra.mxu0 %v881
        %969 = vmatprep.subr.mxu0 0.0
        %970 = vmatpush1.xpose.msra.mxu0 %v884
        %971 = vmatprep.subr.mxu0 0.0
        %972 = vmatpush1.xpose.msra.mxu0 %v887
        %973 = vmatprep.subr.mxu0 0.0
        %974 = vmatpush1.xpose.msra.mxu0 %v890
        %975 = vmatprep.subr.mxu0 0.0
        %976 = vmatpush1.xpose.msra.mxu0 %v893
        %977 = vmatprep.subr.mxu0 0.0
        %978 = vmatpush1.xpose.msra.mxu0 %v896
        %979 = vmatprep.subr.mxu0 0.0
        %980 = vmatpush1.xpose.msra.mxu0 %v899
        %981 = vmatprep.subr.mxu0 0.0
        %982 = vmatpush1.xpose.msra.mxu0 %v902
        %983 = vmatprep.subr.mxu0 0.0
        %984 = vmatpush1.xpose.msra.mxu0 %v905
        %985 = vmatprep.subr.mxu0 0.0
        %986 = vmatpush1.xpose.msra.mxu0 %v908
        %987 = vmatprep.subr.mxu0 0.0
        %988 = vmatpush1.xpose.msra.mxu0 %v911
        %989 = vmatprep.subr.mxu0 0.0
        %990 = vmatpush1.xpose.msra.mxu0 %v914
        %991 = vmatprep.subr.mxu0 0.0
        %992 = vmatpush1.xpose.msra.mxu0 %v917
        %993 = vmatprep.subr.mxu0 0.0
        %994 = vmatpush1.xpose.msra.mxu0 %v920
        %995 = vmatprep.subr.mxu0 0.0
        %996 = vmatpush1.xpose.msra.mxu0 %v923
        %997 = vmatprep.subr.mxu0 0.0
        %998 = vmatpush1.xpose.msra.mxu0 %v926
        %999 = vmatprep.subr.mxu0 0.0
        %1000 = vmatpush1.xpose.msra.mxu0 %v929
        %1001 = vmatprep.subr.mxu0 0.0
        %1002 = vmatpush1.xpose.msra.mxu0 %v932
        %1003 = vmatprep.subr.mxu0 0.0
        %1004 = vmatpush1.xpose.msra.mxu0 %v935
        %1005 = vmatprep.subr.mxu0 0.0
        %1006 = vmatpush1.xpose.msra.mxu0 %v938
        %1007 = vmatprep.subr.mxu0 0.0
        %1008 = vmatpush1.xpose.msra.mxu0 %v941
        %1009 = vmatprep.subr.mxu0 0.0
        %1010 = vmatpush1.xpose.msra.mxu0 %v944
        %1011 = vmatprep.subr.mxu0 0.0
        %1012 = vmatpush1.xpose.msra.mxu0 %v947
        %1013 = vmatprep.mubr.f32.mxu0 0.0
        %1014 = vmatmul.mubr.f32.gmra.mrb[0].mxu0 %v851
        %v1015 = vpop.f32.mrb[0].mxu0
        %v1016 = vadd.f32 0.0, %v1015
        %v1017 = vpop.f32.mrb[0].mxu0
        %v1018 = vadd.f32 0.0, %v1017
        %1019 = vdwg.mxu0
        %vm1020 = vcmp.gt.f32.partialorder %v1016, 0.0
        %vm1021 = vcmp.gt.f32.partialorder %v1018, 0.0
        %v1022 = vmul.f32 %v1016, 0.2
        %v1023 = vmul.f32 %v1018, 0.2
        %v1024 = vsel %vm1020, %v1016, %v1022
        %v1025 = vsel %vm1021, %v1018, %v1023
        %v1026 = vlaneseq
        %v1027 = vand.u32 %v1026, 127
        %vm1028 = vcmp.ge.s32.totalorder %v1027, 0
        %vm1029 = vcmp.lt.s32.totalorder %v1027, 16
        %vm1030 = vmand %vm1028, %vm1029
        %v1031 = vsel %vm1030, 1, 0
        %v1032 = vcvt.s32.f32 %v1031
        %vm1033 = vcmp.ge.s32.totalorder %v1027, 16
        %vm1034 = vcmp.lt.s32.totalorder %v1027, 32
        %vm1035 = vmand %vm1033, %vm1034
        %v1036 = vsel %vm1035, 1, 0
        %v1037 = vcvt.s32.f32 %v1036
        %v1038 = vld [vmem:[%s248] sm:$0xff]
        %v1039 = vld [vmem:[%s248 + $0x8] sm:$0xff]
        %v1040 = vld [vmem:[%s248 + $0x10] sm:$0xff]
        %v1041 = vld [vmem:[%s248 + $0x18] sm:$0xff]
        %v1042 = vld [vmem:[%s248 + $0x20] sm:$0xff]
        %v1043 = vld [vmem:[%s248 + $0x28] sm:$0xff]
        %v1044 = vld [vmem:[%s248 + $0x30] sm:$0xff]
        %v1045 = vld [vmem:[%s248 + $0x38] sm:$0xff]
        %vm1046 = vcmp.gt.f32.partialorder %v1038, 0.0
        %vm1047 = vcmp.gt.f32.partialorder %v1039, 0.0
        %vm1048 = vcmp.gt.f32.partialorder %v1040, 0.0
        %vm1049 = vcmp.gt.f32.partialorder %v1041, 0.0
        %vm1050 = vcmp.gt.f32.partialorder %v1042, 0.0
        %vm1051 = vcmp.gt.f32.partialorder %v1043, 0.0
        %vm1052 = vcmp.gt.f32.partialorder %v1044, 0.0
        %vm1053 = vcmp.gt.f32.partialorder %v1045, 0.0
        %v1054 = vlaneseq
        %v1055 = vshrl.u32 %v1054, 7
        %v1056 = vsub.s32 0, %v1055
        %v1057 = vrot.slane %v1024, %v1056
        %v1058 = vsel %vm1046, %v1057, -1e+30
        %v1059 = vsel %vm1047, %v1057, -1e+30
        %v1060 = vsel %vm1048, %v1057, -1e+30
        %v1061 = vsel %vm1049, %v1057, -1e+30
        %v1062 = vsel %vm1050, %v1057, -1e+30
        %v1063 = vsel %vm1051, %v1057, -1e+30
        %v1064 = vsel %vm1052, %v1057, -1e+30
        %v1065 = vsel %vm1053, %v1057, -1e+30
        %vm1066 = vcmask 523264
        %v1067 = vsel %vm1066, %v1058, -inf
        %1068 = vmax.xlane.f32.xlu0 %v1067
        %v1069 = vpop.xlane.xlu0 %1068
        %v1070 = vsel %vm1066, %v1059, -inf
        %1071 = vmax.xlane.f32.xlu0 %v1070
        %v1072 = vpop.xlane.xlu0 %1071
        %v1073 = vsel %vm1066, %v1060, -inf
        %1074 = vmax.xlane.f32.xlu0 %v1073
        %v1075 = vpop.xlane.xlu0 %1074
        %v1076 = vsel %vm1066, %v1061, -inf
        %1077 = vmax.xlane.f32.xlu0 %v1076
        %v1078 = vpop.xlane.xlu0 %1077
        %v1079 = vsel %vm1066, %v1062, -inf
        %1080 = vmax.xlane.f32.xlu0 %v1079
        %v1081 = vpop.xlane.xlu0 %1080
        %v1082 = vsel %vm1066, %v1063, -inf
        %1083 = vmax.xlane.f32.xlu0 %v1082
        %v1084 = vpop.xlane.xlu0 %1083
        %v1085 = vsel %vm1066, %v1064, -inf
        %1086 = vmax.xlane.f32.xlu0 %v1085
        %v1087 = vpop.xlane.xlu0 %1086
        %v1088 = vsel %vm1066, %v1065, -inf
        %1089 = vmax.xlane.f32.xlu0 %v1088
        %v1090 = vpop.xlane.xlu0 %1089
        %v1091 = vsub.f32 %v1057, %v1069
        %v1092 = vsub.f32 %v1057, %v1072
        %v1093 = vsub.f32 %v1057, %v1075
        %v1094 = vsub.f32 %v1057, %v1078
        %v1095 = vsub.f32 %v1057, %v1081
        %v1096 = vsub.f32 %v1057, %v1084
        %v1097 = vsub.f32 %v1057, %v1087
        %v1098 = vsub.f32 %v1057, %v1090
        %v1099 = vmul.f32 %v1091, 1.442695
        %v1100 = vpow.pop %v1099
        %v1101 = vmul.f32 %v1092, 1.442695
        %v1102 = vpow.pop %v1101
        %v1103 = vmul.f32 %v1093, 1.442695
        %v1104 = vpow.pop %v1103
        %v1105 = vmul.f32 %v1094, 1.442695
        %v1106 = vpow.pop %v1105
        %v1107 = vmul.f32 %v1095, 1.442695
        %v1108 = vpow.pop %v1107
        %v1109 = vmul.f32 %v1096, 1.442695
        %v1110 = vpow.pop %v1109
        %v1111 = vmul.f32 %v1097, 1.442695
        %v1112 = vpow.pop %v1111
        %v1113 = vmul.f32 %v1098, 1.442695
        %v1114 = vpow.pop %v1113
        %v1115 = vsel %vm1046, %v1100, 0.0
        %v1116 = vsel %vm1047, %v1102, 0.0
        %v1117 = vsel %vm1048, %v1104, 0.0
        %v1118 = vsel %vm1049, %v1106, 0.0
        %v1119 = vsel %vm1050, %v1108, 0.0
        %v1120 = vsel %vm1051, %v1110, 0.0
        %v1121 = vsel %vm1052, %v1112, 0.0
        %v1122 = vsel %vm1053, %v1114, 0.0
        %v1123 = vmul.f32 %v1115, %v1038
        %v1124 = vmul.f32 %v1116, %v1039
        %v1125 = vmul.f32 %v1117, %v1040
        %v1126 = vmul.f32 %v1118, %v1041
        %v1127 = vmul.f32 %v1119, %v1042
        %v1128 = vmul.f32 %v1120, %v1043
        %v1129 = vmul.f32 %v1121, %v1044
        %v1130 = vmul.f32 %v1122, %v1045
        %v1131 = vsel %vm1066, %v1123, 0.0
        %1132 = vadd.xlane.f32.xlu0 %v1131
        %v1133 = vpop.xlane.xlu0 %1132
        %v1134 = vsel %vm1066, %v1124, 0.0
        %1135 = vadd.xlane.f32.xlu0 %v1134
        %v1136 = vpop.xlane.xlu0 %1135
        %v1137 = vsel %vm1066, %v1125, 0.0
        %1138 = vadd.xlane.f32.xlu0 %v1137
        %v1139 = vpop.xlane.xlu0 %1138
        %v1140 = vsel %vm1066, %v1126, 0.0
        %1141 = vadd.xlane.f32.xlu0 %v1140
        %v1142 = vpop.xlane.xlu0 %1141
        %v1143 = vsel %vm1066, %v1127, 0.0
        %1144 = vadd.xlane.f32.xlu0 %v1143
        %v1145 = vpop.xlane.xlu0 %1144
        %v1146 = vsel %vm1066, %v1128, 0.0
        %1147 = vadd.xlane.f32.xlu0 %v1146
        %v1148 = vpop.xlane.xlu0 %1147
        %v1149 = vsel %vm1066, %v1129, 0.0
        %1150 = vadd.xlane.f32.xlu0 %v1149
        %v1151 = vpop.xlane.xlu0 %1150
        %v1152 = vsel %vm1066, %v1130, 0.0
        %1153 = vadd.xlane.f32.xlu0 %v1152
        %v1154 = vpop.xlane.xlu0 %1153
        %v1155 = vmax.f32 %v1133, 1e-10
        %v1156 = vmax.f32 %v1136, 1e-10
        %v1157 = vmax.f32 %v1139, 1e-10
        %v1158 = vmax.f32 %v1142, 1e-10
        %v1159 = vmax.f32 %v1145, 1e-10
        %v1160 = vmax.f32 %v1148, 1e-10
        %v1161 = vmax.f32 %v1151, 1e-10
        %v1162 = vmax.f32 %v1154, 1e-10
        %v1163 = vrcp.pop %v1155
        %v1164 = vrcp.pop %v1156
        %v1165 = vrcp.pop %v1157
        %v1166 = vrcp.pop %v1158
        %v1167 = vrcp.pop %v1159
        %v1168 = vrcp.pop %v1160
        %v1169 = vrcp.pop %v1161
        %v1170 = vrcp.pop %v1162
        %v1171 = vlaneseq
        %v1172 = vshrl.u32 %v1171, 7
        %v1173 = vsub.s32 1, %v1172
        %v1174 = vrot.slane %v1024, %v1173
        %v1175 = vsel %vm1046, %v1174, -1e+30
        %v1176 = vsel %vm1047, %v1174, -1e+30
        %v1177 = vsel %vm1048, %v1174, -1e+30
        %v1178 = vsel %vm1049, %v1174, -1e+30
        %v1179 = vsel %vm1050, %v1174, -1e+30
        %v1180 = vsel %vm1051, %v1174, -1e+30
        %v1181 = vsel %vm1052, %v1174, -1e+30
        %v1182 = vsel %vm1053, %v1174, -1e+30
        %v1183 = vsel %vm1066, %v1175, -inf
        %1184 = vmax.xlane.f32.xlu0 %v1183
        %v1185 = vpop.xlane.xlu0 %1184
        %v1186 = vsel %vm1066, %v1176, -inf
        %1187 = vmax.xlane.f32.xlu0 %v1186
        %v1188 = vpop.xlane.xlu0 %1187
        %v1189 = vsel %vm1066, %v1177, -inf
        %1190 = vmax.xlane.f32.xlu0 %v1189
        %v1191 = vpop.xlane.xlu0 %1190
        %v1192 = vsel %vm1066, %v1178, -inf
        %1193 = vmax.xlane.f32.xlu0 %v1192
        %v1194 = vpop.xlane.xlu0 %1193
        %v1195 = vsel %vm1066, %v1179, -inf
        %1196 = vmax.xlane.f32.xlu0 %v1195
        %v1197 = vpop.xlane.xlu0 %1196
        %v1198 = vsel %vm1066, %v1180, -inf
        %1199 = vmax.xlane.f32.xlu0 %v1198
        %v1200 = vpop.xlane.xlu0 %1199
        %v1201 = vsel %vm1066, %v1181, -inf
        %1202 = vmax.xlane.f32.xlu0 %v1201
        %v1203 = vpop.xlane.xlu0 %1202
        %v1204 = vsel %vm1066, %v1182, -inf
        %1205 = vmax.xlane.f32.xlu0 %v1204
        %v1206 = vpop.xlane.xlu0 %1205
        %v1207 = vsub.f32 %v1174, %v1185
        %v1208 = vsub.f32 %v1174, %v1188
        %v1209 = vsub.f32 %v1174, %v1191
        %v1210 = vsub.f32 %v1174, %v1194
        %v1211 = vsub.f32 %v1174, %v1197
        %v1212 = vsub.f32 %v1174, %v1200
        %v1213 = vsub.f32 %v1174, %v1203
        %v1214 = vsub.f32 %v1174, %v1206
        %v1215 = vmul.f32 %v1207, 1.442695
        %v1216 = vpow.pop %v1215
        %v1217 = vmul.f32 %v1208, 1.442695
        %v1218 = vpow.pop %v1217
        %v1219 = vmul.f32 %v1209, 1.442695
        %v1220 = vpow.pop %v1219
        %v1221 = vmul.f32 %v1210, 1.442695
        %v1222 = vpow.pop %v1221
        %v1223 = vmul.f32 %v1211, 1.442695
        %v1224 = vpow.pop %v1223
        %v1225 = vmul.f32 %v1212, 1.442695
        %v1226 = vpow.pop %v1225
        %v1227 = vmul.f32 %v1213, 1.442695
        %v1228 = vpow.pop %v1227
        %v1229 = vmul.f32 %v1214, 1.442695
        %v1230 = vpow.pop %v1229
        %v1231 = vsel %vm1046, %v1216, 0.0
        %v1232 = vsel %vm1047, %v1218, 0.0
        %v1233 = vsel %vm1048, %v1220, 0.0
        %v1234 = vsel %vm1049, %v1222, 0.0
        %v1235 = vsel %vm1050, %v1224, 0.0
        %v1236 = vsel %vm1051, %v1226, 0.0
        %v1237 = vsel %vm1052, %v1228, 0.0
        %v1238 = vsel %vm1053, %v1230, 0.0
        %v1239 = vmul.f32 %v1231, %v1038
        %v1240 = vmul.f32 %v1232, %v1039
        %v1241 = vmul.f32 %v1233, %v1040
        %v1242 = vmul.f32 %v1234, %v1041
        %v1243 = vmul.f32 %v1235, %v1042
        %v1244 = vmul.f32 %v1236, %v1043
        %v1245 = vmul.f32 %v1237, %v1044
        %v1246 = vmul.f32 %v1238, %v1045
        %v1247 = vsel %vm1066, %v1239, 0.0
        %1248 = vadd.xlane.f32.xlu0 %v1247
        %v1249 = vpop.xlane.xlu0 %1248
        %v1250 = vsel %vm1066, %v1240, 0.0
        %1251 = vadd.xlane.f32.xlu0 %v1250
        %v1252 = vpop.xlane.xlu0 %1251
        %v1253 = vsel %vm1066, %v1241, 0.0
        %1254 = vadd.xlane.f32.xlu0 %v1253
        %v1255 = vpop.xlane.xlu0 %1254
        %v1256 = vsel %vm1066, %v1242, 0.0
        %1257 = vadd.xlane.f32.xlu0 %v1256
        %v1258 = vpop.xlane.xlu0 %1257
        %v1259 = vsel %vm1066, %v1243, 0.0
        %1260 = vadd.xlane.f32.xlu0 %v1259
        %v1261 = vpop.xlane.xlu0 %1260
        %v1262 = vsel %vm1066, %v1244, 0.0
        %1263 = vadd.xlane.f32.xlu0 %v1262
        %v1264 = vpop.xlane.xlu0 %1263
        %v1265 = vsel %vm1066, %v1245, 0.0
        %1266 = vadd.xlane.f32.xlu0 %v1265
        %v1267 = vpop.xlane.xlu0 %1266
        %v1268 = vsel %vm1066, %v1246, 0.0
        %1269 = vadd.xlane.f32.xlu0 %v1268
        %v1270 = vpop.xlane.xlu0 %1269
        %v1271 = vmax.f32 %v1249, 1e-10
        %v1272 = vmax.f32 %v1252, 1e-10
        %v1273 = vmax.f32 %v1255, 1e-10
        %v1274 = vmax.f32 %v1258, 1e-10
        %v1275 = vmax.f32 %v1261, 1e-10
        %v1276 = vmax.f32 %v1264, 1e-10
        %v1277 = vmax.f32 %v1267, 1e-10
        %v1278 = vmax.f32 %v1270, 1e-10
        %v1279 = vrcp.pop %v1271
        %v1280 = vrcp.pop %v1272
        %v1281 = vrcp.pop %v1273
        %v1282 = vrcp.pop %v1274
        %v1283 = vrcp.pop %v1275
        %v1284 = vrcp.pop %v1276
        %v1285 = vrcp.pop %v1277
        %v1286 = vrcp.pop %v1278
        %1295 = vrot.lane.b32.xlu0 %v1239, 64
        %v1296 = vpop.permute.xlu0 %1295
        %1297 = vrot.lane.b32.xlu0 %v1240, 64
        %v1298 = vpop.permute.xlu0 %1297
        %1299 = vrot.lane.b32.xlu0 %v1241, 64
        %v1300 = vpop.permute.xlu0 %1299
        %1301 = vrot.lane.b32.xlu0 %v1242, 64
        %v1302 = vpop.permute.xlu0 %1301
        %1303 = vrot.lane.b32.xlu0 %v1243, 64
        %v1304 = vpop.permute.xlu0 %1303
        %1305 = vrot.lane.b32.xlu0 %v1244, 64
        %v1306 = vpop.permute.xlu0 %1305
        %1307 = vrot.lane.b32.xlu0 %v1245, 64
        %v1308 = vpop.permute.xlu0 %1307
        %1309 = vrot.lane.b32.xlu0 %v1246, 64
        %v1310 = vpop.permute.xlu0 %1309
        %v1319 = vsel %vm1066, %v1123, %v1296
        %v1320 = vsel %vm1066, %v1124, %v1298
        %v1321 = vsel %vm1066, %v1125, %v1300
        %v1322 = vsel %vm1066, %v1126, %v1302
        %v1323 = vsel %vm1066, %v1127, %v1304
        %v1324 = vsel %vm1066, %v1128, %v1306
        %v1325 = vsel %vm1066, %v1129, %v1308
        %v1326 = vsel %vm1066, %v1130, %v1310
        %v1327 = vmul.f32 %v459, %v1032
        %v1328 = vmul.f32 %v464, %v1032
        %v1329 = vmul.f32 %v469, %v1032
        %v1330 = vmul.f32 %v474, %v1032
        %v1331 = vmul.f32 %v479, %v1032
        %v1332 = vmul.f32 %v484, %v1032
        %v1333 = vmul.f32 %v489, %v1032
        %v1334 = vmul.f32 %v494, %v1032
        %v1335 = vmul.f32 %v459, %v1037
        %v1336 = vmul.f32 %v464, %v1037
        %v1337 = vmul.f32 %v469, %v1037
        %v1338 = vmul.f32 %v474, %v1037
        %v1339 = vmul.f32 %v479, %v1037
        %v1340 = vmul.f32 %v484, %v1037
        %v1341 = vmul.f32 %v489, %v1037
        %v1342 = vmul.f32 %v494, %v1037
        %1343 = vmatprep.subr.mxu0 0.0
        %1344 = vmatpush1.msra.mxu0 %v1327
        %1345 = vmatprep.subr.mxu0 0.0
        %1346 = vmatpush1.msra.mxu0 %v1328
        %1347 = vmatprep.subr.mxu0 0.0
        %1348 = vmatpush1.msra.mxu0 %v1329
        %1349 = vmatprep.subr.mxu0 0.0
        %1350 = vmatpush1.msra.mxu0 %v1330
        %1351 = vmatprep.subr.mxu0 0.0
        %1352 = vmatpush1.msra.mxu0 %v1331
        %1353 = vmatprep.subr.mxu0 0.0
        %1354 = vmatpush1.msra.mxu0 %v1332
        %1355 = vmatprep.subr.mxu0 0.0
        %1356 = vmatpush1.msra.mxu0 %v1333
        %1357 = vmatprep.subr.mxu0 0.0
        %1358 = vmatpush1.msra.mxu0 %v1334
        %1359 = vmatprep.subr.mxu0 0.0
        %1360 = vmatpush1.msra.mxu0 %v1335
        %1361 = vmatprep.subr.mxu0 0.0
        %1362 = vmatpush1.msra.mxu0 %v1336
        %1363 = vmatprep.subr.mxu0 0.0
        %1364 = vmatpush1.msra.mxu0 %v1337
        %1365 = vmatprep.subr.mxu0 0.0
        %1366 = vmatpush1.msra.mxu0 %v1338
        %1367 = vmatprep.subr.mxu0 0.0
        %1368 = vmatpush1.msra.mxu0 %v1339
        %1369 = vmatprep.subr.mxu0 0.0
        %1370 = vmatpush1.msra.mxu0 %v1340
        %1371 = vmatprep.subr.mxu0 0.0
        %1372 = vmatpush1.msra.mxu0 %v1341
        %1373 = vmatprep.subr.mxu0 0.0
        %1374 = vmatpush1.msra.mxu0 %v1342
        %1375 = vmatprep.subr.mxu0 0.0
        %1376 = vmatpush1.msra.mxu0 0.0
        %1377 = vmatprep.subr.mxu0 0.0
        %1378 = vmatpush1.msra.mxu0 0.0
        %1379 = vmatprep.subr.mxu0 0.0
        %1380 = vmatpush1.msra.mxu0 0.0
        %1381 = vmatprep.subr.mxu0 0.0
        %1382 = vmatpush1.msra.mxu0 0.0
        %1383 = vmatprep.subr.mxu0 0.0
        %1384 = vmatpush1.msra.mxu0 0.0
        %1385 = vmatprep.subr.mxu0 0.0
        %1386 = vmatpush1.msra.mxu0 0.0
        %1387 = vmatprep.subr.mxu0 0.0
        %1388 = vmatpush1.msra.mxu0 0.0
        %1389 = vmatprep.subr.mxu0 0.0
        %1390 = vmatpush1.msra.mxu0 0.0
        %1391 = vmatprep.subr.mxu0 0.0
        %1392 = vmatpush1.msra.mxu0 0.0
        %1393 = vmatprep.subr.mxu0 0.0
        %1394 = vmatpush1.msra.mxu0 0.0
        %1395 = vmatprep.subr.mxu0 0.0
        %1396 = vmatpush1.msra.mxu0 0.0
        %1397 = vmatprep.subr.mxu0 0.0
        %1398 = vmatpush1.msra.mxu0 0.0
        %1399 = vmatprep.subr.mxu0 0.0
        %1400 = vmatpush1.msra.mxu0 0.0
        %1401 = vmatprep.subr.mxu0 0.0
        %1402 = vmatpush1.msra.mxu0 0.0
        %1403 = vmatprep.subr.mxu0 0.0
        %1404 = vmatpush1.msra.mxu0 0.0
        %1405 = vmatprep.subr.mxu0 0.0
        %1406 = vmatpush1.msra.mxu0 0.0
        %1407 = vmatprep.mubr.f32.mxu0 0.0
        %1408 = vmatmul.mubr.f32.gmra.mrb[0].mxu0 %v1319
        %v1409 = vpop.f32.mrb[0].mxu0
        %v1410 = vadd.f32 0.0, %v1409
        %v1411 = vpop.f32.mrb[0].mxu0
        %1412 = vmatprep.mubr.f32.mxu0 0.0
        %1413 = vmatmul.mubr.f32.gmra.mrb[0].mxu0 %v1320
        %v1414 = vpop.f32.mrb[0].mxu0
        %v1415 = vadd.f32 0.0, %v1414
        %v1416 = vpop.f32.mrb[0].mxu0
        %1417 = vmatprep.mubr.f32.mxu0 0.0
        %1418 = vmatmul.mubr.f32.gmra.mrb[0].mxu0 %v1321
        %v1419 = vpop.f32.mrb[0].mxu0
        %v1420 = vadd.f32 0.0, %v1419
        %v1421 = vpop.f32.mrb[0].mxu0
        %1422 = vmatprep.mubr.f32.mxu0 0.0
        %1423 = vmatmul.mubr.f32.gmra.mrb[0].mxu0 %v1322
        %v1424 = vpop.f32.mrb[0].mxu0
        %v1425 = vadd.f32 0.0, %v1424
        %v1426 = vpop.f32.mrb[0].mxu0
        %1427 = vmatprep.mubr.f32.mxu0 0.0
        %1428 = vmatmul.mubr.f32.gmra.mrb[0].mxu0 %v1323
        %v1429 = vpop.f32.mrb[0].mxu0
        %v1430 = vadd.f32 0.0, %v1429
        %v1431 = vpop.f32.mrb[0].mxu0
        %1432 = vmatprep.mubr.f32.mxu0 0.0
        %1433 = vmatmul.mubr.f32.gmra.mrb[0].mxu0 %v1324
        %v1434 = vpop.f32.mrb[0].mxu0
        %v1435 = vadd.f32 0.0, %v1434
        %v1436 = vpop.f32.mrb[0].mxu0
        %1437 = vmatprep.mubr.f32.mxu0 0.0
        %1438 = vmatmul.mubr.f32.gmra.mrb[0].mxu0 %v1325
        %v1439 = vpop.f32.mrb[0].mxu0
        %v1440 = vadd.f32 0.0, %v1439
        %v1441 = vpop.f32.mrb[0].mxu0
        %1442 = vmatprep.mubr.f32.mxu0 0.0
        %1443 = vmatmul.mubr.f32.gmra.mrb[0].mxu0 %v1326
        %v1444 = vpop.f32.mrb[0].mxu0
        %v1445 = vadd.f32 0.0, %v1444
        %v1446 = vpop.f32.mrb[0].mxu0
        %1447 = vdwg.mxu0
        %v1448 = vmul.f32 %v1032, %v1163
        %v1449 = vmul.f32 %v1032, %v1164
        %v1450 = vmul.f32 %v1032, %v1165
        %v1451 = vmul.f32 %v1032, %v1166
        %v1452 = vmul.f32 %v1032, %v1167
        %v1453 = vmul.f32 %v1032, %v1168
        %v1454 = vmul.f32 %v1032, %v1169
        %v1455 = vmul.f32 %v1032, %v1170
        %v1456 = vmul.f32 %v1037, %v1279
        %v1457 = vmul.f32 %v1037, %v1280
        %v1458 = vmul.f32 %v1037, %v1281
        %v1459 = vmul.f32 %v1037, %v1282
        %v1460 = vmul.f32 %v1037, %v1283
        %v1461 = vmul.f32 %v1037, %v1284
        %v1462 = vmul.f32 %v1037, %v1285
        %v1463 = vmul.f32 %v1037, %v1286
        %v1464 = vadd.f32 %v1448, %v1456
        %v1465 = vadd.f32 %v1449, %v1457
        %v1466 = vadd.f32 %v1450, %v1458
        %v1467 = vadd.f32 %v1451, %v1459
        %v1468 = vadd.f32 %v1452, %v1460
        %v1469 = vadd.f32 %v1453, %v1461
        %v1470 = vadd.f32 %v1454, %v1462
        %v1471 = vadd.f32 %v1455, %v1463
        %v1472 = vmul.f32 %v1410, %v1464
        %v1473 = vmul.f32 %v1415, %v1465
        %v1474 = vmul.f32 %v1420, %v1466
        %v1475 = vmul.f32 %v1425, %v1467
        %v1476 = vmul.f32 %v1430, %v1468
        %v1477 = vmul.f32 %v1435, %v1469
        %v1478 = vmul.f32 %v1440, %v1470
        %v1479 = vmul.f32 %v1445, %v1471
        %v1480 = vadd.f32 %v1472, %v692
        %v1481 = vadd.f32 %v1473, %v697
        %v1482 = vadd.f32 %v1474, %v702
        %v1483 = vadd.f32 %v1475, %v707
        %v1484 = vadd.f32 %v1476, %v712
        %v1485 = vadd.f32 %v1477, %v717
        %v1486 = vadd.f32 %v1478, %v722
        %v1487 = vadd.f32 %v1479, %v727
        %v1488 = vmax.f32 %v1480, 0.0
        %v1489 = vmax.f32 %v1481, 0.0
        %v1490 = vmax.f32 %v1482, 0.0
        %v1491 = vmax.f32 %v1483, 0.0
        %v1492 = vmax.f32 %v1484, 0.0
        %v1493 = vmax.f32 %v1485, 0.0
        %v1494 = vmax.f32 %v1486, 0.0
        %v1495 = vmax.f32 %v1487, 0.0
        %v1496 = vsel %vm295, %v1488, 0.0
        %1497 = vadd.xlane.f32.xlu0 %v1496
        %v1498 = vpop.xlane.xlu0 %1497
        %v1499 = vsel %vm295, %v1489, 0.0
        %1500 = vadd.xlane.f32.xlu0 %v1499
        %v1501 = vpop.xlane.xlu0 %1500
        %v1502 = vsel %vm295, %v1490, 0.0
        %1503 = vadd.xlane.f32.xlu0 %v1502
        %v1504 = vpop.xlane.xlu0 %1503
        %v1505 = vsel %vm295, %v1491, 0.0
        %1506 = vadd.xlane.f32.xlu0 %v1505
        %v1507 = vpop.xlane.xlu0 %1506
        %v1508 = vsel %vm295, %v1492, 0.0
        %1509 = vadd.xlane.f32.xlu0 %v1508
        %v1510 = vpop.xlane.xlu0 %1509
        %v1511 = vsel %vm295, %v1493, 0.0
        %1512 = vadd.xlane.f32.xlu0 %v1511
        %v1513 = vpop.xlane.xlu0 %1512
        %v1514 = vsel %vm295, %v1494, 0.0
        %1515 = vadd.xlane.f32.xlu0 %v1514
        %v1516 = vpop.xlane.xlu0 %1515
        %v1517 = vsel %vm295, %v1495, 0.0
        %1518 = vadd.xlane.f32.xlu0 %v1517
        %v1519 = vpop.xlane.xlu0 %1518
        %v1520 = vrcp.pop 32.0
        %v1521 = vmul.f32 %v1498, %v1520
        %v1522 = vmul.f32 %v1501, %v1520
        %v1523 = vmul.f32 %v1504, %v1520
        %v1524 = vmul.f32 %v1507, %v1520
        %v1525 = vmul.f32 %v1510, %v1520
        %v1526 = vmul.f32 %v1513, %v1520
        %v1527 = vmul.f32 %v1516, %v1520
        %v1528 = vmul.f32 %v1519, %v1520
        %v1529 = vsub.f32 %v1488, %v1521
        %v1530 = vsub.f32 %v1489, %v1522
        %v1531 = vsub.f32 %v1490, %v1523
        %v1532 = vsub.f32 %v1491, %v1524
        %v1533 = vsub.f32 %v1492, %v1525
        %v1534 = vsub.f32 %v1493, %v1526
        %v1535 = vsub.f32 %v1494, %v1527
        %v1536 = vsub.f32 %v1495, %v1528
        %v1537 = vmul.f32 %v1529, %v1529
        %v1538 = vmul.f32 %v1530, %v1530
        %v1539 = vmul.f32 %v1531, %v1531
        %v1540 = vmul.f32 %v1532, %v1532
        %v1541 = vmul.f32 %v1533, %v1533
        %v1542 = vmul.f32 %v1534, %v1534
        %v1543 = vmul.f32 %v1535, %v1535
        %v1544 = vmul.f32 %v1536, %v1536
        %v1545 = vsel %vm295, %v1537, 0.0
        %1546 = vadd.xlane.f32.xlu0 %v1545
        %v1547 = vpop.xlane.xlu0 %1546
        %v1548 = vsel %vm295, %v1538, 0.0
        %1549 = vadd.xlane.f32.xlu0 %v1548
        %v1550 = vpop.xlane.xlu0 %1549
        %v1551 = vsel %vm295, %v1539, 0.0
        %1552 = vadd.xlane.f32.xlu0 %v1551
        %v1553 = vpop.xlane.xlu0 %1552
        %v1554 = vsel %vm295, %v1540, 0.0
        %1555 = vadd.xlane.f32.xlu0 %v1554
        %v1556 = vpop.xlane.xlu0 %1555
        %v1557 = vsel %vm295, %v1541, 0.0
        %1558 = vadd.xlane.f32.xlu0 %v1557
        %v1559 = vpop.xlane.xlu0 %1558
        %v1560 = vsel %vm295, %v1542, 0.0
        %1561 = vadd.xlane.f32.xlu0 %v1560
        %v1562 = vpop.xlane.xlu0 %1561
        %v1563 = vsel %vm295, %v1543, 0.0
        %1564 = vadd.xlane.f32.xlu0 %v1563
        %v1565 = vpop.xlane.xlu0 %1564
        %v1566 = vsel %vm295, %v1544, 0.0
        %1567 = vadd.xlane.f32.xlu0 %v1566
        %v1568 = vpop.xlane.xlu0 %1567
        %v1569 = vmul.f32 %v1547, %v1520
        %v1570 = vmul.f32 %v1550, %v1520
        %v1571 = vmul.f32 %v1553, %v1520
        %v1572 = vmul.f32 %v1556, %v1520
        %v1573 = vmul.f32 %v1559, %v1520
        %v1574 = vmul.f32 %v1562, %v1520
        %v1575 = vmul.f32 %v1565, %v1520
        %v1576 = vmul.f32 %v1568, %v1520
        %v1577 = vadd.f32 %v1569, 1e-09
        %v1578 = vadd.f32 %v1570, 1e-09
        %v1579 = vadd.f32 %v1571, 1e-09
        %v1580 = vadd.f32 %v1572, 1e-09
        %v1581 = vadd.f32 %v1573, 1e-09
        %v1582 = vadd.f32 %v1574, 1e-09
        %v1583 = vadd.f32 %v1575, 1e-09
        %v1584 = vadd.f32 %v1576, 1e-09
        %v1585 = vlaneseq
        %v1586 = vshrl.u32 %v1585, 7
        %v1587 = vsub.s32 0, %v1586
        %v1588 = vrot.slane %v285, %v1587
        %v1589 = vmul.f32 %v1529, %v1588
        %v1590 = vmul.f32 %v1530, %v1588
        %v1591 = vmul.f32 %v1531, %v1588
        %v1592 = vmul.f32 %v1532, %v1588
        %v1593 = vmul.f32 %v1533, %v1588
        %v1594 = vmul.f32 %v1534, %v1588
        %v1595 = vmul.f32 %v1535, %v1588
        %v1596 = vmul.f32 %v1536, %v1588
        %v1597 = vrsqrt.pop %v1577
        %v1598 = vrsqrt.pop %v1578
        %v1599 = vrsqrt.pop %v1579
        %v1600 = vrsqrt.pop %v1580
        %v1601 = vrsqrt.pop %v1581
        %v1602 = vrsqrt.pop %v1582
        %v1603 = vrsqrt.pop %v1583
        %v1604 = vrsqrt.pop %v1584
        %v1605 = vmul.f32 %v1589, %v1597
        %v1606 = vmul.f32 %v1590, %v1598
        %v1607 = vmul.f32 %v1591, %v1599
        %v1608 = vmul.f32 %v1592, %v1600
        %v1609 = vmul.f32 %v1593, %v1601
        %v1610 = vmul.f32 %v1594, %v1602
        %v1611 = vmul.f32 %v1595, %v1603
        %v1612 = vmul.f32 %v1596, %v1604
        %v1613 = vlaneseq
        %v1614 = vshrl.u32 %v1613, 7
        %v1615 = vsub.s32 0, %v1614
        %v1616 = vrot.slane %v286, %v1615
        %v1617 = vadd.f32 %v1605, %v1616
        %v1618 = vadd.f32 %v1606, %v1616
        %v1619 = vadd.f32 %v1607, %v1616
        %v1620 = vadd.f32 %v1608, %v1616
        %v1621 = vadd.f32 %v1609, %v1616
        %v1622 = vadd.f32 %v1610, %v1616
        %v1623 = vadd.f32 %v1611, %v1616
        %v1624 = vadd.f32 %v1612, %v1616
        %s1625 = scalar_lea.vmem %s248, 64
        %v1626 = vld [vmem:[%s1625] sm:$0xff]
        %v1627 = vld [vmem:[%s1625 + $0x8] sm:$0xff]
        %v1628 = vld [vmem:[%s1625 + $0x10] sm:$0xff]
        %v1629 = vld [vmem:[%s1625 + $0x18] sm:$0xff]
        %v1630 = vld [vmem:[%s1625 + $0x20] sm:$0xff]
        %v1631 = vld [vmem:[%s1625 + $0x28] sm:$0xff]
        %v1632 = vld [vmem:[%s1625 + $0x30] sm:$0xff]
        %v1633 = vld [vmem:[%s1625 + $0x38] sm:$0xff]
        %vm1634 = vcmp.gt.f32.partialorder %v1626, 0.0
        %vm1635 = vcmp.gt.f32.partialorder %v1627, 0.0
        %vm1636 = vcmp.gt.f32.partialorder %v1628, 0.0
        %vm1637 = vcmp.gt.f32.partialorder %v1629, 0.0
        %vm1638 = vcmp.gt.f32.partialorder %v1630, 0.0
        %vm1639 = vcmp.gt.f32.partialorder %v1631, 0.0
        %vm1640 = vcmp.gt.f32.partialorder %v1632, 0.0
        %vm1641 = vcmp.gt.f32.partialorder %v1633, 0.0
        %1643 = vrot.lane.b32.xlu0 %v1057, 64
        %v1644 = vpop.permute.xlu0 %1643
        %v1646 = vsel %vm1634, %v1644, -1e+30
        %v1647 = vsel %vm1635, %v1644, -1e+30
        %v1648 = vsel %vm1636, %v1644, -1e+30
        %v1649 = vsel %vm1637, %v1644, -1e+30
        %v1650 = vsel %vm1638, %v1644, -1e+30
        %v1651 = vsel %vm1639, %v1644, -1e+30
        %v1652 = vsel %vm1640, %v1644, -1e+30
        %v1653 = vsel %vm1641, %v1644, -1e+30
        %v1654 = vsel %vm1066, %v1646, -inf
        %1655 = vmax.xlane.f32.xlu0 %v1654
        %v1656 = vpop.xlane.xlu0 %1655
        %v1657 = vsel %vm1066, %v1647, -inf
        %1658 = vmax.xlane.f32.xlu0 %v1657
        %v1659 = vpop.xlane.xlu0 %1658
        %v1660 = vsel %vm1066, %v1648, -inf
        %1661 = vmax.xlane.f32.xlu0 %v1660
        %v1662 = vpop.xlane.xlu0 %1661
        %v1663 = vsel %vm1066, %v1649, -inf
        %1664 = vmax.xlane.f32.xlu0 %v1663
        %v1665 = vpop.xlane.xlu0 %1664
        %v1666 = vsel %vm1066, %v1650, -inf
        %1667 = vmax.xlane.f32.xlu0 %v1666
        %v1668 = vpop.xlane.xlu0 %1667
        %v1669 = vsel %vm1066, %v1651, -inf
        %1670 = vmax.xlane.f32.xlu0 %v1669
        %v1671 = vpop.xlane.xlu0 %1670
        %v1672 = vsel %vm1066, %v1652, -inf
        %1673 = vmax.xlane.f32.xlu0 %v1672
        %v1674 = vpop.xlane.xlu0 %1673
        %v1675 = vsel %vm1066, %v1653, -inf
        %1676 = vmax.xlane.f32.xlu0 %v1675
        %v1677 = vpop.xlane.xlu0 %1676
        %v1678 = vsub.f32 %v1057, %v1656
        %v1679 = vsub.f32 %v1057, %v1659
        %v1680 = vsub.f32 %v1057, %v1662
        %v1681 = vsub.f32 %v1057, %v1665
        %v1682 = vsub.f32 %v1057, %v1668
        %v1683 = vsub.f32 %v1057, %v1671
        %v1684 = vsub.f32 %v1057, %v1674
        %v1685 = vsub.f32 %v1057, %v1677
        %v1686 = vmul.f32 %v1678, 1.442695
        %v1687 = vpow.pop %v1686
        %v1688 = vmul.f32 %v1679, 1.442695
        %v1689 = vpow.pop %v1688
        %v1690 = vmul.f32 %v1680, 1.442695
        %v1691 = vpow.pop %v1690
        %v1692 = vmul.f32 %v1681, 1.442695
        %v1693 = vpow.pop %v1692
        %v1694 = vmul.f32 %v1682, 1.442695
        %v1695 = vpow.pop %v1694
        %v1696 = vmul.f32 %v1683, 1.442695
        %v1697 = vpow.pop %v1696
        %v1698 = vmul.f32 %v1684, 1.442695
        %v1699 = vpow.pop %v1698
        %v1700 = vmul.f32 %v1685, 1.442695
        %v1701 = vpow.pop %v1700
        %1710 = vrot.lane.b32.xlu0 %v1687, 64
        %v1711 = vpop.permute.xlu0 %1710
        %1712 = vrot.lane.b32.xlu0 %v1689, 64
        %v1713 = vpop.permute.xlu0 %1712
        %1714 = vrot.lane.b32.xlu0 %v1691, 64
        %v1715 = vpop.permute.xlu0 %1714
        %1716 = vrot.lane.b32.xlu0 %v1693, 64
        %v1717 = vpop.permute.xlu0 %1716
        %1718 = vrot.lane.b32.xlu0 %v1695, 64
        %v1719 = vpop.permute.xlu0 %1718
        %1720 = vrot.lane.b32.xlu0 %v1697, 64
        %v1721 = vpop.permute.xlu0 %1720
        %1722 = vrot.lane.b32.xlu0 %v1699, 64
        %v1723 = vpop.permute.xlu0 %1722
        %1724 = vrot.lane.b32.xlu0 %v1701, 64
        %v1725 = vpop.permute.xlu0 %1724
        %v1734 = vsel %vm1634, %v1711, 0.0
        %v1735 = vsel %vm1635, %v1713, 0.0
        %v1736 = vsel %vm1636, %v1715, 0.0
        %v1737 = vsel %vm1637, %v1717, 0.0
        %v1738 = vsel %vm1638, %v1719, 0.0
        %v1739 = vsel %vm1639, %v1721, 0.0
        %v1740 = vsel %vm1640, %v1723, 0.0
        %v1741 = vsel %vm1641, %v1725, 0.0
        %v1742 = vmul.f32 %v1734, %v1626
        %v1743 = vmul.f32 %v1735, %v1627
        %v1744 = vmul.f32 %v1736, %v1628
        %v1745 = vmul.f32 %v1737, %v1629
        %v1746 = vmul.f32 %v1738, %v1630
        %v1747 = vmul.f32 %v1739, %v1631
        %v1748 = vmul.f32 %v1740, %v1632
        %v1749 = vmul.f32 %v1741, %v1633
        %v1750 = vsel %vm1066, %v1742, 0.0
        %1751 = vadd.xlane.f32.xlu0 %v1750
        %v1752 = vpop.xlane.xlu0 %1751
        %v1753 = vsel %vm1066, %v1743, 0.0
        %1754 = vadd.xlane.f32.xlu0 %v1753
        %v1755 = vpop.xlane.xlu0 %1754
        %v1756 = vsel %vm1066, %v1744, 0.0
        %1757 = vadd.xlane.f32.xlu0 %v1756
        %v1758 = vpop.xlane.xlu0 %1757
        %v1759 = vsel %vm1066, %v1745, 0.0
        %1760 = vadd.xlane.f32.xlu0 %v1759
        %v1761 = vpop.xlane.xlu0 %1760
        %v1762 = vsel %vm1066, %v1746, 0.0
        %1763 = vadd.xlane.f32.xlu0 %v1762
        %v1764 = vpop.xlane.xlu0 %1763
        %v1765 = vsel %vm1066, %v1747, 0.0
        %1766 = vadd.xlane.f32.xlu0 %v1765
        %v1767 = vpop.xlane.xlu0 %1766
        %v1768 = vsel %vm1066, %v1748, 0.0
        %1769 = vadd.xlane.f32.xlu0 %v1768
        %v1770 = vpop.xlane.xlu0 %1769
        %v1771 = vsel %vm1066, %v1749, 0.0
        %1772 = vadd.xlane.f32.xlu0 %v1771
        %v1773 = vpop.xlane.xlu0 %1772
        %v1774 = vmax.f32 %v1752, 1e-10
        %v1775 = vmax.f32 %v1755, 1e-10
        %v1776 = vmax.f32 %v1758, 1e-10
        %v1777 = vmax.f32 %v1761, 1e-10
        %v1778 = vmax.f32 %v1764, 1e-10
        %v1779 = vmax.f32 %v1767, 1e-10
        %v1780 = vmax.f32 %v1770, 1e-10
        %v1781 = vmax.f32 %v1773, 1e-10
        %v1782 = vrcp.pop %v1774
        %v1783 = vrcp.pop %v1775
        %v1784 = vrcp.pop %v1776
        %v1785 = vrcp.pop %v1777
        %v1786 = vrcp.pop %v1778
        %v1787 = vrcp.pop %v1779
        %v1788 = vrcp.pop %v1780
        %v1789 = vrcp.pop %v1781
        %1791 = vrot.lane.b32.xlu0 %v1174, 64
        %v1792 = vpop.permute.xlu0 %1791
        %v1794 = vsel %vm1634, %v1792, -1e+30
        %v1795 = vsel %vm1635, %v1792, -1e+30
        %v1796 = vsel %vm1636, %v1792, -1e+30
        %v1797 = vsel %vm1637, %v1792, -1e+30
        %v1798 = vsel %vm1638, %v1792, -1e+30
        %v1799 = vsel %vm1639, %v1792, -1e+30
        %v1800 = vsel %vm1640, %v1792, -1e+30
        %v1801 = vsel %vm1641, %v1792, -1e+30
        %v1802 = vsel %vm1066, %v1794, -inf
        %1803 = vmax.xlane.f32.xlu0 %v1802
        %v1804 = vpop.xlane.xlu0 %1803
        %v1805 = vsel %vm1066, %v1795, -inf
        %1806 = vmax.xlane.f32.xlu0 %v1805
        %v1807 = vpop.xlane.xlu0 %1806
        %v1808 = vsel %vm1066, %v1796, -inf
        %1809 = vmax.xlane.f32.xlu0 %v1808
        %v1810 = vpop.xlane.xlu0 %1809
        %v1811 = vsel %vm1066, %v1797, -inf
        %1812 = vmax.xlane.f32.xlu0 %v1811
        %v1813 = vpop.xlane.xlu0 %1812
        %v1814 = vsel %vm1066, %v1798, -inf
        %1815 = vmax.xlane.f32.xlu0 %v1814
        %v1816 = vpop.xlane.xlu0 %1815
        %v1817 = vsel %vm1066, %v1799, -inf
        %1818 = vmax.xlane.f32.xlu0 %v1817
        %v1819 = vpop.xlane.xlu0 %1818
        %v1820 = vsel %vm1066, %v1800, -inf
        %1821 = vmax.xlane.f32.xlu0 %v1820
        %v1822 = vpop.xlane.xlu0 %1821
        %v1823 = vsel %vm1066, %v1801, -inf
        %1824 = vmax.xlane.f32.xlu0 %v1823
        %v1825 = vpop.xlane.xlu0 %1824
        %v1826 = vsub.f32 %v1174, %v1804
        %v1827 = vsub.f32 %v1174, %v1807
        %v1828 = vsub.f32 %v1174, %v1810
        %v1829 = vsub.f32 %v1174, %v1813
        %v1830 = vsub.f32 %v1174, %v1816
        %v1831 = vsub.f32 %v1174, %v1819
        %v1832 = vsub.f32 %v1174, %v1822
        %v1833 = vsub.f32 %v1174, %v1825
        %v1834 = vmul.f32 %v1826, 1.442695
        %v1835 = vpow.pop %v1834
        %v1836 = vmul.f32 %v1827, 1.442695
        %v1837 = vpow.pop %v1836
        %v1838 = vmul.f32 %v1828, 1.442695
        %v1839 = vpow.pop %v1838
        %v1840 = vmul.f32 %v1829, 1.442695
        %v1841 = vpow.pop %v1840
        %v1842 = vmul.f32 %v1830, 1.442695
        %v1843 = vpow.pop %v1842
        %v1844 = vmul.f32 %v1831, 1.442695
        %v1845 = vpow.pop %v1844
        %v1846 = vmul.f32 %v1832, 1.442695
        %v1847 = vpow.pop %v1846
        %v1848 = vmul.f32 %v1833, 1.442695
        %v1849 = vpow.pop %v1848
        %1858 = vrot.lane.b32.xlu0 %v1835, 64
        %v1859 = vpop.permute.xlu0 %1858
        %1860 = vrot.lane.b32.xlu0 %v1837, 64
        %v1861 = vpop.permute.xlu0 %1860
        %1862 = vrot.lane.b32.xlu0 %v1839, 64
        %v1863 = vpop.permute.xlu0 %1862
        %1864 = vrot.lane.b32.xlu0 %v1841, 64
        %v1865 = vpop.permute.xlu0 %1864
        %1866 = vrot.lane.b32.xlu0 %v1843, 64
        %v1867 = vpop.permute.xlu0 %1866
        %1868 = vrot.lane.b32.xlu0 %v1845, 64
        %v1869 = vpop.permute.xlu0 %1868
        %1870 = vrot.lane.b32.xlu0 %v1847, 64
        %v1871 = vpop.permute.xlu0 %1870
        %1872 = vrot.lane.b32.xlu0 %v1849, 64
        %v1873 = vpop.permute.xlu0 %1872
        %v1882 = vsel %vm1634, %v1859, 0.0
        %v1883 = vsel %vm1635, %v1861, 0.0
        %v1884 = vsel %vm1636, %v1863, 0.0
        %v1885 = vsel %vm1637, %v1865, 0.0
        %v1886 = vsel %vm1638, %v1867, 0.0
        %v1887 = vsel %vm1639, %v1869, 0.0
        %v1888 = vsel %vm1640, %v1871, 0.0
        %v1889 = vsel %vm1641, %v1873, 0.0
        %v1890 = vmul.f32 %v1882, %v1626
        %v1891 = vmul.f32 %v1883, %v1627
        %v1892 = vmul.f32 %v1884, %v1628
        %v1893 = vmul.f32 %v1885, %v1629
        %v1894 = vmul.f32 %v1886, %v1630
        %v1895 = vmul.f32 %v1887, %v1631
        %v1896 = vmul.f32 %v1888, %v1632
        %v1897 = vmul.f32 %v1889, %v1633
        %v1898 = vsel %vm1066, %v1890, 0.0
        %1899 = vadd.xlane.f32.xlu0 %v1898
        %v1900 = vpop.xlane.xlu0 %1899
        %v1901 = vsel %vm1066, %v1891, 0.0
        %1902 = vadd.xlane.f32.xlu0 %v1901
        %v1903 = vpop.xlane.xlu0 %1902
        %v1904 = vsel %vm1066, %v1892, 0.0
        %1905 = vadd.xlane.f32.xlu0 %v1904
        %v1906 = vpop.xlane.xlu0 %1905
        %v1907 = vsel %vm1066, %v1893, 0.0
        %1908 = vadd.xlane.f32.xlu0 %v1907
        %v1909 = vpop.xlane.xlu0 %1908
        %v1910 = vsel %vm1066, %v1894, 0.0
        %1911 = vadd.xlane.f32.xlu0 %v1910
        %v1912 = vpop.xlane.xlu0 %1911
        %v1913 = vsel %vm1066, %v1895, 0.0
        %1914 = vadd.xlane.f32.xlu0 %v1913
        %v1915 = vpop.xlane.xlu0 %1914
        %v1916 = vsel %vm1066, %v1896, 0.0
        %1917 = vadd.xlane.f32.xlu0 %v1916
        %v1918 = vpop.xlane.xlu0 %1917
        %v1919 = vsel %vm1066, %v1897, 0.0
        %1920 = vadd.xlane.f32.xlu0 %v1919
        %v1921 = vpop.xlane.xlu0 %1920
        %v1922 = vmax.f32 %v1900, 1e-10
        %v1923 = vmax.f32 %v1903, 1e-10
        %v1924 = vmax.f32 %v1906, 1e-10
        %v1925 = vmax.f32 %v1909, 1e-10
        %v1926 = vmax.f32 %v1912, 1e-10
        %v1927 = vmax.f32 %v1915, 1e-10
        %v1928 = vmax.f32 %v1918, 1e-10
        %v1929 = vmax.f32 %v1921, 1e-10
        %v1930 = vrcp.pop %v1922
        %v1931 = vrcp.pop %v1923
        %v1932 = vrcp.pop %v1924
        %v1933 = vrcp.pop %v1925
        %v1934 = vrcp.pop %v1926
        %v1935 = vrcp.pop %v1927
        %v1936 = vrcp.pop %v1928
        %v1937 = vrcp.pop %v1929
        %1946 = vrot.lane.b32.xlu0 %v1890, 64
        %v1947 = vpop.permute.xlu0 %1946
        %1948 = vrot.lane.b32.xlu0 %v1891, 64
        %v1949 = vpop.permute.xlu0 %1948
        %1950 = vrot.lane.b32.xlu0 %v1892, 64
        %v1951 = vpop.permute.xlu0 %1950
        %1952 = vrot.lane.b32.xlu0 %v1893, 64
        %v1953 = vpop.permute.xlu0 %1952
        %1954 = vrot.lane.b32.xlu0 %v1894, 64
        %v1955 = vpop.permute.xlu0 %1954
        %1956 = vrot.lane.b32.xlu0 %v1895, 64
        %v1957 = vpop.permute.xlu0 %1956
        %1958 = vrot.lane.b32.xlu0 %v1896, 64
        %v1959 = vpop.permute.xlu0 %1958
        %1960 = vrot.lane.b32.xlu0 %v1897, 64
        %v1961 = vpop.permute.xlu0 %1960
        %v1970 = vsel %vm1066, %v1742, %v1947
        %v1971 = vsel %vm1066, %v1743, %v1949
        %v1972 = vsel %vm1066, %v1744, %v1951
        %v1973 = vsel %vm1066, %v1745, %v1953
        %v1974 = vsel %vm1066, %v1746, %v1955
        %v1975 = vsel %vm1066, %v1747, %v1957
        %v1976 = vsel %vm1066, %v1748, %v1959
        %v1977 = vsel %vm1066, %v1749, %v1961
        %v1978 = vmul.f32 %v499, %v1032
        %v1979 = vmul.f32 %v504, %v1032
        %v1980 = vmul.f32 %v509, %v1032
        %v1981 = vmul.f32 %v514, %v1032
        %v1982 = vmul.f32 %v519, %v1032
        %v1983 = vmul.f32 %v524, %v1032
        %v1984 = vmul.f32 %v529, %v1032
        %v1985 = vmul.f32 %v534, %v1032
        %v1986 = vmul.f32 %v499, %v1037
        %v1987 = vmul.f32 %v504, %v1037
        %v1988 = vmul.f32 %v509, %v1037
        %v1989 = vmul.f32 %v514, %v1037
        %v1990 = vmul.f32 %v519, %v1037
        %v1991 = vmul.f32 %v524, %v1037
        %v1992 = vmul.f32 %v529, %v1037
        %v1993 = vmul.f32 %v534, %v1037
        %1994 = vmatprep.subr.mxu0 0.0
        %1995 = vmatpush1.msra.mxu0 %v1978
        %1996 = vmatprep.subr.mxu0 0.0
        %1997 = vmatpush1.msra.mxu0 %v1979
        %1998 = vmatprep.subr.mxu0 0.0
        %1999 = vmatpush1.msra.mxu0 %v1980
        %2000 = vmatprep.subr.mxu0 0.0
        %2001 = vmatpush1.msra.mxu0 %v1981
        %2002 = vmatprep.subr.mxu0 0.0
        %2003 = vmatpush1.msra.mxu0 %v1982
        %2004 = vmatprep.subr.mxu0 0.0
        %2005 = vmatpush1.msra.mxu0 %v1983
        %2006 = vmatprep.subr.mxu0 0.0
        %2007 = vmatpush1.msra.mxu0 %v1984
        %2008 = vmatprep.subr.mxu0 0.0
        %2009 = vmatpush1.msra.mxu0 %v1985
        %2010 = vmatprep.subr.mxu0 0.0
        %2011 = vmatpush1.msra.mxu0 %v1986
        %2012 = vmatprep.subr.mxu0 0.0
        %2013 = vmatpush1.msra.mxu0 %v1987
        %2014 = vmatprep.subr.mxu0 0.0
        %2015 = vmatpush1.msra.mxu0 %v1988
        %2016 = vmatprep.subr.mxu0 0.0
        %2017 = vmatpush1.msra.mxu0 %v1989
        %2018 = vmatprep.subr.mxu0 0.0
        %2019 = vmatpush1.msra.mxu0 %v1990
        %2020 = vmatprep.subr.mxu0 0.0
        %2021 = vmatpush1.msra.mxu0 %v1991
        %2022 = vmatprep.subr.mxu0 0.0
        %2023 = vmatpush1.msra.mxu0 %v1992
        %2024 = vmatprep.subr.mxu0 0.0
        %2025 = vmatpush1.msra.mxu0 %v1993
        %2026 = vmatprep.subr.mxu0 0.0
        %2027 = vmatpush1.msra.mxu0 0.0
        %2028 = vmatprep.subr.mxu0 0.0
        %2029 = vmatpush1.msra.mxu0 0.0
        %2030 = vmatprep.subr.mxu0 0.0
        %2031 = vmatpush1.msra.mxu0 0.0
        %2032 = vmatprep.subr.mxu0 0.0
        %2033 = vmatpush1.msra.mxu0 0.0
        %2034 = vmatprep.subr.mxu0 0.0
        %2035 = vmatpush1.msra.mxu0 0.0
        %2036 = vmatprep.subr.mxu0 0.0
        %2037 = vmatpush1.msra.mxu0 0.0
        %2038 = vmatprep.subr.mxu0 0.0
        %2039 = vmatpush1.msra.mxu0 0.0
        %2040 = vmatprep.subr.mxu0 0.0
        %2041 = vmatpush1.msra.mxu0 0.0
        %2042 = vmatprep.subr.mxu0 0.0
        %2043 = vmatpush1.msra.mxu0 0.0
        %2044 = vmatprep.subr.mxu0 0.0
        %2045 = vmatpush1.msra.mxu0 0.0
        %2046 = vmatprep.subr.mxu0 0.0
        %2047 = vmatpush1.msra.mxu0 0.0
        %2048 = vmatprep.subr.mxu0 0.0
        %2049 = vmatpush1.msra.mxu0 0.0
        %2050 = vmatprep.subr.mxu0 0.0
        %2051 = vmatpush1.msra.mxu0 0.0
        %2052 = vmatprep.subr.mxu0 0.0
        %2053 = vmatpush1.msra.mxu0 0.0
        %2054 = vmatprep.subr.mxu0 0.0
        %2055 = vmatpush1.msra.mxu0 0.0
        %2056 = vmatprep.subr.mxu0 0.0
        %2057 = vmatpush1.msra.mxu0 0.0
        %2058 = vmatprep.mubr.f32.mxu0 0.0
        %2059 = vmatmul.mubr.f32.gmra.mrb[0].mxu0 %v1970
        %v2060 = vpop.f32.mrb[0].mxu0
        %v2061 = vadd.f32 0.0, %v2060
        %v2062 = vpop.f32.mrb[0].mxu0
        %2063 = vmatprep.mubr.f32.mxu0 0.0
        %2064 = vmatmul.mubr.f32.gmra.mrb[0].mxu0 %v1971
        %v2065 = vpop.f32.mrb[0].mxu0
        %v2066 = vadd.f32 0.0, %v2065
        %v2067 = vpop.f32.mrb[0].mxu0
        %2068 = vmatprep.mubr.f32.mxu0 0.0
        %2069 = vmatmul.mubr.f32.gmra.mrb[0].mxu0 %v1972
        %v2070 = vpop.f32.mrb[0].mxu0
        %v2071 = vadd.f32 0.0, %v2070
        %v2072 = vpop.f32.mrb[0].mxu0
        %2073 = vmatprep.mubr.f32.mxu0 0.0
        %2074 = vmatmul.mubr.f32.gmra.mrb[0].mxu0 %v1973
        %v2075 = vpop.f32.mrb[0].mxu0
        %v2076 = vadd.f32 0.0, %v2075
        %v2077 = vpop.f32.mrb[0].mxu0
        %2078 = vmatprep.mubr.f32.mxu0 0.0
        %2079 = vmatmul.mubr.f32.gmra.mrb[0].mxu0 %v1974
        %v2080 = vpop.f32.mrb[0].mxu0
        %v2081 = vadd.f32 0.0, %v2080
        %v2082 = vpop.f32.mrb[0].mxu0
        %2083 = vmatprep.mubr.f32.mxu0 0.0
        %2084 = vmatmul.mubr.f32.gmra.mrb[0].mxu0 %v1975
        %v2085 = vpop.f32.mrb[0].mxu0
        %v2086 = vadd.f32 0.0, %v2085
        %v2087 = vpop.f32.mrb[0].mxu0
        %2088 = vmatprep.mubr.f32.mxu0 0.0
        %2089 = vmatmul.mubr.f32.gmra.mrb[0].mxu0 %v1976
        %v2090 = vpop.f32.mrb[0].mxu0
        %v2091 = vadd.f32 0.0, %v2090
        %v2092 = vpop.f32.mrb[0].mxu0
        %2093 = vmatprep.mubr.f32.mxu0 0.0
        %2094 = vmatmul.mubr.f32.gmra.mrb[0].mxu0 %v1977
        %v2095 = vpop.f32.mrb[0].mxu0
        %v2096 = vadd.f32 0.0, %v2095
        %v2097 = vpop.f32.mrb[0].mxu0
        %2098 = vdwg.mxu0
        %v2099 = vmul.f32 %v1032, %v1782
        %v2100 = vmul.f32 %v1032, %v1783
        %v2101 = vmul.f32 %v1032, %v1784
        %v2102 = vmul.f32 %v1032, %v1785
        %v2103 = vmul.f32 %v1032, %v1786
        %v2104 = vmul.f32 %v1032, %v1787
        %v2105 = vmul.f32 %v1032, %v1788
        %v2106 = vmul.f32 %v1032, %v1789
        %v2107 = vmul.f32 %v1037, %v1930
        %v2108 = vmul.f32 %v1037, %v1931
        %v2109 = vmul.f32 %v1037, %v1932
        %v2110 = vmul.f32 %v1037, %v1933
        %v2111 = vmul.f32 %v1037, %v1934
        %v2112 = vmul.f32 %v1037, %v1935
        %v2113 = vmul.f32 %v1037, %v1936
        %v2114 = vmul.f32 %v1037, %v1937
        %v2115 = vadd.f32 %v2099, %v2107
        %v2116 = vadd.f32 %v2100, %v2108
        %v2117 = vadd.f32 %v2101, %v2109
        %v2118 = vadd.f32 %v2102, %v2110
        %v2119 = vadd.f32 %v2103, %v2111
        %v2120 = vadd.f32 %v2104, %v2112
        %v2121 = vadd.f32 %v2105, %v2113
        %v2122 = vadd.f32 %v2106, %v2114
        %v2123 = vmul.f32 %v2061, %v2115
        %v2124 = vmul.f32 %v2066, %v2116
        %v2125 = vmul.f32 %v2071, %v2117
        %v2126 = vmul.f32 %v2076, %v2118
        %v2127 = vmul.f32 %v2081, %v2119
        %v2128 = vmul.f32 %v2086, %v2120
        %v2129 = vmul.f32 %v2091, %v2121
        %v2130 = vmul.f32 %v2096, %v2122
        %v2131 = vadd.f32 %v2123, %v732
        %v2132 = vadd.f32 %v2124, %v737
        %v2133 = vadd.f32 %v2125, %v742
        %v2134 = vadd.f32 %v2126, %v747
        %v2135 = vadd.f32 %v2127, %v752
        %v2136 = vadd.f32 %v2128, %v757
        %v2137 = vadd.f32 %v2129, %v762
        %v2138 = vadd.f32 %v2130, %v767
        %v2139 = vmax.f32 %v2131, 0.0
        %v2140 = vmax.f32 %v2132, 0.0
        %v2141 = vmax.f32 %v2133, 0.0
        %v2142 = vmax.f32 %v2134, 0.0
        %v2143 = vmax.f32 %v2135, 0.0
        %v2144 = vmax.f32 %v2136, 0.0
        %v2145 = vmax.f32 %v2137, 0.0
        %v2146 = vmax.f32 %v2138, 0.0
        %v2147 = vsel %vm295, %v2139, 0.0
        %2148 = vadd.xlane.f32.xlu0 %v2147
        %v2149 = vpop.xlane.xlu0 %2148
        %v2150 = vsel %vm295, %v2140, 0.0
        %2151 = vadd.xlane.f32.xlu0 %v2150
        %v2152 = vpop.xlane.xlu0 %2151
        %v2153 = vsel %vm295, %v2141, 0.0
        %2154 = vadd.xlane.f32.xlu0 %v2153
        %v2155 = vpop.xlane.xlu0 %2154
        %v2156 = vsel %vm295, %v2142, 0.0
        %2157 = vadd.xlane.f32.xlu0 %v2156
        %v2158 = vpop.xlane.xlu0 %2157
        %v2159 = vsel %vm295, %v2143, 0.0
        %2160 = vadd.xlane.f32.xlu0 %v2159
        %v2161 = vpop.xlane.xlu0 %2160
        %v2162 = vsel %vm295, %v2144, 0.0
        %2163 = vadd.xlane.f32.xlu0 %v2162
        %v2164 = vpop.xlane.xlu0 %2163
        %v2165 = vsel %vm295, %v2145, 0.0
        %2166 = vadd.xlane.f32.xlu0 %v2165
        %v2167 = vpop.xlane.xlu0 %2166
        %v2168 = vsel %vm295, %v2146, 0.0
        %2169 = vadd.xlane.f32.xlu0 %v2168
        %v2170 = vpop.xlane.xlu0 %2169
        %v2171 = vmul.f32 %v2149, %v1520
        %v2172 = vmul.f32 %v2152, %v1520
        %v2173 = vmul.f32 %v2155, %v1520
        %v2174 = vmul.f32 %v2158, %v1520
        %v2175 = vmul.f32 %v2161, %v1520
        %v2176 = vmul.f32 %v2164, %v1520
        %v2177 = vmul.f32 %v2167, %v1520
        %v2178 = vmul.f32 %v2170, %v1520
        %v2179 = vsub.f32 %v2139, %v2171
        %v2180 = vsub.f32 %v2140, %v2172
        %v2181 = vsub.f32 %v2141, %v2173
        %v2182 = vsub.f32 %v2142, %v2174
        %v2183 = vsub.f32 %v2143, %v2175
        %v2184 = vsub.f32 %v2144, %v2176
        %v2185 = vsub.f32 %v2145, %v2177
        %v2186 = vsub.f32 %v2146, %v2178
        %v2187 = vmul.f32 %v2179, %v2179
        %v2188 = vmul.f32 %v2180, %v2180
        %v2189 = vmul.f32 %v2181, %v2181
        %v2190 = vmul.f32 %v2182, %v2182
        %v2191 = vmul.f32 %v2183, %v2183
        %v2192 = vmul.f32 %v2184, %v2184
        %v2193 = vmul.f32 %v2185, %v2185
        %v2194 = vmul.f32 %v2186, %v2186
        %v2195 = vsel %vm295, %v2187, 0.0
        %2196 = vadd.xlane.f32.xlu0 %v2195
        %v2197 = vpop.xlane.xlu0 %2196
        %v2198 = vsel %vm295, %v2188, 0.0
        %2199 = vadd.xlane.f32.xlu0 %v2198
        %v2200 = vpop.xlane.xlu0 %2199
        %v2201 = vsel %vm295, %v2189, 0.0
        %2202 = vadd.xlane.f32.xlu0 %v2201
        %v2203 = vpop.xlane.xlu0 %2202
        %v2204 = vsel %vm295, %v2190, 0.0
        %2205 = vadd.xlane.f32.xlu0 %v2204
        %v2206 = vpop.xlane.xlu0 %2205
        %v2207 = vsel %vm295, %v2191, 0.0
        %2208 = vadd.xlane.f32.xlu0 %v2207
        %v2209 = vpop.xlane.xlu0 %2208
        %v2210 = vsel %vm295, %v2192, 0.0
        %2211 = vadd.xlane.f32.xlu0 %v2210
        %v2212 = vpop.xlane.xlu0 %2211
        %v2213 = vsel %vm295, %v2193, 0.0
        %2214 = vadd.xlane.f32.xlu0 %v2213
        %v2215 = vpop.xlane.xlu0 %2214
        %v2216 = vsel %vm295, %v2194, 0.0
        %2217 = vadd.xlane.f32.xlu0 %v2216
        %v2218 = vpop.xlane.xlu0 %2217
        %v2219 = vmul.f32 %v2197, %v1520
        %v2220 = vmul.f32 %v2200, %v1520
        %v2221 = vmul.f32 %v2203, %v1520
        %v2222 = vmul.f32 %v2206, %v1520
        %v2223 = vmul.f32 %v2209, %v1520
        %v2224 = vmul.f32 %v2212, %v1520
        %v2225 = vmul.f32 %v2215, %v1520
        %v2226 = vmul.f32 %v2218, %v1520
        %v2227 = vadd.f32 %v2219, 1e-09
        %v2228 = vadd.f32 %v2220, 1e-09
        %v2229 = vadd.f32 %v2221, 1e-09
        %v2230 = vadd.f32 %v2222, 1e-09
        %v2231 = vadd.f32 %v2223, 1e-09
        %v2232 = vadd.f32 %v2224, 1e-09
        %v2233 = vadd.f32 %v2225, 1e-09
        %v2234 = vadd.f32 %v2226, 1e-09
        %v2235 = vmul.f32 %v2179, %v1588
        %v2236 = vmul.f32 %v2180, %v1588
        %v2237 = vmul.f32 %v2181, %v1588
        %v2238 = vmul.f32 %v2182, %v1588
        %v2239 = vmul.f32 %v2183, %v1588
        %v2240 = vmul.f32 %v2184, %v1588
        %v2241 = vmul.f32 %v2185, %v1588
        %v2242 = vmul.f32 %v2186, %v1588
        %v2243 = vrsqrt.pop %v2227
        %v2244 = vrsqrt.pop %v2228
        %v2245 = vrsqrt.pop %v2229
        %v2246 = vrsqrt.pop %v2230
        %v2247 = vrsqrt.pop %v2231
        %v2248 = vrsqrt.pop %v2232
        %v2249 = vrsqrt.pop %v2233
        %v2250 = vrsqrt.pop %v2234
        %v2251 = vmul.f32 %v2235, %v2243
        %v2252 = vmul.f32 %v2236, %v2244
        %v2253 = vmul.f32 %v2237, %v2245
        %v2254 = vmul.f32 %v2238, %v2246
        %v2255 = vmul.f32 %v2239, %v2247
        %v2256 = vmul.f32 %v2240, %v2248
        %v2257 = vmul.f32 %v2241, %v2249
        %v2258 = vmul.f32 %v2242, %v2250
        %v2259 = vadd.f32 %v2251, %v1616
        %v2260 = vadd.f32 %v2252, %v1616
        %v2261 = vadd.f32 %v2253, %v1616
        %v2262 = vadd.f32 %v2254, %v1616
        %v2263 = vadd.f32 %v2255, %v1616
        %v2264 = vadd.f32 %v2256, %v1616
        %v2265 = vadd.f32 %v2257, %v1616
        %v2266 = vadd.f32 %v2258, %v1616
        %s2267 = scalar_lea.vmem %s248, 128
        %v2268 = vld [vmem:[%s2267] sm:$0xff]
        %v2269 = vld [vmem:[%s2267 + $0x8] sm:$0xff]
        %v2270 = vld [vmem:[%s2267 + $0x10] sm:$0xff]
        %v2271 = vld [vmem:[%s2267 + $0x18] sm:$0xff]
        %v2272 = vld [vmem:[%s2267 + $0x20] sm:$0xff]
        %v2273 = vld [vmem:[%s2267 + $0x28] sm:$0xff]
        %v2274 = vld [vmem:[%s2267 + $0x30] sm:$0xff]
        %v2275 = vld [vmem:[%s2267 + $0x38] sm:$0xff]
        %vm2276 = vcmp.gt.f32.partialorder %v2268, 0.0
        %vm2277 = vcmp.gt.f32.partialorder %v2269, 0.0
        %vm2278 = vcmp.gt.f32.partialorder %v2270, 0.0
        %vm2279 = vcmp.gt.f32.partialorder %v2271, 0.0
        %vm2280 = vcmp.gt.f32.partialorder %v2272, 0.0
        %vm2281 = vcmp.gt.f32.partialorder %v2273, 0.0
        %vm2282 = vcmp.gt.f32.partialorder %v2274, 0.0
        %vm2283 = vcmp.gt.f32.partialorder %v2275, 0.0
        %v2284 = vlaneseq
        %v2285 = vshrl.u32 %v2284, 7
        %v2286 = vsub.s32 0, %v2285
        %v2287 = vrot.slane %v1025, %v2286
        %v2288 = vsel %vm2276, %v2287, -1e+30
        %v2289 = vsel %vm2277, %v2287, -1e+30
        %v2290 = vsel %vm2278, %v2287, -1e+30
        %v2291 = vsel %vm2279, %v2287, -1e+30
        %v2292 = vsel %vm2280, %v2287, -1e+30
        %v2293 = vsel %vm2281, %v2287, -1e+30
        %v2294 = vsel %vm2282, %v2287, -1e+30
        %v2295 = vsel %vm2283, %v2287, -1e+30
        %v2296 = vsel %vm1066, %v2288, -inf
        %2297 = vmax.xlane.f32.xlu0 %v2296
        %v2298 = vpop.xlane.xlu0 %2297
        %v2299 = vsel %vm1066, %v2289, -inf
        %2300 = vmax.xlane.f32.xlu0 %v2299
        %v2301 = vpop.xlane.xlu0 %2300
        %v2302 = vsel %vm1066, %v2290, -inf
        %2303 = vmax.xlane.f32.xlu0 %v2302
        %v2304 = vpop.xlane.xlu0 %2303
        %v2305 = vsel %vm1066, %v2291, -inf
        %2306 = vmax.xlane.f32.xlu0 %v2305
        %v2307 = vpop.xlane.xlu0 %2306
        %v2308 = vsel %vm1066, %v2292, -inf
        %2309 = vmax.xlane.f32.xlu0 %v2308
        %v2310 = vpop.xlane.xlu0 %2309
        %v2311 = vsel %vm1066, %v2293, -inf
        %2312 = vmax.xlane.f32.xlu0 %v2311
        %v2313 = vpop.xlane.xlu0 %2312
        %v2314 = vsel %vm1066, %v2294, -inf
        %2315 = vmax.xlane.f32.xlu0 %v2314
        %v2316 = vpop.xlane.xlu0 %2315
        %v2317 = vsel %vm1066, %v2295, -inf
        %2318 = vmax.xlane.f32.xlu0 %v2317
        %v2319 = vpop.xlane.xlu0 %2318
        %v2320 = vsub.f32 %v2287, %v2298
        %v2321 = vsub.f32 %v2287, %v2301
        %v2322 = vsub.f32 %v2287, %v2304
        %v2323 = vsub.f32 %v2287, %v2307
        %v2324 = vsub.f32 %v2287, %v2310
        %v2325 = vsub.f32 %v2287, %v2313
        %v2326 = vsub.f32 %v2287, %v2316
        %v2327 = vsub.f32 %v2287, %v2319
        %v2328 = vmul.f32 %v2320, 1.442695
        %v2329 = vpow.pop %v2328
        %v2330 = vmul.f32 %v2321, 1.442695
        %v2331 = vpow.pop %v2330
        %v2332 = vmul.f32 %v2322, 1.442695
        %v2333 = vpow.pop %v2332
        %v2334 = vmul.f32 %v2323, 1.442695
        %v2335 = vpow.pop %v2334
        %v2336 = vmul.f32 %v2324, 1.442695
        %v2337 = vpow.pop %v2336
        %v2338 = vmul.f32 %v2325, 1.442695
        %v2339 = vpow.pop %v2338
        %v2340 = vmul.f32 %v2326, 1.442695
        %v2341 = vpow.pop %v2340
        %v2342 = vmul.f32 %v2327, 1.442695
        %v2343 = vpow.pop %v2342
        %v2344 = vsel %vm2276, %v2329, 0.0
        %v2345 = vsel %vm2277, %v2331, 0.0
        %v2346 = vsel %vm2278, %v2333, 0.0
        %v2347 = vsel %vm2279, %v2335, 0.0
        %v2348 = vsel %vm2280, %v2337, 0.0
        %v2349 = vsel %vm2281, %v2339, 0.0
        %v2350 = vsel %vm2282, %v2341, 0.0
        %v2351 = vsel %vm2283, %v2343, 0.0
        %v2352 = vmul.f32 %v2344, %v2268
        %v2353 = vmul.f32 %v2345, %v2269
        %v2354 = vmul.f32 %v2346, %v2270
        %v2355 = vmul.f32 %v2347, %v2271
        %v2356 = vmul.f32 %v2348, %v2272
        %v2357 = vmul.f32 %v2349, %v2273
        %v2358 = vmul.f32 %v2350, %v2274
        %v2359 = vmul.f32 %v2351, %v2275
        %v2360 = vsel %vm1066, %v2352, 0.0
        %2361 = vadd.xlane.f32.xlu0 %v2360
        %v2362 = vpop.xlane.xlu0 %2361
        %v2363 = vsel %vm1066, %v2353, 0.0
        %2364 = vadd.xlane.f32.xlu0 %v2363
        %v2365 = vpop.xlane.xlu0 %2364
        %v2366 = vsel %vm1066, %v2354, 0.0
        %2367 = vadd.xlane.f32.xlu0 %v2366
        %v2368 = vpop.xlane.xlu0 %2367
        %v2369 = vsel %vm1066, %v2355, 0.0
        %2370 = vadd.xlane.f32.xlu0 %v2369
        %v2371 = vpop.xlane.xlu0 %2370
        %v2372 = vsel %vm1066, %v2356, 0.0
        %2373 = vadd.xlane.f32.xlu0 %v2372
        %v2374 = vpop.xlane.xlu0 %2373
        %v2375 = vsel %vm1066, %v2357, 0.0
        %2376 = vadd.xlane.f32.xlu0 %v2375
        %v2377 = vpop.xlane.xlu0 %2376
        %v2378 = vsel %vm1066, %v2358, 0.0
        %2379 = vadd.xlane.f32.xlu0 %v2378
        %v2380 = vpop.xlane.xlu0 %2379
        %v2381 = vsel %vm1066, %v2359, 0.0
        %2382 = vadd.xlane.f32.xlu0 %v2381
        %v2383 = vpop.xlane.xlu0 %2382
        %v2384 = vmax.f32 %v2362, 1e-10
        %v2385 = vmax.f32 %v2365, 1e-10
        %v2386 = vmax.f32 %v2368, 1e-10
        %v2387 = vmax.f32 %v2371, 1e-10
        %v2388 = vmax.f32 %v2374, 1e-10
        %v2389 = vmax.f32 %v2377, 1e-10
        %v2390 = vmax.f32 %v2380, 1e-10
        %v2391 = vmax.f32 %v2383, 1e-10
        %v2392 = vrcp.pop %v2384
        %v2393 = vrcp.pop %v2385
        %v2394 = vrcp.pop %v2386
        %v2395 = vrcp.pop %v2387
        %v2396 = vrcp.pop %v2388
        %v2397 = vrcp.pop %v2389
        %v2398 = vrcp.pop %v2390
        %v2399 = vrcp.pop %v2391
        %v2400 = vlaneseq
        %v2401 = vshrl.u32 %v2400, 7
        %v2402 = vsub.s32 1, %v2401
        %v2403 = vrot.slane %v1025, %v2402
        %v2404 = vsel %vm2276, %v2403, -1e+30
        %v2405 = vsel %vm2277, %v2403, -1e+30
        %v2406 = vsel %vm2278, %v2403, -1e+30
        %v2407 = vsel %vm2279, %v2403, -1e+30
        %v2408 = vsel %vm2280, %v2403, -1e+30
        %v2409 = vsel %vm2281, %v2403, -1e+30
        %v2410 = vsel %vm2282, %v2403, -1e+30
        %v2411 = vsel %vm2283, %v2403, -1e+30
        %v2412 = vsel %vm1066, %v2404, -inf
        %2413 = vmax.xlane.f32.xlu0 %v2412
        %v2414 = vpop.xlane.xlu0 %2413
        %v2415 = vsel %vm1066, %v2405, -inf
        %2416 = vmax.xlane.f32.xlu0 %v2415
        %v2417 = vpop.xlane.xlu0 %2416
        %v2418 = vsel %vm1066, %v2406, -inf
        %2419 = vmax.xlane.f32.xlu0 %v2418
        %v2420 = vpop.xlane.xlu0 %2419
        %v2421 = vsel %vm1066, %v2407, -inf
        %2422 = vmax.xlane.f32.xlu0 %v2421
        %v2423 = vpop.xlane.xlu0 %2422
        %v2424 = vsel %vm1066, %v2408, -inf
        %2425 = vmax.xlane.f32.xlu0 %v2424
        %v2426 = vpop.xlane.xlu0 %2425
        %v2427 = vsel %vm1066, %v2409, -inf
        %2428 = vmax.xlane.f32.xlu0 %v2427
        %v2429 = vpop.xlane.xlu0 %2428
        %v2430 = vsel %vm1066, %v2410, -inf
        %2431 = vmax.xlane.f32.xlu0 %v2430
        %v2432 = vpop.xlane.xlu0 %2431
        %v2433 = vsel %vm1066, %v2411, -inf
        %2434 = vmax.xlane.f32.xlu0 %v2433
        %v2435 = vpop.xlane.xlu0 %2434
        %v2436 = vsub.f32 %v2403, %v2414
        %v2437 = vsub.f32 %v2403, %v2417
        %v2438 = vsub.f32 %v2403, %v2420
        %v2439 = vsub.f32 %v2403, %v2423
        %v2440 = vsub.f32 %v2403, %v2426
        %v2441 = vsub.f32 %v2403, %v2429
        %v2442 = vsub.f32 %v2403, %v2432
        %v2443 = vsub.f32 %v2403, %v2435
        %v2444 = vmul.f32 %v2436, 1.442695
        %v2445 = vpow.pop %v2444
        %v2446 = vmul.f32 %v2437, 1.442695
        %v2447 = vpow.pop %v2446
        %v2448 = vmul.f32 %v2438, 1.442695
        %v2449 = vpow.pop %v2448
        %v2450 = vmul.f32 %v2439, 1.442695
        %v2451 = vpow.pop %v2450
        %v2452 = vmul.f32 %v2440, 1.442695
        %v2453 = vpow.pop %v2452
        %v2454 = vmul.f32 %v2441, 1.442695
        %v2455 = vpow.pop %v2454
        %v2456 = vmul.f32 %v2442, 1.442695
        %v2457 = vpow.pop %v2456
        %v2458 = vmul.f32 %v2443, 1.442695
        %v2459 = vpow.pop %v2458
        %v2460 = vsel %vm2276, %v2445, 0.0
        %v2461 = vsel %vm2277, %v2447, 0.0
        %v2462 = vsel %vm2278, %v2449, 0.0
        %v2463 = vsel %vm2279, %v2451, 0.0
        %v2464 = vsel %vm2280, %v2453, 0.0
        %v2465 = vsel %vm2281, %v2455, 0.0
        %v2466 = vsel %vm2282, %v2457, 0.0
        %v2467 = vsel %vm2283, %v2459, 0.0
        %v2468 = vmul.f32 %v2460, %v2268
        %v2469 = vmul.f32 %v2461, %v2269
        %v2470 = vmul.f32 %v2462, %v2270
        %v2471 = vmul.f32 %v2463, %v2271
        %v2472 = vmul.f32 %v2464, %v2272
        %v2473 = vmul.f32 %v2465, %v2273
        %v2474 = vmul.f32 %v2466, %v2274
        %v2475 = vmul.f32 %v2467, %v2275
        %v2476 = vsel %vm1066, %v2468, 0.0
        %2477 = vadd.xlane.f32.xlu0 %v2476
        %v2478 = vpop.xlane.xlu0 %2477
        %v2479 = vsel %vm1066, %v2469, 0.0
        %2480 = vadd.xlane.f32.xlu0 %v2479
        %v2481 = vpop.xlane.xlu0 %2480
        %v2482 = vsel %vm1066, %v2470, 0.0
        %2483 = vadd.xlane.f32.xlu0 %v2482
        %v2484 = vpop.xlane.xlu0 %2483
        %v2485 = vsel %vm1066, %v2471, 0.0
        %2486 = vadd.xlane.f32.xlu0 %v2485
        %v2487 = vpop.xlane.xlu0 %2486
        %v2488 = vsel %vm1066, %v2472, 0.0
        %2489 = vadd.xlane.f32.xlu0 %v2488
        %v2490 = vpop.xlane.xlu0 %2489
        %v2491 = vsel %vm1066, %v2473, 0.0
        %2492 = vadd.xlane.f32.xlu0 %v2491
        %v2493 = vpop.xlane.xlu0 %2492
        %v2494 = vsel %vm1066, %v2474, 0.0
        %2495 = vadd.xlane.f32.xlu0 %v2494
        %v2496 = vpop.xlane.xlu0 %2495
        %v2497 = vsel %vm1066, %v2475, 0.0
        %2498 = vadd.xlane.f32.xlu0 %v2497
        %v2499 = vpop.xlane.xlu0 %2498
        %v2500 = vmax.f32 %v2478, 1e-10
        %v2501 = vmax.f32 %v2481, 1e-10
        %v2502 = vmax.f32 %v2484, 1e-10
        %v2503 = vmax.f32 %v2487, 1e-10
        %v2504 = vmax.f32 %v2490, 1e-10
        %v2505 = vmax.f32 %v2493, 1e-10
        %v2506 = vmax.f32 %v2496, 1e-10
        %v2507 = vmax.f32 %v2499, 1e-10
        %v2508 = vrcp.pop %v2500
        %v2509 = vrcp.pop %v2501
        %v2510 = vrcp.pop %v2502
        %v2511 = vrcp.pop %v2503
        %v2512 = vrcp.pop %v2504
        %v2513 = vrcp.pop %v2505
        %v2514 = vrcp.pop %v2506
        %v2515 = vrcp.pop %v2507
        %2524 = vrot.lane.b32.xlu0 %v2468, 64
        %v2525 = vpop.permute.xlu0 %2524
        %2526 = vrot.lane.b32.xlu0 %v2469, 64
        %v2527 = vpop.permute.xlu0 %2526
        %2528 = vrot.lane.b32.xlu0 %v2470, 64
        %v2529 = vpop.permute.xlu0 %2528
        %2530 = vrot.lane.b32.xlu0 %v2471, 64
        %v2531 = vpop.permute.xlu0 %2530
        %2532 = vrot.lane.b32.xlu0 %v2472, 64
        %v2533 = vpop.permute.xlu0 %2532
        %2534 = vrot.lane.b32.xlu0 %v2473, 64
        %v2535 = vpop.permute.xlu0 %2534
        %2536 = vrot.lane.b32.xlu0 %v2474, 64
        %v2537 = vpop.permute.xlu0 %2536
        %2538 = vrot.lane.b32.xlu0 %v2475, 64
        %v2539 = vpop.permute.xlu0 %2538
        %v2548 = vsel %vm1066, %v2352, %v2525
        %v2549 = vsel %vm1066, %v2353, %v2527
        %v2550 = vsel %vm1066, %v2354, %v2529
        %v2551 = vsel %vm1066, %v2355, %v2531
        %v2552 = vsel %vm1066, %v2356, %v2533
        %v2553 = vsel %vm1066, %v2357, %v2535
        %v2554 = vsel %vm1066, %v2358, %v2537
        %v2555 = vsel %vm1066, %v2359, %v2539
        %v2556 = vmul.f32 %v539, %v1032
        %v2557 = vmul.f32 %v544, %v1032
        %v2558 = vmul.f32 %v549, %v1032
        %v2559 = vmul.f32 %v554, %v1032
        %v2560 = vmul.f32 %v559, %v1032
        %v2561 = vmul.f32 %v564, %v1032
        %v2562 = vmul.f32 %v569, %v1032
        %v2563 = vmul.f32 %v574, %v1032
        %v2564 = vmul.f32 %v539, %v1037
        %v2565 = vmul.f32 %v544, %v1037
        %v2566 = vmul.f32 %v549, %v1037
        %v2567 = vmul.f32 %v554, %v1037
        %v2568 = vmul.f32 %v559, %v1037
        %v2569 = vmul.f32 %v564, %v1037
        %v2570 = vmul.f32 %v569, %v1037
        %v2571 = vmul.f32 %v574, %v1037
        %2572 = vmatprep.subr.mxu0 0.0
        %2573 = vmatpush1.msra.mxu0 %v2556
        %2574 = vmatprep.subr.mxu0 0.0
        %2575 = vmatpush1.msra.mxu0 %v2557
        %2576 = vmatprep.subr.mxu0 0.0
        %2577 = vmatpush1.msra.mxu0 %v2558
        %2578 = vmatprep.subr.mxu0 0.0
        %2579 = vmatpush1.msra.mxu0 %v2559
        %2580 = vmatprep.subr.mxu0 0.0
        %2581 = vmatpush1.msra.mxu0 %v2560
        %2582 = vmatprep.subr.mxu0 0.0
        %2583 = vmatpush1.msra.mxu0 %v2561
        %2584 = vmatprep.subr.mxu0 0.0
        %2585 = vmatpush1.msra.mxu0 %v2562
        %2586 = vmatprep.subr.mxu0 0.0
        %2587 = vmatpush1.msra.mxu0 %v2563
        %2588 = vmatprep.subr.mxu0 0.0
        %2589 = vmatpush1.msra.mxu0 %v2564
        %2590 = vmatprep.subr.mxu0 0.0
        %2591 = vmatpush1.msra.mxu0 %v2565
        %2592 = vmatprep.subr.mxu0 0.0
        %2593 = vmatpush1.msra.mxu0 %v2566
        %2594 = vmatprep.subr.mxu0 0.0
        %2595 = vmatpush1.msra.mxu0 %v2567
        %2596 = vmatprep.subr.mxu0 0.0
        %2597 = vmatpush1.msra.mxu0 %v2568
        %2598 = vmatprep.subr.mxu0 0.0
        %2599 = vmatpush1.msra.mxu0 %v2569
        %2600 = vmatprep.subr.mxu0 0.0
        %2601 = vmatpush1.msra.mxu0 %v2570
        %2602 = vmatprep.subr.mxu0 0.0
        %2603 = vmatpush1.msra.mxu0 %v2571
        %2604 = vmatprep.subr.mxu0 0.0
        %2605 = vmatpush1.msra.mxu0 0.0
        %2606 = vmatprep.subr.mxu0 0.0
        %2607 = vmatpush1.msra.mxu0 0.0
        %2608 = vmatprep.subr.mxu0 0.0
        %2609 = vmatpush1.msra.mxu0 0.0
        %2610 = vmatprep.subr.mxu0 0.0
        %2611 = vmatpush1.msra.mxu0 0.0
        %2612 = vmatprep.subr.mxu0 0.0
        %2613 = vmatpush1.msra.mxu0 0.0
        %2614 = vmatprep.subr.mxu0 0.0
        %2615 = vmatpush1.msra.mxu0 0.0
        %2616 = vmatprep.subr.mxu0 0.0
        %2617 = vmatpush1.msra.mxu0 0.0
        %2618 = vmatprep.subr.mxu0 0.0
        %2619 = vmatpush1.msra.mxu0 0.0
        %2620 = vmatprep.subr.mxu0 0.0
        %2621 = vmatpush1.msra.mxu0 0.0
        %2622 = vmatprep.subr.mxu0 0.0
        %2623 = vmatpush1.msra.mxu0 0.0
        %2624 = vmatprep.subr.mxu0 0.0
        %2625 = vmatpush1.msra.mxu0 0.0
        %2626 = vmatprep.subr.mxu0 0.0
        %2627 = vmatpush1.msra.mxu0 0.0
        %2628 = vmatprep.subr.mxu0 0.0
        %2629 = vmatpush1.msra.mxu0 0.0
        %2630 = vmatprep.subr.mxu0 0.0
        %2631 = vmatpush1.msra.mxu0 0.0
        %2632 = vmatprep.subr.mxu0 0.0
        %2633 = vmatpush1.msra.mxu0 0.0
        %2634 = vmatprep.subr.mxu0 0.0
        %2635 = vmatpush1.msra.mxu0 0.0
        %2636 = vmatprep.mubr.f32.mxu0 0.0
        %2637 = vmatmul.mubr.f32.gmra.mrb[0].mxu0 %v2548
        %v2638 = vpop.f32.mrb[0].mxu0
        %v2639 = vadd.f32 0.0, %v2638
        %v2640 = vpop.f32.mrb[0].mxu0
        %2641 = vmatprep.mubr.f32.mxu0 0.0
        %2642 = vmatmul.mubr.f32.gmra.mrb[0].mxu0 %v2549
        %v2643 = vpop.f32.mrb[0].mxu0
        %v2644 = vadd.f32 0.0, %v2643
        %v2645 = vpop.f32.mrb[0].mxu0
        %2646 = vmatprep.mubr.f32.mxu0 0.0
        %2647 = vmatmul.mubr.f32.gmra.mrb[0].mxu0 %v2550
        %v2648 = vpop.f32.mrb[0].mxu0
        %v2649 = vadd.f32 0.0, %v2648
        %v2650 = vpop.f32.mrb[0].mxu0
        %2651 = vmatprep.mubr.f32.mxu0 0.0
        %2652 = vmatmul.mubr.f32.gmra.mrb[0].mxu0 %v2551
        %v2653 = vpop.f32.mrb[0].mxu0
        %v2654 = vadd.f32 0.0, %v2653
        %v2655 = vpop.f32.mrb[0].mxu0
        %2656 = vmatprep.mubr.f32.mxu0 0.0
        %2657 = vmatmul.mubr.f32.gmra.mrb[0].mxu0 %v2552
        %v2658 = vpop.f32.mrb[0].mxu0
        %v2659 = vadd.f32 0.0, %v2658
        %v2660 = vpop.f32.mrb[0].mxu0
        %2661 = vmatprep.mubr.f32.mxu0 0.0
        %2662 = vmatmul.mubr.f32.gmra.mrb[0].mxu0 %v2553
        %v2663 = vpop.f32.mrb[0].mxu0
        %v2664 = vadd.f32 0.0, %v2663
        %v2665 = vpop.f32.mrb[0].mxu0
        %2666 = vmatprep.mubr.f32.mxu0 0.0
        %2667 = vmatmul.mubr.f32.gmra.mrb[0].mxu0 %v2554
        %v2668 = vpop.f32.mrb[0].mxu0
        %v2669 = vadd.f32 0.0, %v2668
        %v2670 = vpop.f32.mrb[0].mxu0
        %2671 = vmatprep.mubr.f32.mxu0 0.0
        %2672 = vmatmul.mubr.f32.gmra.mrb[0].mxu0 %v2555
        %v2673 = vpop.f32.mrb[0].mxu0
        %v2674 = vadd.f32 0.0, %v2673
        %v2675 = vpop.f32.mrb[0].mxu0
        %2676 = vdwg.mxu0
        %v2677 = vmul.f32 %v1032, %v2392
        %v2678 = vmul.f32 %v1032, %v2393
        %v2679 = vmul.f32 %v1032, %v2394
        %v2680 = vmul.f32 %v1032, %v2395
        %v2681 = vmul.f32 %v1032, %v2396
        %v2682 = vmul.f32 %v1032, %v2397
        %v2683 = vmul.f32 %v1032, %v2398
        %v2684 = vmul.f32 %v1032, %v2399
        %v2685 = vmul.f32 %v1037, %v2508
        %v2686 = vmul.f32 %v1037, %v2509
        %v2687 = vmul.f32 %v1037, %v2510
        %v2688 = vmul.f32 %v1037, %v2511
        %v2689 = vmul.f32 %v1037, %v2512
        %v2690 = vmul.f32 %v1037, %v2513
        %v2691 = vmul.f32 %v1037, %v2514
        %v2692 = vmul.f32 %v1037, %v2515
        %v2693 = vadd.f32 %v2677, %v2685
        %v2694 = vadd.f32 %v2678, %v2686
        %v2695 = vadd.f32 %v2679, %v2687
        %v2696 = vadd.f32 %v2680, %v2688
        %v2697 = vadd.f32 %v2681, %v2689
        %v2698 = vadd.f32 %v2682, %v2690
        %v2699 = vadd.f32 %v2683, %v2691
        %v2700 = vadd.f32 %v2684, %v2692
        %v2701 = vmul.f32 %v2639, %v2693
        %v2702 = vmul.f32 %v2644, %v2694
        %v2703 = vmul.f32 %v2649, %v2695
        %v2704 = vmul.f32 %v2654, %v2696
        %v2705 = vmul.f32 %v2659, %v2697
        %v2706 = vmul.f32 %v2664, %v2698
        %v2707 = vmul.f32 %v2669, %v2699
        %v2708 = vmul.f32 %v2674, %v2700
        %v2709 = vadd.f32 %v2701, %v772
        %v2710 = vadd.f32 %v2702, %v777
        %v2711 = vadd.f32 %v2703, %v782
        %v2712 = vadd.f32 %v2704, %v787
        %v2713 = vadd.f32 %v2705, %v792
        %v2714 = vadd.f32 %v2706, %v797
        %v2715 = vadd.f32 %v2707, %v802
        %v2716 = vadd.f32 %v2708, %v807
        %v2717 = vmax.f32 %v2709, 0.0
        %v2718 = vmax.f32 %v2710, 0.0
        %v2719 = vmax.f32 %v2711, 0.0
        %v2720 = vmax.f32 %v2712, 0.0
        %v2721 = vmax.f32 %v2713, 0.0
        %v2722 = vmax.f32 %v2714, 0.0
        %v2723 = vmax.f32 %v2715, 0.0
        %v2724 = vmax.f32 %v2716, 0.0
        %v2725 = vsel %vm295, %v2717, 0.0
        %2726 = vadd.xlane.f32.xlu0 %v2725
        %v2727 = vpop.xlane.xlu0 %2726
        %v2728 = vsel %vm295, %v2718, 0.0
        %2729 = vadd.xlane.f32.xlu0 %v2728
        %v2730 = vpop.xlane.xlu0 %2729
        %v2731 = vsel %vm295, %v2719, 0.0
        %2732 = vadd.xlane.f32.xlu0 %v2731
        %v2733 = vpop.xlane.xlu0 %2732
        %v2734 = vsel %vm295, %v2720, 0.0
        %2735 = vadd.xlane.f32.xlu0 %v2734
        %v2736 = vpop.xlane.xlu0 %2735
        %v2737 = vsel %vm295, %v2721, 0.0
        %2738 = vadd.xlane.f32.xlu0 %v2737
        %v2739 = vpop.xlane.xlu0 %2738
        %v2740 = vsel %vm295, %v2722, 0.0
        %2741 = vadd.xlane.f32.xlu0 %v2740
        %v2742 = vpop.xlane.xlu0 %2741
        %v2743 = vsel %vm295, %v2723, 0.0
        %2744 = vadd.xlane.f32.xlu0 %v2743
        %v2745 = vpop.xlane.xlu0 %2744
        %v2746 = vsel %vm295, %v2724, 0.0
        %2747 = vadd.xlane.f32.xlu0 %v2746
        %v2748 = vpop.xlane.xlu0 %2747
        %v2749 = vmul.f32 %v2727, %v1520
        %v2750 = vmul.f32 %v2730, %v1520
        %v2751 = vmul.f32 %v2733, %v1520
        %v2752 = vmul.f32 %v2736, %v1520
        %v2753 = vmul.f32 %v2739, %v1520
        %v2754 = vmul.f32 %v2742, %v1520
        %v2755 = vmul.f32 %v2745, %v1520
        %v2756 = vmul.f32 %v2748, %v1520
        %v2757 = vsub.f32 %v2717, %v2749
        %v2758 = vsub.f32 %v2718, %v2750
        %v2759 = vsub.f32 %v2719, %v2751
        %v2760 = vsub.f32 %v2720, %v2752
        %v2761 = vsub.f32 %v2721, %v2753
        %v2762 = vsub.f32 %v2722, %v2754
        %v2763 = vsub.f32 %v2723, %v2755
        %v2764 = vsub.f32 %v2724, %v2756
        %v2765 = vmul.f32 %v2757, %v2757
        %v2766 = vmul.f32 %v2758, %v2758
        %v2767 = vmul.f32 %v2759, %v2759
        %v2768 = vmul.f32 %v2760, %v2760
        %v2769 = vmul.f32 %v2761, %v2761
        %v2770 = vmul.f32 %v2762, %v2762
        %v2771 = vmul.f32 %v2763, %v2763
        %v2772 = vmul.f32 %v2764, %v2764
        %v2773 = vsel %vm295, %v2765, 0.0
        %2774 = vadd.xlane.f32.xlu0 %v2773
        %v2775 = vpop.xlane.xlu0 %2774
        %v2776 = vsel %vm295, %v2766, 0.0
        %2777 = vadd.xlane.f32.xlu0 %v2776
        %v2778 = vpop.xlane.xlu0 %2777
        %v2779 = vsel %vm295, %v2767, 0.0
        %2780 = vadd.xlane.f32.xlu0 %v2779
        %v2781 = vpop.xlane.xlu0 %2780
        %v2782 = vsel %vm295, %v2768, 0.0
        %2783 = vadd.xlane.f32.xlu0 %v2782
        %v2784 = vpop.xlane.xlu0 %2783
        %v2785 = vsel %vm295, %v2769, 0.0
        %2786 = vadd.xlane.f32.xlu0 %v2785
        %v2787 = vpop.xlane.xlu0 %2786
        %v2788 = vsel %vm295, %v2770, 0.0
        %2789 = vadd.xlane.f32.xlu0 %v2788
        %v2790 = vpop.xlane.xlu0 %2789
        %v2791 = vsel %vm295, %v2771, 0.0
        %2792 = vadd.xlane.f32.xlu0 %v2791
        %v2793 = vpop.xlane.xlu0 %2792
        %v2794 = vsel %vm295, %v2772, 0.0
        %2795 = vadd.xlane.f32.xlu0 %v2794
        %v2796 = vpop.xlane.xlu0 %2795
        %v2797 = vmul.f32 %v2775, %v1520
        %v2798 = vmul.f32 %v2778, %v1520
        %v2799 = vmul.f32 %v2781, %v1520
        %v2800 = vmul.f32 %v2784, %v1520
        %v2801 = vmul.f32 %v2787, %v1520
        %v2802 = vmul.f32 %v2790, %v1520
        %v2803 = vmul.f32 %v2793, %v1520
        %v2804 = vmul.f32 %v2796, %v1520
        %v2805 = vadd.f32 %v2797, 1e-09
        %v2806 = vadd.f32 %v2798, 1e-09
        %v2807 = vadd.f32 %v2799, 1e-09
        %v2808 = vadd.f32 %v2800, 1e-09
        %v2809 = vadd.f32 %v2801, 1e-09
        %v2810 = vadd.f32 %v2802, 1e-09
        %v2811 = vadd.f32 %v2803, 1e-09
        %v2812 = vadd.f32 %v2804, 1e-09
        %v2813 = vmul.f32 %v2757, %v1588
        %v2814 = vmul.f32 %v2758, %v1588
        %v2815 = vmul.f32 %v2759, %v1588
        %v2816 = vmul.f32 %v2760, %v1588
        %v2817 = vmul.f32 %v2761, %v1588
        %v2818 = vmul.f32 %v2762, %v1588
        %v2819 = vmul.f32 %v2763, %v1588
        %v2820 = vmul.f32 %v2764, %v1588
        %v2821 = vrsqrt.pop %v2805
        %v2822 = vrsqrt.pop %v2806
        %v2823 = vrsqrt.pop %v2807
        %v2824 = vrsqrt.pop %v2808
        %v2825 = vrsqrt.pop %v2809
        %v2826 = vrsqrt.pop %v2810
        %v2827 = vrsqrt.pop %v2811
        %v2828 = vrsqrt.pop %v2812
        %v2829 = vmul.f32 %v2813, %v2821
        %v2830 = vmul.f32 %v2814, %v2822
        %v2831 = vmul.f32 %v2815, %v2823
        %v2832 = vmul.f32 %v2816, %v2824
        %v2833 = vmul.f32 %v2817, %v2825
        %v2834 = vmul.f32 %v2818, %v2826
        %v2835 = vmul.f32 %v2819, %v2827
        %v2836 = vmul.f32 %v2820, %v2828
        %v2837 = vadd.f32 %v2829, %v1616
        %v2838 = vadd.f32 %v2830, %v1616
        %v2839 = vadd.f32 %v2831, %v1616
        %v2840 = vadd.f32 %v2832, %v1616
        %v2841 = vadd.f32 %v2833, %v1616
        %v2842 = vadd.f32 %v2834, %v1616
        %v2843 = vadd.f32 %v2835, %v1616
        %v2844 = vadd.f32 %v2836, %v1616
        %s2845 = scalar_lea.vmem %s248, 192
        %v2846 = vld [vmem:[%s2845] sm:$0xff]
        %v2847 = vld [vmem:[%s2845 + $0x8] sm:$0xff]
        %v2848 = vld [vmem:[%s2845 + $0x10] sm:$0xff]
        %v2849 = vld [vmem:[%s2845 + $0x18] sm:$0xff]
        %v2850 = vld [vmem:[%s2845 + $0x20] sm:$0xff]
        %v2851 = vld [vmem:[%s2845 + $0x28] sm:$0xff]
        %v2852 = vld [vmem:[%s2845 + $0x30] sm:$0xff]
        %v2853 = vld [vmem:[%s2845 + $0x38] sm:$0xff]
        %vm2854 = vcmp.gt.f32.partialorder %v2846, 0.0
        %vm2855 = vcmp.gt.f32.partialorder %v2847, 0.0
        %vm2856 = vcmp.gt.f32.partialorder %v2848, 0.0
        %vm2857 = vcmp.gt.f32.partialorder %v2849, 0.0
        %vm2858 = vcmp.gt.f32.partialorder %v2850, 0.0
        %vm2859 = vcmp.gt.f32.partialorder %v2851, 0.0
        %vm2860 = vcmp.gt.f32.partialorder %v2852, 0.0
        %vm2861 = vcmp.gt.f32.partialorder %v2853, 0.0
        %2863 = vrot.lane.b32.xlu0 %v2287, 64
        %v2864 = vpop.permute.xlu0 %2863
        %v2866 = vsel %vm2854, %v2864, -1e+30
        %v2867 = vsel %vm2855, %v2864, -1e+30
        %v2868 = vsel %vm2856, %v2864, -1e+30
        %v2869 = vsel %vm2857, %v2864, -1e+30
        %v2870 = vsel %vm2858, %v2864, -1e+30
        %v2871 = vsel %vm2859, %v2864, -1e+30
        %v2872 = vsel %vm2860, %v2864, -1e+30
        %v2873 = vsel %vm2861, %v2864, -1e+30
        %v2874 = vsel %vm1066, %v2866, -inf
        %2875 = vmax.xlane.f32.xlu0 %v2874
        %v2876 = vpop.xlane.xlu0 %2875
        %v2877 = vsel %vm1066, %v2867, -inf
        %2878 = vmax.xlane.f32.xlu0 %v2877
        %v2879 = vpop.xlane.xlu0 %2878
        %v2880 = vsel %vm1066, %v2868, -inf
        %2881 = vmax.xlane.f32.xlu0 %v2880
        %v2882 = vpop.xlane.xlu0 %2881
        %v2883 = vsel %vm1066, %v2869, -inf
        %2884 = vmax.xlane.f32.xlu0 %v2883
        %v2885 = vpop.xlane.xlu0 %2884
        %v2886 = vsel %vm1066, %v2870, -inf
        %2887 = vmax.xlane.f32.xlu0 %v2886
        %v2888 = vpop.xlane.xlu0 %2887
        %v2889 = vsel %vm1066, %v2871, -inf
        %2890 = vmax.xlane.f32.xlu0 %v2889
        %v2891 = vpop.xlane.xlu0 %2890
        %v2892 = vsel %vm1066, %v2872, -inf
        %2893 = vmax.xlane.f32.xlu0 %v2892
        %v2894 = vpop.xlane.xlu0 %2893
        %v2895 = vsel %vm1066, %v2873, -inf
        %2896 = vmax.xlane.f32.xlu0 %v2895
        %v2897 = vpop.xlane.xlu0 %2896
        %v2898 = vsub.f32 %v2287, %v2876
        %v2899 = vsub.f32 %v2287, %v2879
        %v2900 = vsub.f32 %v2287, %v2882
        %v2901 = vsub.f32 %v2287, %v2885
        %v2902 = vsub.f32 %v2287, %v2888
        %v2903 = vsub.f32 %v2287, %v2891
        %v2904 = vsub.f32 %v2287, %v2894
        %v2905 = vsub.f32 %v2287, %v2897
        %v2906 = vmul.f32 %v2898, 1.442695
        %v2907 = vpow.pop %v2906
        %v2908 = vmul.f32 %v2899, 1.442695
        %v2909 = vpow.pop %v2908
        %v2910 = vmul.f32 %v2900, 1.442695
        %v2911 = vpow.pop %v2910
        %v2912 = vmul.f32 %v2901, 1.442695
        %v2913 = vpow.pop %v2912
        %v2914 = vmul.f32 %v2902, 1.442695
        %v2915 = vpow.pop %v2914
        %v2916 = vmul.f32 %v2903, 1.442695
        %v2917 = vpow.pop %v2916
        %v2918 = vmul.f32 %v2904, 1.442695
        %v2919 = vpow.pop %v2918
        %v2920 = vmul.f32 %v2905, 1.442695
        %v2921 = vpow.pop %v2920
        %2930 = vrot.lane.b32.xlu0 %v2907, 64
        %v2931 = vpop.permute.xlu0 %2930
        %2932 = vrot.lane.b32.xlu0 %v2909, 64
        %v2933 = vpop.permute.xlu0 %2932
        %2934 = vrot.lane.b32.xlu0 %v2911, 64
        %v2935 = vpop.permute.xlu0 %2934
        %2936 = vrot.lane.b32.xlu0 %v2913, 64
        %v2937 = vpop.permute.xlu0 %2936
        %2938 = vrot.lane.b32.xlu0 %v2915, 64
        %v2939 = vpop.permute.xlu0 %2938
        %2940 = vrot.lane.b32.xlu0 %v2917, 64
        %v2941 = vpop.permute.xlu0 %2940
        %2942 = vrot.lane.b32.xlu0 %v2919, 64
        %v2943 = vpop.permute.xlu0 %2942
        %2944 = vrot.lane.b32.xlu0 %v2921, 64
        %v2945 = vpop.permute.xlu0 %2944
        %v2954 = vsel %vm2854, %v2931, 0.0
        %v2955 = vsel %vm2855, %v2933, 0.0
        %v2956 = vsel %vm2856, %v2935, 0.0
        %v2957 = vsel %vm2857, %v2937, 0.0
        %v2958 = vsel %vm2858, %v2939, 0.0
        %v2959 = vsel %vm2859, %v2941, 0.0
        %v2960 = vsel %vm2860, %v2943, 0.0
        %v2961 = vsel %vm2861, %v2945, 0.0
        %v2962 = vmul.f32 %v2954, %v2846
        %v2963 = vmul.f32 %v2955, %v2847
        %v2964 = vmul.f32 %v2956, %v2848
        %v2965 = vmul.f32 %v2957, %v2849
        %v2966 = vmul.f32 %v2958, %v2850
        %v2967 = vmul.f32 %v2959, %v2851
        %v2968 = vmul.f32 %v2960, %v2852
        %v2969 = vmul.f32 %v2961, %v2853
        %v2970 = vsel %vm1066, %v2962, 0.0
        %2971 = vadd.xlane.f32.xlu0 %v2970
        %v2972 = vpop.xlane.xlu0 %2971
        %v2973 = vsel %vm1066, %v2963, 0.0
        %2974 = vadd.xlane.f32.xlu0 %v2973
        %v2975 = vpop.xlane.xlu0 %2974
        %v2976 = vsel %vm1066, %v2964, 0.0
        %2977 = vadd.xlane.f32.xlu0 %v2976
        %v2978 = vpop.xlane.xlu0 %2977
        %v2979 = vsel %vm1066, %v2965, 0.0
        %2980 = vadd.xlane.f32.xlu0 %v2979
        %v2981 = vpop.xlane.xlu0 %2980
        %v2982 = vsel %vm1066, %v2966, 0.0
        %2983 = vadd.xlane.f32.xlu0 %v2982
        %v2984 = vpop.xlane.xlu0 %2983
        %v2985 = vsel %vm1066, %v2967, 0.0
        %2986 = vadd.xlane.f32.xlu0 %v2985
        %v2987 = vpop.xlane.xlu0 %2986
        %v2988 = vsel %vm1066, %v2968, 0.0
        %2989 = vadd.xlane.f32.xlu0 %v2988
        %v2990 = vpop.xlane.xlu0 %2989
        %v2991 = vsel %vm1066, %v2969, 0.0
        %2992 = vadd.xlane.f32.xlu0 %v2991
        %v2993 = vpop.xlane.xlu0 %2992
        %v2994 = vmax.f32 %v2972, 1e-10
        %v2995 = vmax.f32 %v2975, 1e-10
        %v2996 = vmax.f32 %v2978, 1e-10
        %v2997 = vmax.f32 %v2981, 1e-10
        %v2998 = vmax.f32 %v2984, 1e-10
        %v2999 = vmax.f32 %v2987, 1e-10
        %v3000 = vmax.f32 %v2990, 1e-10
        %v3001 = vmax.f32 %v2993, 1e-10
        %v3002 = vrcp.pop %v2994
        %v3003 = vrcp.pop %v2995
        %v3004 = vrcp.pop %v2996
        %v3005 = vrcp.pop %v2997
        %v3006 = vrcp.pop %v2998
        %v3007 = vrcp.pop %v2999
        %v3008 = vrcp.pop %v3000
        %v3009 = vrcp.pop %v3001
        %3011 = vrot.lane.b32.xlu0 %v2403, 64
        %v3012 = vpop.permute.xlu0 %3011
        %v3014 = vsel %vm2854, %v3012, -1e+30
        %v3015 = vsel %vm2855, %v3012, -1e+30
        %v3016 = vsel %vm2856, %v3012, -1e+30
        %v3017 = vsel %vm2857, %v3012, -1e+30
        %v3018 = vsel %vm2858, %v3012, -1e+30
        %v3019 = vsel %vm2859, %v3012, -1e+30
        %v3020 = vsel %vm2860, %v3012, -1e+30
        %v3021 = vsel %vm2861, %v3012, -1e+30
        %v3022 = vsel %vm1066, %v3014, -inf
        %3023 = vmax.xlane.f32.xlu0 %v3022
        %v3024 = vpop.xlane.xlu0 %3023
        %v3025 = vsel %vm1066, %v3015, -inf
        %3026 = vmax.xlane.f32.xlu0 %v3025
        %v3027 = vpop.xlane.xlu0 %3026
        %v3028 = vsel %vm1066, %v3016, -inf
        %3029 = vmax.xlane.f32.xlu0 %v3028
        %v3030 = vpop.xlane.xlu0 %3029
        %v3031 = vsel %vm1066, %v3017, -inf
        %3032 = vmax.xlane.f32.xlu0 %v3031
        %v3033 = vpop.xlane.xlu0 %3032
        %v3034 = vsel %vm1066, %v3018, -inf
        %3035 = vmax.xlane.f32.xlu0 %v3034
        %v3036 = vpop.xlane.xlu0 %3035
        %v3037 = vsel %vm1066, %v3019, -inf
        %3038 = vmax.xlane.f32.xlu0 %v3037
        %v3039 = vpop.xlane.xlu0 %3038
        %v3040 = vsel %vm1066, %v3020, -inf
        %3041 = vmax.xlane.f32.xlu0 %v3040
        %v3042 = vpop.xlane.xlu0 %3041
        %v3043 = vsel %vm1066, %v3021, -inf
        %3044 = vmax.xlane.f32.xlu0 %v3043
        %v3045 = vpop.xlane.xlu0 %3044
        %v3046 = vsub.f32 %v2403, %v3024
        %v3047 = vsub.f32 %v2403, %v3027
        %v3048 = vsub.f32 %v2403, %v3030
        %v3049 = vsub.f32 %v2403, %v3033
        %v3050 = vsub.f32 %v2403, %v3036
        %v3051 = vsub.f32 %v2403, %v3039
        %v3052 = vsub.f32 %v2403, %v3042
        %v3053 = vsub.f32 %v2403, %v3045
        %v3054 = vmul.f32 %v3046, 1.442695
        %v3055 = vpow.pop %v3054
        %v3056 = vmul.f32 %v3047, 1.442695
        %v3057 = vpow.pop %v3056
        %v3058 = vmul.f32 %v3048, 1.442695
        %v3059 = vpow.pop %v3058
        %v3060 = vmul.f32 %v3049, 1.442695
        %v3061 = vpow.pop %v3060
        %v3062 = vmul.f32 %v3050, 1.442695
        %v3063 = vpow.pop %v3062
        %v3064 = vmul.f32 %v3051, 1.442695
        %v3065 = vpow.pop %v3064
        %v3066 = vmul.f32 %v3052, 1.442695
        %v3067 = vpow.pop %v3066
        %v3068 = vmul.f32 %v3053, 1.442695
        %v3069 = vpow.pop %v3068
        %3078 = vrot.lane.b32.xlu0 %v3055, 64
        %v3079 = vpop.permute.xlu0 %3078
        %3080 = vrot.lane.b32.xlu0 %v3057, 64
        %v3081 = vpop.permute.xlu0 %3080
        %3082 = vrot.lane.b32.xlu0 %v3059, 64
        %v3083 = vpop.permute.xlu0 %3082
        %3084 = vrot.lane.b32.xlu0 %v3061, 64
        %v3085 = vpop.permute.xlu0 %3084
        %3086 = vrot.lane.b32.xlu0 %v3063, 64
        %v3087 = vpop.permute.xlu0 %3086
        %3088 = vrot.lane.b32.xlu0 %v3065, 64
        %v3089 = vpop.permute.xlu0 %3088
        %3090 = vrot.lane.b32.xlu0 %v3067, 64
        %v3091 = vpop.permute.xlu0 %3090
        %3092 = vrot.lane.b32.xlu0 %v3069, 64
        %v3093 = vpop.permute.xlu0 %3092
        %v3102 = vsel %vm2854, %v3079, 0.0
        %v3103 = vsel %vm2855, %v3081, 0.0
        %v3104 = vsel %vm2856, %v3083, 0.0
        %v3105 = vsel %vm2857, %v3085, 0.0
        %v3106 = vsel %vm2858, %v3087, 0.0
        %v3107 = vsel %vm2859, %v3089, 0.0
        %v3108 = vsel %vm2860, %v3091, 0.0
        %v3109 = vsel %vm2861, %v3093, 0.0
        %v3110 = vmul.f32 %v3102, %v2846
        %v3111 = vmul.f32 %v3103, %v2847
        %v3112 = vmul.f32 %v3104, %v2848
        %v3113 = vmul.f32 %v3105, %v2849
        %v3114 = vmul.f32 %v3106, %v2850
        %v3115 = vmul.f32 %v3107, %v2851
        %v3116 = vmul.f32 %v3108, %v2852
        %v3117 = vmul.f32 %v3109, %v2853
        %v3118 = vsel %vm1066, %v3110, 0.0
        %3119 = vadd.xlane.f32.xlu0 %v3118
        %v3120 = vpop.xlane.xlu0 %3119
        %v3121 = vsel %vm1066, %v3111, 0.0
        %3122 = vadd.xlane.f32.xlu0 %v3121
        %v3123 = vpop.xlane.xlu0 %3122
        %v3124 = vsel %vm1066, %v3112, 0.0
        %3125 = vadd.xlane.f32.xlu0 %v3124
        %v3126 = vpop.xlane.xlu0 %3125
        %v3127 = vsel %vm1066, %v3113, 0.0
        %3128 = vadd.xlane.f32.xlu0 %v3127
        %v3129 = vpop.xlane.xlu0 %3128
        %v3130 = vsel %vm1066, %v3114, 0.0
        %3131 = vadd.xlane.f32.xlu0 %v3130
        %v3132 = vpop.xlane.xlu0 %3131
        %v3133 = vsel %vm1066, %v3115, 0.0
        %3134 = vadd.xlane.f32.xlu0 %v3133
        %v3135 = vpop.xlane.xlu0 %3134
        %v3136 = vsel %vm1066, %v3116, 0.0
        %3137 = vadd.xlane.f32.xlu0 %v3136
        %v3138 = vpop.xlane.xlu0 %3137
        %v3139 = vsel %vm1066, %v3117, 0.0
        %3140 = vadd.xlane.f32.xlu0 %v3139
        %v3141 = vpop.xlane.xlu0 %3140
        %v3142 = vmax.f32 %v3120, 1e-10
        %v3143 = vmax.f32 %v3123, 1e-10
        %v3144 = vmax.f32 %v3126, 1e-10
        %v3145 = vmax.f32 %v3129, 1e-10
        %v3146 = vmax.f32 %v3132, 1e-10
        %v3147 = vmax.f32 %v3135, 1e-10
        %v3148 = vmax.f32 %v3138, 1e-10
        %v3149 = vmax.f32 %v3141, 1e-10
        %v3150 = vrcp.pop %v3142
        %v3151 = vrcp.pop %v3143
        %v3152 = vrcp.pop %v3144
        %v3153 = vrcp.pop %v3145
        %v3154 = vrcp.pop %v3146
        %v3155 = vrcp.pop %v3147
        %v3156 = vrcp.pop %v3148
        %v3157 = vrcp.pop %v3149
        %3166 = vrot.lane.b32.xlu0 %v3110, 64
        %v3167 = vpop.permute.xlu0 %3166
        %3168 = vrot.lane.b32.xlu0 %v3111, 64
        %v3169 = vpop.permute.xlu0 %3168
        %3170 = vrot.lane.b32.xlu0 %v3112, 64
        %v3171 = vpop.permute.xlu0 %3170
        %3172 = vrot.lane.b32.xlu0 %v3113, 64
        %v3173 = vpop.permute.xlu0 %3172
        %3174 = vrot.lane.b32.xlu0 %v3114, 64
        %v3175 = vpop.permute.xlu0 %3174
        %3176 = vrot.lane.b32.xlu0 %v3115, 64
        %v3177 = vpop.permute.xlu0 %3176
        %3178 = vrot.lane.b32.xlu0 %v3116, 64
        %v3179 = vpop.permute.xlu0 %3178
        %3180 = vrot.lane.b32.xlu0 %v3117, 64
        %v3181 = vpop.permute.xlu0 %3180
        %v3190 = vsel %vm1066, %v2962, %v3167
        %v3191 = vsel %vm1066, %v2963, %v3169
        %v3192 = vsel %vm1066, %v2964, %v3171
        %v3193 = vsel %vm1066, %v2965, %v3173
        %v3194 = vsel %vm1066, %v2966, %v3175
        %v3195 = vsel %vm1066, %v2967, %v3177
        %v3196 = vsel %vm1066, %v2968, %v3179
        %v3197 = vsel %vm1066, %v2969, %v3181
        %v3198 = vmul.f32 %v579, %v1032
        %v3199 = vmul.f32 %v584, %v1032
        %v3200 = vmul.f32 %v589, %v1032
        %v3201 = vmul.f32 %v594, %v1032
        %v3202 = vmul.f32 %v599, %v1032
        %v3203 = vmul.f32 %v604, %v1032
        %v3204 = vmul.f32 %v609, %v1032
        %v3205 = vmul.f32 %v614, %v1032
        %v3206 = vmul.f32 %v579, %v1037
        %v3207 = vmul.f32 %v584, %v1037
        %v3208 = vmul.f32 %v589, %v1037
        %v3209 = vmul.f32 %v594, %v1037
        %v3210 = vmul.f32 %v599, %v1037
        %v3211 = vmul.f32 %v604, %v1037
        %v3212 = vmul.f32 %v609, %v1037
        %v3213 = vmul.f32 %v614, %v1037
        %3214 = vmatprep.subr.mxu0 0.0
        %3215 = vmatpush1.msra.mxu0 %v3198
        %3216 = vmatprep.subr.mxu0 0.0
        %3217 = vmatpush1.msra.mxu0 %v3199
        %3218 = vmatprep.subr.mxu0 0.0
        %3219 = vmatpush1.msra.mxu0 %v3200
        %3220 = vmatprep.subr.mxu0 0.0
        %3221 = vmatpush1.msra.mxu0 %v3201
        %3222 = vmatprep.subr.mxu0 0.0
        %3223 = vmatpush1.msra.mxu0 %v3202
        %3224 = vmatprep.subr.mxu0 0.0
        %3225 = vmatpush1.msra.mxu0 %v3203
        %3226 = vmatprep.subr.mxu0 0.0
        %3227 = vmatpush1.msra.mxu0 %v3204
        %3228 = vmatprep.subr.mxu0 0.0
        %3229 = vmatpush1.msra.mxu0 %v3205
        %3230 = vmatprep.subr.mxu0 0.0
        %3231 = vmatpush1.msra.mxu0 %v3206
        %3232 = vmatprep.subr.mxu0 0.0
        %3233 = vmatpush1.msra.mxu0 %v3207
        %3234 = vmatprep.subr.mxu0 0.0
        %3235 = vmatpush1.msra.mxu0 %v3208
        %3236 = vmatprep.subr.mxu0 0.0
        %3237 = vmatpush1.msra.mxu0 %v3209
        %3238 = vmatprep.subr.mxu0 0.0
        %3239 = vmatpush1.msra.mxu0 %v3210
        %3240 = vmatprep.subr.mxu0 0.0
        %3241 = vmatpush1.msra.mxu0 %v3211
        %3242 = vmatprep.subr.mxu0 0.0
        %3243 = vmatpush1.msra.mxu0 %v3212
        %3244 = vmatprep.subr.mxu0 0.0
        %3245 = vmatpush1.msra.mxu0 %v3213
        %3246 = vmatprep.subr.mxu0 0.0
        %3247 = vmatpush1.msra.mxu0 0.0
        %3248 = vmatprep.subr.mxu0 0.0
        %3249 = vmatpush1.msra.mxu0 0.0
        %3250 = vmatprep.subr.mxu0 0.0
        %3251 = vmatpush1.msra.mxu0 0.0
        %3252 = vmatprep.subr.mxu0 0.0
        %3253 = vmatpush1.msra.mxu0 0.0
        %3254 = vmatprep.subr.mxu0 0.0
        %3255 = vmatpush1.msra.mxu0 0.0
        %3256 = vmatprep.subr.mxu0 0.0
        %3257 = vmatpush1.msra.mxu0 0.0
        %3258 = vmatprep.subr.mxu0 0.0
        %3259 = vmatpush1.msra.mxu0 0.0
        %3260 = vmatprep.subr.mxu0 0.0
        %3261 = vmatpush1.msra.mxu0 0.0
        %3262 = vmatprep.subr.mxu0 0.0
        %3263 = vmatpush1.msra.mxu0 0.0
        %3264 = vmatprep.subr.mxu0 0.0
        %3265 = vmatpush1.msra.mxu0 0.0
        %3266 = vmatprep.subr.mxu0 0.0
        %3267 = vmatpush1.msra.mxu0 0.0
        %3268 = vmatprep.subr.mxu0 0.0
        %3269 = vmatpush1.msra.mxu0 0.0
        %3270 = vmatprep.subr.mxu0 0.0
        %3271 = vmatpush1.msra.mxu0 0.0
        %3272 = vmatprep.subr.mxu0 0.0
        %3273 = vmatpush1.msra.mxu0 0.0
        %3274 = vmatprep.subr.mxu0 0.0
        %3275 = vmatpush1.msra.mxu0 0.0
        %3276 = vmatprep.subr.mxu0 0.0
        %3277 = vmatpush1.msra.mxu0 0.0
        %3278 = vmatprep.mubr.f32.mxu0 0.0
        %3279 = vmatmul.mubr.f32.gmra.mrb[0].mxu0 %v3190
        %v3280 = vpop.f32.mrb[0].mxu0
        %v3281 = vadd.f32 0.0, %v3280
        %v3282 = vpop.f32.mrb[0].mxu0
        %3283 = vmatprep.mubr.f32.mxu0 0.0
        %3284 = vmatmul.mubr.f32.gmra.mrb[0].mxu0 %v3191
        %v3285 = vpop.f32.mrb[0].mxu0
        %v3286 = vadd.f32 0.0, %v3285
        %v3287 = vpop.f32.mrb[0].mxu0
        %3288 = vmatprep.mubr.f32.mxu0 0.0
        %3289 = vmatmul.mubr.f32.gmra.mrb[0].mxu0 %v3192
        %v3290 = vpop.f32.mrb[0].mxu0
        %v3291 = vadd.f32 0.0, %v3290
        %v3292 = vpop.f32.mrb[0].mxu0
        %3293 = vmatprep.mubr.f32.mxu0 0.0
        %3294 = vmatmul.mubr.f32.gmra.mrb[0].mxu0 %v3193
        %v3295 = vpop.f32.mrb[0].mxu0
        %v3296 = vadd.f32 0.0, %v3295
        %v3297 = vpop.f32.mrb[0].mxu0
        %3298 = vmatprep.mubr.f32.mxu0 0.0
        %3299 = vmatmul.mubr.f32.gmra.mrb[0].mxu0 %v3194
        %v3300 = vpop.f32.mrb[0].mxu0
        %v3301 = vadd.f32 0.0, %v3300
        %v3302 = vpop.f32.mrb[0].mxu0
        %3303 = vmatprep.mubr.f32.mxu0 0.0
        %3304 = vmatmul.mubr.f32.gmra.mrb[0].mxu0 %v3195
        %v3305 = vpop.f32.mrb[0].mxu0
        %v3306 = vadd.f32 0.0, %v3305
        %v3307 = vpop.f32.mrb[0].mxu0
        %3308 = vmatprep.mubr.f32.mxu0 0.0
        %3309 = vmatmul.mubr.f32.gmra.mrb[0].mxu0 %v3196
        %v3310 = vpop.f32.mrb[0].mxu0
        %v3311 = vadd.f32 0.0, %v3310
        %v3312 = vpop.f32.mrb[0].mxu0
        %3313 = vmatprep.mubr.f32.mxu0 0.0
        %3314 = vmatmul.mubr.f32.gmra.mrb[0].mxu0 %v3197
        %v3315 = vpop.f32.mrb[0].mxu0
        %v3316 = vadd.f32 0.0, %v3315
        %v3317 = vpop.f32.mrb[0].mxu0
        %3318 = vdwg.mxu0
        %v3319 = vmul.f32 %v1032, %v3002
        %v3320 = vmul.f32 %v1032, %v3003
        %v3321 = vmul.f32 %v1032, %v3004
        %v3322 = vmul.f32 %v1032, %v3005
        %v3323 = vmul.f32 %v1032, %v3006
        %v3324 = vmul.f32 %v1032, %v3007
        %v3325 = vmul.f32 %v1032, %v3008
        %v3326 = vmul.f32 %v1032, %v3009
        %v3327 = vmul.f32 %v1037, %v3150
        %v3328 = vmul.f32 %v1037, %v3151
        %v3329 = vmul.f32 %v1037, %v3152
        %v3330 = vmul.f32 %v1037, %v3153
        %v3331 = vmul.f32 %v1037, %v3154
        %v3332 = vmul.f32 %v1037, %v3155
        %v3333 = vmul.f32 %v1037, %v3156
        %v3334 = vmul.f32 %v1037, %v3157
        %v3335 = vadd.f32 %v3319, %v3327
        %v3336 = vadd.f32 %v3320, %v3328
        %v3337 = vadd.f32 %v3321, %v3329
        %v3338 = vadd.f32 %v3322, %v3330
        %v3339 = vadd.f32 %v3323, %v3331
        %v3340 = vadd.f32 %v3324, %v3332
        %v3341 = vadd.f32 %v3325, %v3333
        %v3342 = vadd.f32 %v3326, %v3334
        %v3343 = vmul.f32 %v3281, %v3335
        %v3344 = vmul.f32 %v3286, %v3336
        %v3345 = vmul.f32 %v3291, %v3337
        %v3346 = vmul.f32 %v3296, %v3338
        %v3347 = vmul.f32 %v3301, %v3339
        %v3348 = vmul.f32 %v3306, %v3340
        %v3349 = vmul.f32 %v3311, %v3341
        %v3350 = vmul.f32 %v3316, %v3342
        %v3351 = vadd.f32 %v3343, %v812
        %v3352 = vadd.f32 %v3344, %v817
        %v3353 = vadd.f32 %v3345, %v822
        %v3354 = vadd.f32 %v3346, %v827
        %v3355 = vadd.f32 %v3347, %v832
        %v3356 = vadd.f32 %v3348, %v837
        %v3357 = vadd.f32 %v3349, %v842
        %v3358 = vadd.f32 %v3350, %v847
        %v3359 = vmax.f32 %v3351, 0.0
        %v3360 = vmax.f32 %v3352, 0.0
        %v3361 = vmax.f32 %v3353, 0.0
        %v3362 = vmax.f32 %v3354, 0.0
        %v3363 = vmax.f32 %v3355, 0.0
        %v3364 = vmax.f32 %v3356, 0.0
        %v3365 = vmax.f32 %v3357, 0.0
        %v3366 = vmax.f32 %v3358, 0.0
        %v3367 = vsel %vm295, %v3359, 0.0
        %3368 = vadd.xlane.f32.xlu0 %v3367
        %v3369 = vpop.xlane.xlu0 %3368
        %v3370 = vsel %vm295, %v3360, 0.0
        %3371 = vadd.xlane.f32.xlu0 %v3370
        %v3372 = vpop.xlane.xlu0 %3371
        %v3373 = vsel %vm295, %v3361, 0.0
        %3374 = vadd.xlane.f32.xlu0 %v3373
        %v3375 = vpop.xlane.xlu0 %3374
        %v3376 = vsel %vm295, %v3362, 0.0
        %3377 = vadd.xlane.f32.xlu0 %v3376
        %v3378 = vpop.xlane.xlu0 %3377
        %v3379 = vsel %vm295, %v3363, 0.0
        %3380 = vadd.xlane.f32.xlu0 %v3379
        %v3381 = vpop.xlane.xlu0 %3380
        %v3382 = vsel %vm295, %v3364, 0.0
        %3383 = vadd.xlane.f32.xlu0 %v3382
        %v3384 = vpop.xlane.xlu0 %3383
        %v3385 = vsel %vm295, %v3365, 0.0
        %3386 = vadd.xlane.f32.xlu0 %v3385
        %v3387 = vpop.xlane.xlu0 %3386
        %v3388 = vsel %vm295, %v3366, 0.0
        %3389 = vadd.xlane.f32.xlu0 %v3388
        %v3390 = vpop.xlane.xlu0 %3389
        %v3391 = vmul.f32 %v3369, %v1520
        %v3392 = vmul.f32 %v3372, %v1520
        %v3393 = vmul.f32 %v3375, %v1520
        %v3394 = vmul.f32 %v3378, %v1520
        %v3395 = vmul.f32 %v3381, %v1520
        %v3396 = vmul.f32 %v3384, %v1520
        %v3397 = vmul.f32 %v3387, %v1520
        %v3398 = vmul.f32 %v3390, %v1520
        %v3399 = vsub.f32 %v3359, %v3391
        %v3400 = vsub.f32 %v3360, %v3392
        %v3401 = vsub.f32 %v3361, %v3393
        %v3402 = vsub.f32 %v3362, %v3394
        %v3403 = vsub.f32 %v3363, %v3395
        %v3404 = vsub.f32 %v3364, %v3396
        %v3405 = vsub.f32 %v3365, %v3397
        %v3406 = vsub.f32 %v3366, %v3398
        %v3407 = vmul.f32 %v3399, %v3399
        %v3408 = vmul.f32 %v3400, %v3400
        %v3409 = vmul.f32 %v3401, %v3401
        %v3410 = vmul.f32 %v3402, %v3402
        %v3411 = vmul.f32 %v3403, %v3403
        %v3412 = vmul.f32 %v3404, %v3404
        %v3413 = vmul.f32 %v3405, %v3405
        %v3414 = vmul.f32 %v3406, %v3406
        %v3415 = vsel %vm295, %v3407, 0.0
        %3416 = vadd.xlane.f32.xlu0 %v3415
        %v3417 = vpop.xlane.xlu0 %3416
        %v3418 = vsel %vm295, %v3408, 0.0
        %3419 = vadd.xlane.f32.xlu0 %v3418
        %v3420 = vpop.xlane.xlu0 %3419
        %v3421 = vsel %vm295, %v3409, 0.0
        %3422 = vadd.xlane.f32.xlu0 %v3421
        %v3423 = vpop.xlane.xlu0 %3422
        %v3424 = vsel %vm295, %v3410, 0.0
        %3425 = vadd.xlane.f32.xlu0 %v3424
        %v3426 = vpop.xlane.xlu0 %3425
        %v3427 = vsel %vm295, %v3411, 0.0
        %3428 = vadd.xlane.f32.xlu0 %v3427
        %v3429 = vpop.xlane.xlu0 %3428
        %v3430 = vsel %vm295, %v3412, 0.0
        %3431 = vadd.xlane.f32.xlu0 %v3430
        %v3432 = vpop.xlane.xlu0 %3431
        %v3433 = vsel %vm295, %v3413, 0.0
        %3434 = vadd.xlane.f32.xlu0 %v3433
        %v3435 = vpop.xlane.xlu0 %3434
        %v3436 = vsel %vm295, %v3414, 0.0
        %3437 = vadd.xlane.f32.xlu0 %v3436
        %v3438 = vpop.xlane.xlu0 %3437
        %v3439 = vmul.f32 %v3417, %v1520
        %v3440 = vmul.f32 %v3420, %v1520
        %v3441 = vmul.f32 %v3423, %v1520
        %v3442 = vmul.f32 %v3426, %v1520
        %v3443 = vmul.f32 %v3429, %v1520
        %v3444 = vmul.f32 %v3432, %v1520
        %v3445 = vmul.f32 %v3435, %v1520
        %v3446 = vmul.f32 %v3438, %v1520
        %v3447 = vadd.f32 %v3439, 1e-09
        %v3448 = vadd.f32 %v3440, 1e-09
        %v3449 = vadd.f32 %v3441, 1e-09
        %v3450 = vadd.f32 %v3442, 1e-09
        %v3451 = vadd.f32 %v3443, 1e-09
        %v3452 = vadd.f32 %v3444, 1e-09
        %v3453 = vadd.f32 %v3445, 1e-09
        %v3454 = vadd.f32 %v3446, 1e-09
        %v3455 = vmul.f32 %v3399, %v1588
        %v3456 = vmul.f32 %v3400, %v1588
        %v3457 = vmul.f32 %v3401, %v1588
        %v3458 = vmul.f32 %v3402, %v1588
        %v3459 = vmul.f32 %v3403, %v1588
        %v3460 = vmul.f32 %v3404, %v1588
        %v3461 = vmul.f32 %v3405, %v1588
        %v3462 = vmul.f32 %v3406, %v1588
        %v3463 = vrsqrt.pop %v3447
        %v3464 = vrsqrt.pop %v3448
        %v3465 = vrsqrt.pop %v3449
        %v3466 = vrsqrt.pop %v3450
        %v3467 = vrsqrt.pop %v3451
        %v3468 = vrsqrt.pop %v3452
        %v3469 = vrsqrt.pop %v3453
        %v3470 = vrsqrt.pop %v3454
        %v3471 = vmul.f32 %v3455, %v3463
        %v3472 = vmul.f32 %v3456, %v3464
        %v3473 = vmul.f32 %v3457, %v3465
        %v3474 = vmul.f32 %v3458, %v3466
        %v3475 = vmul.f32 %v3459, %v3467
        %v3476 = vmul.f32 %v3460, %v3468
        %v3477 = vmul.f32 %v3461, %v3469
        %v3478 = vmul.f32 %v3462, %v3470
        %v3479 = vadd.f32 %v3471, %v1616
        %v3480 = vadd.f32 %v3472, %v1616
        %v3481 = vadd.f32 %v3473, %v1616
        %v3482 = vadd.f32 %v3474, %v1616
        %v3483 = vadd.f32 %v3475, %v1616
        %v3484 = vadd.f32 %v3476, %v1616
        %v3485 = vadd.f32 %v3477, %v1616
        %v3486 = vadd.f32 %v3478, %v1616
        %3495 = vrot.lane.b32.xlu0 %v2259, 32
        %v3496 = vpop.permute.xlu0 %3495
        %3497 = vrot.lane.b32.xlu0 %v2260, 32
        %v3498 = vpop.permute.xlu0 %3497
        %3499 = vrot.lane.b32.xlu0 %v2261, 32
        %v3500 = vpop.permute.xlu0 %3499
        %3501 = vrot.lane.b32.xlu0 %v2262, 32
        %v3502 = vpop.permute.xlu0 %3501
        %3503 = vrot.lane.b32.xlu0 %v2263, 32
        %v3504 = vpop.permute.xlu0 %3503
        %3505 = vrot.lane.b32.xlu0 %v2264, 32
        %v3506 = vpop.permute.xlu0 %3505
        %3507 = vrot.lane.b32.xlu0 %v2265, 32
        %v3508 = vpop.permute.xlu0 %3507
        %3509 = vrot.lane.b32.xlu0 %v2266, 32
        %v3510 = vpop.permute.xlu0 %3509
        %3527 = vrot.lane.b32.xlu0 %v2837, 64
        %v3528 = vpop.permute.xlu0 %3527
        %3529 = vrot.lane.b32.xlu0 %v2838, 64
        %v3530 = vpop.permute.xlu0 %3529
        %3531 = vrot.lane.b32.xlu0 %v2839, 64
        %v3532 = vpop.permute.xlu0 %3531
        %3533 = vrot.lane.b32.xlu0 %v2840, 64
        %v3534 = vpop.permute.xlu0 %3533
        %3535 = vrot.lane.b32.xlu0 %v2841, 64
        %v3536 = vpop.permute.xlu0 %3535
        %3537 = vrot.lane.b32.xlu0 %v2842, 64
        %v3538 = vpop.permute.xlu0 %3537
        %3539 = vrot.lane.b32.xlu0 %v2843, 64
        %v3540 = vpop.permute.xlu0 %3539
        %3541 = vrot.lane.b32.xlu0 %v2844, 64
        %v3542 = vpop.permute.xlu0 %3541
        %3559 = vrot.lane.b32.xlu0 %v3479, 96
        %v3560 = vpop.permute.xlu0 %3559
        %3561 = vrot.lane.b32.xlu0 %v3480, 96
        %v3562 = vpop.permute.xlu0 %3561
        %3563 = vrot.lane.b32.xlu0 %v3481, 96
        %v3564 = vpop.permute.xlu0 %3563
        %3565 = vrot.lane.b32.xlu0 %v3482, 96
        %v3566 = vpop.permute.xlu0 %3565
        %3567 = vrot.lane.b32.xlu0 %v3483, 96
        %v3568 = vpop.permute.xlu0 %3567
        %3569 = vrot.lane.b32.xlu0 %v3484, 96
        %v3570 = vpop.permute.xlu0 %3569
        %3571 = vrot.lane.b32.xlu0 %v3485, 96
        %v3572 = vpop.permute.xlu0 %3571
        %3573 = vrot.lane.b32.xlu0 %v3486, 96
        %v3574 = vpop.permute.xlu0 %3573
        %v3583 = vsel %vm295, %v1617, %v3496
        %v3584 = vsel %vm295, %v1618, %v3498
        %v3585 = vsel %vm295, %v1619, %v3500
        %v3586 = vsel %vm295, %v1620, %v3502
        %v3587 = vsel %vm295, %v1621, %v3504
        %v3588 = vsel %vm295, %v1622, %v3506
        %v3589 = vsel %vm295, %v1623, %v3508
        %v3590 = vsel %vm295, %v1624, %v3510
        %v3591 = vsel %vm1066, %v3583, %v3528
        %v3592 = vsel %vm1066, %v3584, %v3530
        %v3593 = vsel %vm1066, %v3585, %v3532
        %v3594 = vsel %vm1066, %v3586, %v3534
        %v3595 = vsel %vm1066, %v3587, %v3536
        %v3596 = vsel %vm1066, %v3588, %v3538
        %v3597 = vsel %vm1066, %v3589, %v3540
        %v3598 = vsel %vm1066, %v3590, %v3542
        %vm3599 = vcmask 785408
        %v3600 = vsel %vm3599, %v3591, %v3560
        %v3601 = vsel %vm3599, %v3592, %v3562
        %v3602 = vsel %vm3599, %v3593, %v3564
        %v3603 = vsel %vm3599, %v3594, %v3566
        %v3604 = vsel %vm3599, %v3595, %v3568
        %v3605 = vsel %vm3599, %v3596, %v3570
        %v3606 = vsel %vm3599, %v3597, %v3572
        %v3607 = vsel %vm3599, %v3598, %v3574
        %3608 = vst [vmem:[%s236] sm:$0xff] %v3600
        %3609 = vst [vmem:[%s236 + $0x8] sm:$0xff] %v3601
        %3610 = vst [vmem:[%s236 + $0x10] sm:$0xff] %v3602
        %3611 = vst [vmem:[%s236 + $0x18] sm:$0xff] %v3603
        %3612 = vst [vmem:[%s236 + $0x20] sm:$0xff] %v3604
        %3613 = vst [vmem:[%s236 + $0x28] sm:$0xff] %v3605
        %3614 = vst [vmem:[%s236 + $0x30] sm:$0xff] %v3606
        %3615 = vst [vmem:[%s236 + $0x38] sm:$0xff] %v3607
        %s3616 = sand.u32 %s142, 1
        %s3617 = scalar_lea.sflag [#allocation3], %s3616
        %s3618 = sand.u32 %s142, 1
        %s3619 = smul.addr %s3618, 64
        %s3620 = scalar_lea.vmem [#allocation2], %s3619
        // Predicated region
        $region41: #{tpu_custom_call.1} parent=39 // pred_check
          %p3621 = pneg %p152
        $region42: #{tpu_custom_call.1} parent=39 // pred_check_branch
          %3623 = sbr.rel (%p3621) target = $region44
        $region43: #{tpu_custom_call.1} parent=39 // pred_region
          %s3625 = ssub.s32 1024, 1024
          %3626 = vsyncadd %s3617, %s3625
          %s3627 = smul.addr %s19, 128
          %s3628 = scalar_lea.hbm %s5, %s3627
          %s3629 = sshll.u32 %s3620, 4
          %s3630 = int_to_ptr.vmem [resolvable:$true] %s3629
          %3635 = dma.vmem_to_hbm [thread:$0]  %s3630, 1024, %s3628, %s3617, 128, 256, 8
        $region44: #{tpu_custom_call.1} parent=39 // pred_fallthru
          _
      $region40: #{tpu_custom_call.1} parent=5 // pred_fallthru
        _
      %p3636 = scmp.le.s32.totalorder 2, %s14
      // Predicated region
      $region45: #{tpu_custom_call.1} parent=5 // pred_check
        %p3637 = pneg %p3636
      $region46: #{tpu_custom_call.1} parent=5 // pred_check_branch
        %3639 = sbr.rel (%p3637) target = $region48
      $region47: #{tpu_custom_call.1} parent=5 // pred_region
        %s3640 = ssub.s32 %s14, 2
        // Predicated region
        $region49: #{tpu_custom_call.1} parent=47 // pred_check
          %p3641 = pneg %p158
        $region50: #{tpu_custom_call.1} parent=47 // pred_check_branch
          %3643 = sbr.rel (%p3641) target = $region52
        $region51: #{tpu_custom_call.1} parent=47 // pred_region
          %s3644 = sand.u32 %s143, 1
          %s3645 = scalar_lea.sflag [#allocation3], %s3644
          %s3646 = sand.u32 %s143, 1
          %s3647 = smul.addr %s3646, 64
          %s3648 = scalar_lea.vmem [#allocation2], %s3647
          %3649 = dma.done %s3645, 1024
        $region52: #{tpu_custom_call.1} parent=47 // pred_fallthru
          _
      $region48: #{tpu_custom_call.1} parent=5 // pred_fallthru
        _
    $region6: #{tpu_custom_call.1} parent=1 // loop_footer
      %s18 = sadd.s32 1, %s14
    $region7: #{tpu_custom_call.1} parent=1 // loop_footer_branch
      %13 = sbr.rel target = $region3
    $region8: #{tpu_custom_call.1} parent=1 // loop_exit
      _
    %3650 = vsyncpa [#allocation3], 1
    %s3651 = scalar_lea.sflag [#allocation3], 1
    %3652 = vsyncpa %s3651, 1

</llo_original>
